<compile_context>
chip_gen: v5e
topology: v5e:2x2
jax: 0.10.0
libtpu: 0.0.40
codegen_flags: <defaults>
</compile_context>

<pallas_src>
import functools

import jax
import jax.numpy as jnp
from jax.experimental import pallas as pl
from jax.experimental.pallas import tpu as pltpu

LEAKY_SLOPE = 0.1


def _round_up(v, m):
    return ((v + m - 1) // m) * m


# ---------------------------------------------------------------------------
# Kernel 1: conv_1 (im2col matmul on the MXU) fused with BN partial statistics.
# One image per grid step.  Outputs: bf16 compact channels-last activation and
# per-image f32 [sum; sum-of-squares] BN partials (reduced by a tiny XLA sum).
# ---------------------------------------------------------------------------
def _conv1_bnstats_kernel(a_ref, w_ref, y_ref, stats_ref):
    # a_ref: (m_img, K1p) bf16   w_ref: (K1p, OCp) bf16
    # y_ref: (1, m_img, OCp) bf16   stats_ref: (1, 2, OCp) f32
    y = jnp.dot(a_ref[...], w_ref[...], preferred_element_type=jnp.float32)
    stats_ref[0, 0:1, :] = jnp.sum(y, axis=0, keepdims=True)
    stats_ref[0, 1:2, :] = jnp.sum(y * y, axis=0, keepdims=True)
    y_ref[0] = y.astype(jnp.bfloat16)      # bf16 intermediate -> halved HBM traffic


def conv1_bnstats(a, w, n_imgs, m_img):
    _, k1p = a.shape
    ocp = w.shape[1]
    return pl.pallas_call(
        _conv1_bnstats_kernel,
        out_shape=(jax.ShapeDtypeStruct((n_imgs, m_img, ocp), jnp.bfloat16),
                   jax.ShapeDtypeStruct((n_imgs, 2, ocp), jnp.float32)),
        grid=(n_imgs,),
        in_specs=[pl.BlockSpec((m_img, k1p), lambda n: (n, 0)),
                  pl.BlockSpec((k1p, ocp), lambda n: (0, 0))],
        out_specs=(pl.BlockSpec((1, m_img, ocp), lambda n: (n, 0, 0)),
                   pl.BlockSpec((1, 2, ocp), lambda n: (n, 0, 0))),
        compiler_params=pltpu.CompilerParams(dimension_semantics=("parallel",)),
    )(a, w)


# ---------------------------------------------------------------------------
# Kernel 2: BN affine + LeakyReLU (hoisted, once per image) + direct in-kernel
# 3x3/stride 1/pad 1 conv_2 via nine contiguous-slice MXU matmuls.
# ---------------------------------------------------------------------------
def _bn_act_conv2_kernel(y_ref, affine_ref, w2_ref, o_ref, z_ref, *,
                         oh, ow, pw, out_rows):
    # y_ref:      (1, oh*ow, OCp) bf16  compact conv_1 output (pre-BN)
    # affine_ref: (8, OCp)        f32   row 0 = BN scale, row 1 = BN shift
    # w2_ref:     (9, OCp, OCp)   bf16  conv_2 taps (di*3+dj, in, out)
    # o_ref:      (1, out_rows, OCp) f32, out_rows = oh*pw (junk cols dropped in XLA)
    # z_ref:      (FLz, OCp)      f32   zero-padded, flattened post-activation scratch
    scale = affine_ref[0:1, :]
    shift = affine_ref[1:2, :]

    # BN affine + LeakyReLU computed ONCE per image (hoisted out of the tap loop).
    z = y_ref[0].astype(jnp.float32) * scale + shift
    z = jnp.where(z > 0, z, LEAKY_SLOPE * z)                  # (oh*ow, OCp) f32

    # Build the spatially padded flat activation in VMEM: zero everything (so the
    # conv_2 halo is exact zeros), then scatter the valid rows at static offsets.
    z_ref[...] = jnp.zeros_like(z_ref)
    for r in range(oh):
        z_ref[pl.ds((r + 1) * pw + 1, ow), :] = z[r * ow:(r + 1) * ow, :]

    # Direct 3x3 conv: tap (di, dj) is a contiguous row slice at offset di*pw + dj.
    # Accumulate in a local f32 value; single store to o_ref after the loop.
    acc = None
    for t in range(9):
        off = (t // 3) * pw + (t % 3)
        zt = z_ref[pl.ds(off, out_rows), :].astype(jnp.bfloat16)
        d = jnp.dot(zt, w2_ref[t], preferred_element_type=jnp.float32)
        acc = d if acc is None else acc + d
    o_ref[0] = acc


def bn_act_conv2(y, affine, w2_taps, *, oh, ow, pw, flz, out_rows):
    n_imgs, m_img, ocp = y.shape
    kern = functools.partial(_bn_act_conv2_kernel, oh=oh, ow=ow, pw=pw,
                             out_rows=out_rows)
    vmem_est = (2 * m_img * ocp * 2          # y blocks (bf16, double buffered)
                + 2 * out_rows * ocp * 4     # out blocks (f32)
                + 2 * 9 * ocp * ocp * 2      # w2 taps (bf16)
                + flz * ocp * 4              # z scratch (f32)
                + 4 * out_rows * ocp * 4)    # accumulator / tap working-set headroom
    vmem_limit = int(min(max(2 * vmem_est, 32 << 20), 64 << 20))
    return pl.pallas_call(
        kern,
        out_shape=jax.ShapeDtypeStruct((n_imgs, out_rows, ocp), jnp.float32),
        grid=(n_imgs,),
        in_specs=[pl.BlockSpec((1, m_img, ocp), lambda n: (n, 0, 0)),
                  pl.BlockSpec((8, ocp), lambda n: (0, 0)),
                  pl.BlockSpec((9, ocp, ocp), lambda n: (0, 0, 0))],
        out_specs=pl.BlockSpec((1, out_rows, ocp), lambda n: (n, 0, 0)),
        scratch_shapes=[pltpu.VMEM((flz, ocp), jnp.float32)],
        compiler_params=pltpu.CompilerParams(
            dimension_semantics=("parallel",),
            vmem_limit_bytes=vmem_limit),
    )(y, affine, w2_taps)


# ---------------------------------------------------------------------------
# XLA glue: im2col for conv_1 only (general kernel_size/stride/padding; tiny input)
# ---------------------------------------------------------------------------
def im2col(x, kh, kw, stride, padding):
    """x: (N, C, H, W) -> (N*OH*OW, C*KH*KW), columns ordered (C, KH, KW), C slowest."""
    N, C, H, W = x.shape
    xp = jnp.pad(x, ((0, 0), (0, 0), (padding, padding), (padding, padding)))
    OH = (H + 2 * padding - kh) // stride + 1
    OW = (W + 2 * padding - kw) // stride + 1
    cols = []
    for i in range(kh):
        for j in range(kw):
            cols.append(xp[:, :, i:i + (OH - 1) * stride + 1:stride,
                           j:j + (OW - 1) * stride + 1:stride])   # (N, C, OH, OW)
    p = jnp.stack(cols, axis=0)               # (KH*KW, N, C, OH, OW)
    p = jnp.transpose(p, (1, 3, 4, 2, 0))     # (N, OH, OW, C, KH*KW)
    return p.reshape(N * OH * OW, C * kh * kw), OH, OW


@functools.partial(jax.jit, static_argnames=("kernel_size", "stride", "padding"))
def basic_conv_block(x, w1, w2, gamma, beta, *, kernel_size, stride, padding, eps=1e-5):
    """Pallas implementation of BasicConvBlock.forward (norm_choice='BN', training stats).

    TODO(synk): only the forward output is reproduced; the BatchNorm running_mean /
                running_var buffer updates of training mode are not emitted.
    """
    N, Cin, H, W = x.shape
    OC = w1.shape[0]
    OCp = _round_up(OC, 128)                  # lane-dense channel padding

    # ---- conv_1 patch extraction (general k/s/p) in XLA; tiny input ----
    a1, OH, OW = im2col(x.astype(jnp.bfloat16), kernel_size, kernel_size, stride, padding)
    K1 = Cin * kernel_size * kernel_size
    K1p = _round_up(K1, 128)                  # lane-aligned contraction dim
    a1 = jnp.pad(a1, ((0, 0), (0, K1p - K1)))
    w1p = jnp.zeros((K1p, OCp), jnp.bfloat16).at[:K1, :OC].set(
        w1.reshape(OC, K1).T.astype(jnp.bfloat16))

    M_img = OH * OW
    M = N * M_img
    # One image per grid step; the per-image block of a1 must be sublane-aligned.
    assert M_img % 8 == 0, "per-image row count must be a multiple of 8"

    # ---- kernel 1: conv_1 matmul + BN partial stats (bf16 intermediate) ----
    y1, stats = conv1_bnstats(a1, w1p, N, M_img)    # (N, M_img, OCp) bf16, (N, 2, OCp) f32

    # ---- finalize BN (batch statistics over N*OH*OW, biased variance) ----
    sums = jnp.sum(stats, axis=0)                   # (2, OCp)
    mean = sums[0] / M
    var = jnp.maximum(sums[1] / M - mean * mean, 0.0)   # clamp vs f32 cancellation
    gamma_p = jnp.zeros((OCp,), jnp.float32).at[:OC].set(gamma)
    beta_p = jnp.zeros((OCp,), jnp.float32).at[:OC].set(beta)
    scale = gamma_p / jnp.sqrt(var + eps)
    shift = beta_p - mean * scale
    affine = jnp.zeros((8, OCp), jnp.float32).at[0].set(scale).at[1].set(shift)

    # ---- kernel 2: BN + LeakyReLU + direct 3x3 conv_2 (padding built in VMEM) ----
    PW = OW + 2                                     # row pitch of the padded layout
    PH = OH + 3                                     # 1 top halo + 2 bottom (junk-read safe)
    FLz = _round_up(PH * PW, 8)
    out_rows = OH * PW

    # w2 (OC_out, OC_in, 3, 3) -> taps (9, OCp_in, OCp_out), zero-padded, bf16
    w2_taps = jnp.zeros((9, OCp, OCp), jnp.bfloat16).at[:, :OC, :OC].set(
        jnp.transpose(w2, (2, 3, 1, 0)).reshape(9, OC, OC).astype(jnp.bfloat16))

    out_f = bn_act_conv2(y1, affine, w2_taps, oh=OH, ow=OW, pw=PW, flz=FLz,
                         out_rows=out_rows)

    # Drop junk columns / padded channels; single NCHW conversion at the very end.
    out = out_f.reshape(N, OH, PW, OCp)[:, :, :OW, :OC]
    return jnp.transpose(out, (0, 3, 1, 2))


# ---------------------------------------------------------------------------
# Plain-JAX reference (same precision policy: bf16 matmul inputs, f32 accum/BN)
# ---------------------------------------------------------------------------
def reference_forward(x, w1, w2, gamma, beta, *, kernel_size, stride, padding, eps=1e-5):
    dn = ("NCHW", "OIHW", "NCHW")
    y = jax.lax.conv_general_dilated(
        x.astype(jnp.bfloat16), w1.astype(jnp.bfloat16),
        window_strides=(stride, stride),
        padding=[(padding, padding), (padding, padding)],
        dimension_numbers=dn, preferred_element_type=jnp.float32)
    mean = jnp.mean(y, axis=(0, 2, 3), keepdims=True)
    var = jnp.mean((y - mean) ** 2, axis=(0, 2, 3), keepdims=True)
    z = (y - mean) / jnp.sqrt(var + eps) * gamma[None, :, None, None] + beta[None, :, None, None]
    z = jnp.where(z > 0, z, LEAKY_SLOPE * z)
    out = jax.lax.conv_general_dilated(
        z.astype(jnp.bfloat16), w2.astype(jnp.bfloat16), window_strides=(1, 1),
        padding=[(1, 1), (1, 1)], dimension_numbers=dn,
        preferred_element_type=jnp.float32)
    return out


if __name__ == "__main__":
    # Module config: BasicConvBlock(in_channel=4, out_channel=8, kernel_size=3,
    #                               stride=1, padding=1, norm_choice='BN')
    in_channel, out_channel, kernel_size, stride, padding = 4, 8, 3, 1, 1
    N, H, W = 2, 16, 16

    key = jax.random.PRNGKey(0)
    kx, k1, k2 = jax.random.split(key, 3)
    x = jax.random.normal(kx, (N, in_channel, H, W), dtype=jnp.float32)
    w1 = 0.1 * jax.random.normal(k1, (out_channel, in_channel, kernel_size, kernel_size),
                                 dtype=jnp.float32)
    w2 = 0.1 * jax.random.normal(k2, (out_channel, out_channel, 3, 3), dtype=jnp.float32)
    gamma = jnp.ones((out_channel,), dtype=jnp.float32)   # BatchNorm2d weight init
    beta = jnp.zeros((out_channel,), dtype=jnp.float32)   # BatchNorm2d bias init

    out = basic_conv_block(x, w1, w2, gamma, beta,
                           kernel_size=kernel_size, stride=stride, padding=padding)
    out = jax.block_until_ready(out)

    ref = reference_forward(x, w1, w2, gamma, beta,
                            kernel_size=kernel_size, stride=stride, padding=padding)
    assert out.shape == (N, out_channel, H, W)
    # Tolerance reflects bf16 MXU operands and the bf16 HBM intermediate (f32 accum/BN).
    assert jnp.allclose(out, ref, atol=2e-2, rtol=2e-2), float(jnp.max(jnp.abs(out - ref)))

    print("KERNEL_OK")
</pallas_src>

<mosaic_0001>
module attributes {stable_mosaic.version = 11 : i64} {
  func.func @_conv1_bnstats_kernel(%arg0: i32, %arg1: memref<256x128xbf16, #tpu.memory_space<vmem>>, %arg2: memref<128x128xbf16, #tpu.memory_space<vmem>>, %arg3: memref<1x256x128xbf16, #tpu.memory_space<vmem>>, %arg4: memref<1x2x128xf32, #tpu.memory_space<vmem>>) attributes {dimension_semantics = [#tpu.dimension_semantics<parallel>], iteration_bounds = array<i64: 2>, scalar_prefetch = 0 : i64, scratch_operands = 0 : i64, tpu.core_type = #tpu.core_type<tc>, window_params = [{transform_indices = @transform_0, window_bounds = array<i64: 256, 128>}, {pipeline_mode = #tpu.pipeline_mode<synchronous>, transform_indices = @transform_1, window_bounds = array<i64: 128, 128>}, {transform_indices = @transform_2, window_bounds = array<i64: 1, 256, 128>}, {transform_indices = @transform_3, window_bounds = array<i64: 1, 2, 128>}]} {
    %c0 = arith.constant 0 : index
    %c0_0 = arith.constant 0 : index
    %0 = vector.load %arg1[%c0, %c0_0] : memref<256x128xbf16, #tpu.memory_space<vmem>>, vector<256x128xbf16>
    %c0_1 = arith.constant 0 : index
    %c0_2 = arith.constant 0 : index
    %1 = vector.load %arg2[%c0_1, %c0_2] : memref<128x128xbf16, #tpu.memory_space<vmem>>, vector<128x128xbf16>
    %cst = arith.constant dense<0.000000e+00> : vector<256x128xf32>
    %2 = tpu.matmul %0, %1, %cst {dimension_numbers = #tpu.dot_dimension_numbers<[1], [0], [0], [1], [0, 0, 1, 1], [], []>} : vector<256x128xbf16>, vector<128x128xbf16>, vector<256x128xf32> -> vector<256x128xf32>
    %cst_3 = arith.constant dense<0.000000e+00> : vector<128xf32>
    %3 = vector.multi_reduction <add>, %2, %cst_3 [0] : vector<256x128xf32> to vector<128xf32>
    %4 = vector.shape_cast %3 : vector<128xf32> to vector<1x128xf32>
    %c0_4 = arith.constant 0 : index
    %c0_5 = arith.constant 0 : index
    %c0_6 = arith.constant 0 : index
    %5 = vector.load %arg4[%c0_4, %c0_5, %c0_6] : memref<1x2x128xf32, #tpu.memory_space<vmem>>, vector<1x1x128xf32>
    %6 = vector.shape_cast %5 : vector<1x1x128xf32> to vector<1x128xf32>
    %7 = vector.shape_cast %4 : vector<1x128xf32> to vector<1x1x128xf32>
    tpu.vector_store %arg4[%c0_4, %c0_5, %c0_6], %7 {strides = array<i32>} : memref<1x2x128xf32, #tpu.memory_space<vmem>>, vector<1x1x128xf32>,
    %8 = arith.mulf %2, %2 : vector<256x128xf32>
    %cst_7 = arith.constant dense<0.000000e+00> : vector<128xf32>
    %9 = vector.multi_reduction <add>, %8, %cst_7 [0] : vector<256x128xf32> to vector<128xf32>
    %10 = vector.shape_cast %9 : vector<128xf32> to vector<1x128xf32>
    %c0_8 = arith.constant 0 : index
    %c1 = arith.constant 1 : index
    %c0_9 = arith.constant 0 : index
    %11 = vector.load %arg4[%c0_8, %c1, %c0_9] : memref<1x2x128xf32, #tpu.memory_space<vmem>>, vector<1x1x128xf32>
    %12 = vector.shape_cast %11 : vector<1x1x128xf32> to vector<1x128xf32>
    %13 = vector.shape_cast %10 : vector<1x128xf32> to vector<1x1x128xf32>
    tpu.vector_store %arg4[%c0_8, %c1, %c0_9], %13 {strides = array<i32>} : memref<1x2x128xf32, #tpu.memory_space<vmem>>, vector<1x1x128xf32>,
    %14 = arith.truncf %2 : vector<256x128xf32> to vector<256x128xbf16>
    %c0_10 = arith.constant 0 : index
    %c0_11 = arith.constant 0 : index
    %c0_12 = arith.constant 0 : index
    %15 = vector.load %arg3[%c0_10, %c0_11, %c0_12] : memref<1x256x128xbf16, #tpu.memory_space<vmem>>, vector<1x256x128xbf16>
    %16 = vector.shape_cast %15 : vector<1x256x128xbf16> to vector<256x128xbf16>
    %17 = vector.shape_cast %14 : vector<256x128xbf16> to vector<1x256x128xbf16>
    tpu.vector_store %arg3[%c0_10, %c0_11, %c0_12], %17 {strides = array<i32>} : memref<1x256x128xbf16, #tpu.memory_space<vmem>>, vector<1x256x128xbf16>,
    return
  }
  func.func @transform_0(%arg0: i32) -> (i32, i32) {
    %c0_i32 = arith.constant 0 : i32
    %c0_i32_0 = arith.constant 0 : i32
    return %arg0, %c0_i32 : i32, i32
  }
  func.func @transform_1(%arg0: i32) -> (i32, i32) {
    %c0_i32 = arith.constant 0 : i32
    %c0_i32_0 = arith.constant 0 : i32
    %c0_i32_1 = arith.constant 0 : i32
    return %c0_i32, %c0_i32_0 : i32, i32
  }
  func.func @transform_2(%arg0: i32) -> (i32, i32, i32) {
    %c0_i32 = arith.constant 0 : i32
    %c0_i32_0 = arith.constant 0 : i32
    %c0_i32_1 = arith.constant 0 : i32
    return %arg0, %c0_i32, %c0_i32_0 : i32, i32, i32
  }
  func.func @transform_3(%arg0: i32) -> (i32, i32, i32) {
    %c0_i32 = arith.constant 0 : i32
    %c0_i32_0 = arith.constant 0 : i32
    %c0_i32_1 = arith.constant 0 : i32
    return %arg0, %c0_i32, %c0_i32_0 : i32, i32, i32
  }
}

module attributes {stable_mosaic.version = 11 : i64} {
  func.func @_bn_act_conv2_kernel(%arg0: i32, %arg1: memref<1x256x128xbf16, #tpu.memory_space<vmem>>, %arg2: memref<8x128xf32, #tpu.memory_space<vmem>>, %arg3: memref<9x128x128xbf16, #tpu.memory_space<vmem>>, %arg4: memref<1x288x128xf32, #tpu.memory_space<vmem>>, %arg5: memref<344x128xf32, #tpu.memory_space<vmem>>) attributes {dimension_semantics = [#tpu.dimension_semantics<parallel>], iteration_bounds = array<i64: 2>, scalar_prefetch = 0 : i64, scratch_operands = 1 : i64, tpu.core_type = #tpu.core_type<tc>, window_params = [{transform_indices = @transform_0, window_bounds = array<i64: 1, 256, 128>}, {pipeline_mode = #tpu.pipeline_mode<synchronous>, transform_indices = @transform_1, window_bounds = array<i64: 8, 128>}, {pipeline_mode = #tpu.pipeline_mode<synchronous>, transform_indices = @transform_2, window_bounds = array<i64: 9, 128, 128>}, {transform_indices = @transform_3, window_bounds = array<i64: 1, 288, 128>}]} {
    %c0 = arith.constant 0 : index
    %c0_0 = arith.constant 0 : index
    %0 = vector.load %arg2[%c0, %c0_0] : memref<8x128xf32, #tpu.memory_space<vmem>>, vector<1x128xf32>
    %c1 = arith.constant 1 : index
    %c0_1 = arith.constant 0 : index
    %1 = vector.load %arg2[%c1, %c0_1] : memref<8x128xf32, #tpu.memory_space<vmem>>, vector<1x128xf32>
    %c0_2 = arith.constant 0 : index
    %c0_3 = arith.constant 0 : index
    %c0_4 = arith.constant 0 : index
    %2 = vector.load %arg1[%c0_2, %c0_3, %c0_4] : memref<1x256x128xbf16, #tpu.memory_space<vmem>>, vector<1x256x128xbf16>
    %3 = vector.shape_cast %2 : vector<1x256x128xbf16> to vector<256x128xbf16>
    %4 = arith.extf %3 : vector<256x128xbf16> to vector<256x128xf32>
    %5 = vector.broadcast %0 : vector<1x128xf32> to vector<256x128xf32>
    %6 = arith.mulf %4, %5 : vector<256x128xf32>
    %7 = vector.broadcast %1 : vector<1x128xf32> to vector<256x128xf32>
    %8 = arith.addf %6, %7 : vector<256x128xf32>
    %cst = arith.constant 0.000000e+00 : f32
    %9 = vector.broadcast %cst : f32 to vector<256x128xf32>
    %10 = arith.cmpf ogt, %8, %9 : vector<256x128xf32>
    %cst_5 = arith.constant 1.000000e-01 : f32
    %11 = vector.broadcast %cst_5 : f32 to vector<256x128xf32>
    %12 = arith.mulf %11, %8 : vector<256x128xf32>
    %13 = arith.select %10, %8, %12 : vector<256x128xi1>, vector<256x128xf32>
    %cst_6 = arith.constant 0.000000e+00 : f32
    %14 = vector.broadcast %cst_6 : f32 to vector<344x128xf32>
    %c0_7 = arith.constant 0 : index
    %c0_8 = arith.constant 0 : index
    %15 = vector.load %arg5[%c0_7, %c0_8] : memref<344x128xf32, #tpu.memory_space<vmem>>, vector<344x128xf32>
    tpu.vector_store %arg5[%c0_7, %c0_8], %14 {strides = array<i32>} : memref<344x128xf32, #tpu.memory_space<vmem>>, vector<344x128xf32>,
    %16 = vector.extract_strided_slice %13 {offsets = [0, 0], sizes = [16, 128], strides = [1, 1]} : vector<256x128xf32> to vector<16x128xf32>
    %c19 = arith.constant 19 : index
    %c0_9 = arith.constant 0 : index
    %17 = vector.load %arg5[%c19, %c0_9] : memref<344x128xf32, #tpu.memory_space<vmem>>, vector<16x128xf32>
    tpu.vector_store %arg5[%c19, %c0_9], %16 {strides = array<i32>} : memref<344x128xf32, #tpu.memory_space<vmem>>, vector<16x128xf32>,
    %18 = vector.extract_strided_slice %13 {offsets = [16, 0], sizes = [16, 128], strides = [1, 1]} : vector<256x128xf32> to vector<16x128xf32>
    %c37 = arith.constant 37 : index
    %c0_10 = arith.constant 0 : index
    %19 = vector.load %arg5[%c37, %c0_10] : memref<344x128xf32, #tpu.memory_space<vmem>>, vector<16x128xf32>
    tpu.vector_store %arg5[%c37, %c0_10], %18 {strides = array<i32>} : memref<344x128xf32, #tpu.memory_space<vmem>>, vector<16x128xf32>,
    %20 = vector.extract_strided_slice %13 {offsets = [32, 0], sizes = [16, 128], strides = [1, 1]} : vector<256x128xf32> to vector<16x128xf32>
    %c55 = arith.constant 55 : index
    %c0_11 = arith.constant 0 : index
    %21 = vector.load %arg5[%c55, %c0_11] : memref<344x128xf32, #tpu.memory_space<vmem>>, vector<16x128xf32>
    tpu.vector_store %arg5[%c55, %c0_11], %20 {strides = array<i32>} : memref<344x128xf32, #tpu.memory_space<vmem>>, vector<16x128xf32>,
    %22 = vector.extract_strided_slice %13 {offsets = [48, 0], sizes = [16, 128], strides = [1, 1]} : vector<256x128xf32> to vector<16x128xf32>
    %c73 = arith.constant 73 : index
    %c0_12 = arith.constant 0 : index
    %23 = vector.load %arg5[%c73, %c0_12] : memref<344x128xf32, #tpu.memory_space<vmem>>, vector<16x128xf32>
    tpu.vector_store %arg5[%c73, %c0_12], %22 {strides = array<i32>} : memref<344x128xf32, #tpu.memory_space<vmem>>, vector<16x128xf32>,
    %24 = vector.extract_strided_slice %13 {offsets = [64, 0], sizes = [16, 128], strides = [1, 1]} : vector<256x128xf32> to vector<16x128xf32>
    %c91 = arith.constant 91 : index
    %c0_13 = arith.constant 0 : index
    %25 = vector.load %arg5[%c91, %c0_13] : memref<344x128xf32, #tpu.memory_space<vmem>>, vector<16x128xf32>
    tpu.vector_store %arg5[%c91, %c0_13], %24 {strides = array<i32>} : memref<344x128xf32, #tpu.memory_space<vmem>>, vector<16x128xf32>,
    %26 = vector.extract_strided_slice %13 {offsets = [80, 0], sizes = [16, 128], strides = [1, 1]} : vector<256x128xf32> to vector<16x128xf32>
    %c109 = arith.constant 109 : index
    %c0_14 = arith.constant 0 : index
    %27 = vector.load %arg5[%c109, %c0_14] : memref<344x128xf32, #tpu.memory_space<vmem>>, vector<16x128xf32>
    tpu.vector_store %arg5[%c109, %c0_14], %26 {strides = array<i32>} : memref<344x128xf32, #tpu.memory_space<vmem>>, vector<16x128xf32>,
    %28 = vector.extract_strided_slice %13 {offsets = [96, 0], sizes = [16, 128], strides = [1, 1]} : vector<256x128xf32> to vector<16x128xf32>
    %c127 = arith.constant 127 : index
    %c0_15 = arith.constant 0 : index
    %29 = vector.load %arg5[%c127, %c0_15] : memref<344x128xf32, #tpu.memory_space<vmem>>, vector<16x128xf32>
    tpu.vector_store %arg5[%c127, %c0_15], %28 {strides = array<i32>} : memref<344x128xf32, #tpu.memory_space<vmem>>, vector<16x128xf32>,
    %30 = vector.extract_strided_slice %13 {offsets = [112, 0], sizes = [16, 128], strides = [1, 1]} : vector<256x128xf32> to vector<16x128xf32>
    %c145 = arith.constant 145 : index
    %c0_16 = arith.constant 0 : index
    %31 = vector.load %arg5[%c145, %c0_16] : memref<344x128xf32, #tpu.memory_space<vmem>>, vector<16x128xf32>
    tpu.vector_store %arg5[%c145, %c0_16], %30 {strides = array<i32>} : memref<344x128xf32, #tpu.memory_space<vmem>>, vector<16x128xf32>,
    %32 = vector.extract_strided_slice %13 {offsets = [128, 0], sizes = [16, 128], strides = [1, 1]} : vector<256x128xf32> to vector<16x128xf32>
    %c163 = arith.constant 163 : index
    %c0_17 = arith.constant 0 : index
    %33 = vector.load %arg5[%c163, %c0_17] : memref<344x128xf32, #tpu.memory_space<vmem>>, vector<16x128xf32>
    tpu.vector_store %arg5[%c163, %c0_17], %32 {strides = array<i32>} : memref<344x128xf32, #tpu.memory_space<vmem>>, vector<16x128xf32>,
    %34 = vector.extract_strided_slice %13 {offsets = [144, 0], sizes = [16, 128], strides = [1, 1]} : vector<256x128xf32> to vector<16x128xf32>
    %c181 = arith.constant 181 : index
    %c0_18 = arith.constant 0 : index
    %35 = vector.load %arg5[%c181, %c0_18] : memref<344x128xf32, #tpu.memory_space<vmem>>, vector<16x128xf32>
    tpu.vector_store %arg5[%c181, %c0_18], %34 {strides = array<i32>} : memref<344x128xf32, #tpu.memory_space<vmem>>, vector<16x128xf32>,
    %36 = vector.extract_strided_slice %13 {offsets = [160, 0], sizes = [16, 128], strides = [1, 1]} : vector<256x128xf32> to vector<16x128xf32>
    %c199 = arith.constant 199 : index
    %c0_19 = arith.constant 0 : index
    %37 = vector.load %arg5[%c199, %c0_19] : memref<344x128xf32, #tpu.memory_space<vmem>>, vector<16x128xf32>
    tpu.vector_store %arg5[%c199, %c0_19], %36 {strides = array<i32>} : memref<344x128xf32, #tpu.memory_space<vmem>>, vector<16x128xf32>,
    %38 = vector.extract_strided_slice %13 {offsets = [176, 0], sizes = [16, 128], strides = [1, 1]} : vector<256x128xf32> to vector<16x128xf32>
    %c217 = arith.constant 217 : index
    %c0_20 = arith.constant 0 : index
    %39 = vector.load %arg5[%c217, %c0_20] : memref<344x128xf32, #tpu.memory_space<vmem>>, vector<16x128xf32>
    tpu.vector_store %arg5[%c217, %c0_20], %38 {strides = array<i32>} : memref<344x128xf32, #tpu.memory_space<vmem>>, vector<16x128xf32>,
    %40 = vector.extract_strided_slice %13 {offsets = [192, 0], sizes = [16, 128], strides = [1, 1]} : vector<256x128xf32> to vector<16x128xf32>
    %c235 = arith.constant 235 : index
    %c0_21 = arith.constant 0 : index
    %41 = vector.load %arg5[%c235, %c0_21] : memref<344x128xf32, #tpu.memory_space<vmem>>, vector<16x128xf32>
    tpu.vector_store %arg5[%c235, %c0_21], %40 {strides = array<i32>} : memref<344x128xf32, #tpu.memory_space<vmem>>, vector<16x128xf32>,
    %42 = vector.extract_strided_slice %13 {offsets = [208, 0], sizes = [16, 128], strides = [1, 1]} : vector<256x128xf32> to vector<16x128xf32>
    %c253 = arith.constant 253 : index
    %c0_22 = arith.constant 0 : index
    %43 = vector.load %arg5[%c253, %c0_22] : memref<344x128xf32, #tpu.memory_space<vmem>>, vector<16x128xf32>
    tpu.vector_store %arg5[%c253, %c0_22], %42 {strides = array<i32>} : memref<344x128xf32, #tpu.memory_space<vmem>>, vector<16x128xf32>,
    %44 = vector.extract_strided_slice %13 {offsets = [224, 0], sizes = [16, 128], strides = [1, 1]} : vector<256x128xf32> to vector<16x128xf32>
    %c271 = arith.constant 271 : index
    %c0_23 = arith.constant 0 : index
    %45 = vector.load %arg5[%c271, %c0_23] : memref<344x128xf32, #tpu.memory_space<vmem>>, vector<16x128xf32>
    tpu.vector_store %arg5[%c271, %c0_23], %44 {strides = array<i32>} : memref<344x128xf32, #tpu.memory_space<vmem>>, vector<16x128xf32>,
    %46 = vector.extract_strided_slice %13 {offsets = [240, 0], sizes = [16, 128], strides = [1, 1]} : vector<256x128xf32> to vector<16x128xf32>
    %c289 = arith.constant 289 : index
    %c0_24 = arith.constant 0 : index
    %47 = vector.load %arg5[%c289, %c0_24] : memref<344x128xf32, #tpu.memory_space<vmem>>, vector<16x128xf32>
    tpu.vector_store %arg5[%c289, %c0_24], %46 {strides = array<i32>} : memref<344x128xf32, #tpu.memory_space<vmem>>, vector<16x128xf32>,
    %c0_25 = arith.constant 0 : index
    %c0_26 = arith.constant 0 : index
    %48 = vector.load %arg5[%c0_25, %c0_26] : memref<344x128xf32, #tpu.memory_space<vmem>>, vector<288x128xf32>
    %49 = arith.truncf %48 : vector<288x128xf32> to vector<288x128xbf16>
    %c0_27 = arith.constant 0 : index
    %c0_28 = arith.constant 0 : index
    %c0_29 = arith.constant 0 : index
    %50 = vector.load %arg3[%c0_27, %c0_28, %c0_29] : memref<9x128x128xbf16, #tpu.memory_space<vmem>>, vector<1x128x128xbf16>
    %51 = vector.shape_cast %50 : vector<1x128x128xbf16> to vector<128x128xbf16>
    %cst_30 = arith.constant dense<0.000000e+00> : vector<288x128xf32>
    %52 = tpu.matmul %49, %51, %cst_30 {dimension_numbers = #tpu.dot_dimension_numbers<[1], [0], [0], [1], [0, 0, 1, 1], [], []>} : vector<288x128xbf16>, vector<128x128xbf16>, vector<288x128xf32> -> vector<288x128xf32>
    %c1_31 = arith.constant 1 : index
    %c0_32 = arith.constant 0 : index
    %53 = vector.load %arg5[%c1_31, %c0_32] : memref<344x128xf32, #tpu.memory_space<vmem>>, vector<288x128xf32>
    %54 = arith.truncf %53 : vector<288x128xf32> to vector<288x128xbf16>
    %c1_33 = arith.constant 1 : index
    %c0_34 = arith.constant 0 : index
    %c0_35 = arith.constant 0 : index
    %55 = vector.load %arg3[%c1_33, %c0_34, %c0_35] : memref<9x128x128xbf16, #tpu.memory_space<vmem>>, vector<1x128x128xbf16>
    %56 = vector.shape_cast %55 : vector<1x128x128xbf16> to vector<128x128xbf16>
    %cst_36 = arith.constant dense<0.000000e+00> : vector<288x128xf32>
    %57 = tpu.matmul %54, %56, %cst_36 {dimension_numbers = #tpu.dot_dimension_numbers<[1], [0], [0], [1], [0, 0, 1, 1], [], []>} : vector<288x128xbf16>, vector<128x128xbf16>, vector<288x128xf32> -> vector<288x128xf32>
    %58 = arith.addf %52, %57 : vector<288x128xf32>
    %c2 = arith.constant 2 : index
    %c0_37 = arith.constant 0 : index
    %59 = vector.load %arg5[%c2, %c0_37] : memref<344x128xf32, #tpu.memory_space<vmem>>, vector<288x128xf32>
    %60 = arith.truncf %59 : vector<288x128xf32> to vector<288x128xbf16>
    %c2_38 = arith.constant 2 : index
    %c0_39 = arith.constant 0 : index
    %c0_40 = arith.constant 0 : index
    %61 = vector.load %arg3[%c2_38, %c0_39, %c0_40] : memref<9x128x128xbf16, #tpu.memory_space<vmem>>, vector<1x128x128xbf16>
    %62 = vector.shape_cast %61 : vector<1x128x128xbf16> to vector<128x128xbf16>
    %cst_41 = arith.constant dense<0.000000e+00> : vector<288x128xf32>
    %63 = tpu.matmul %60, %62, %cst_41 {dimension_numbers = #tpu.dot_dimension_numbers<[1], [0], [0], [1], [0, 0, 1, 1], [], []>} : vector<288x128xbf16>, vector<128x128xbf16>, vector<288x128xf32> -> vector<288x128xf32>
    %64 = arith.addf %58, %63 : vector<288x128xf32>
    %c18 = arith.constant 18 : index
    %c0_42 = arith.constant 0 : index
    %65 = vector.load %arg5[%c18, %c0_42] : memref<344x128xf32, #tpu.memory_space<vmem>>, vector<288x128xf32>
    %66 = arith.truncf %65 : vector<288x128xf32> to vector<288x128xbf16>
    %c3 = arith.constant 3 : index
    %c0_43 = arith.constant 0 : index
    %c0_44 = arith.constant 0 : index
    %67 = vector.load %arg3[%c3, %c0_43, %c0_44] : memref<9x128x128xbf16, #tpu.memory_space<vmem>>, vector<1x128x128xbf16>
    %68 = vector.shape_cast %67 : vector<1x128x128xbf16> to vector<128x128xbf16>
    %cst_45 = arith.constant dense<0.000000e+00> : vector<288x128xf32>
    %69 = tpu.matmul %66, %68, %cst_45 {dimension_numbers = #tpu.dot_dimension_numbers<[1], [0], [0], [1], [0, 0, 1, 1], [], []>} : vector<288x128xbf16>, vector<128x128xbf16>, vector<288x128xf32> -> vector<288x128xf32>
    %70 = arith.addf %64, %69 : vector<288x128xf32>
    %c19_46 = arith.constant 19 : index
    %c0_47 = arith.constant 0 : index
    %71 = vector.load %arg5[%c19_46, %c0_47] : memref<344x128xf32, #tpu.memory_space<vmem>>, vector<288x128xf32>
    %72 = arith.truncf %71 : vector<288x128xf32> to vector<288x128xbf16>
    %c4 = arith.constant 4 : index
    %c0_48 = arith.constant 0 : index
    %c0_49 = arith.constant 0 : index
    %73 = vector.load %arg3[%c4, %c0_48, %c0_49] : memref<9x128x128xbf16, #tpu.memory_space<vmem>>, vector<1x128x128xbf16>
    %74 = vector.shape_cast %73 : vector<1x128x128xbf16> to vector<128x128xbf16>
    %cst_50 = arith.constant dense<0.000000e+00> : vector<288x128xf32>
    %75 = tpu.matmul %72, %74, %cst_50 {dimension_numbers = #tpu.dot_dimension_numbers<[1], [0], [0], [1], [0, 0, 1, 1], [], []>} : vector<288x128xbf16>, vector<128x128xbf16>, vector<288x128xf32> -> vector<288x128xf32>
    %76 = arith.addf %70, %75 : vector<288x128xf32>
    %c20 = arith.constant 20 : index
    %c0_51 = arith.constant 0 : index
    %77 = vector.load %arg5[%c20, %c0_51] : memref<344x128xf32, #tpu.memory_space<vmem>>, vector<288x128xf32>
    %78 = arith.truncf %77 : vector<288x128xf32> to vector<288x128xbf16>
    %c5 = arith.constant 5 : index
    %c0_52 = arith.constant 0 : index
    %c0_53 = arith.constant 0 : index
    %79 = vector.load %arg3[%c5, %c0_52, %c0_53] : memref<9x128x128xbf16, #tpu.memory_space<vmem>>, vector<1x128x128xbf16>
    %80 = vector.shape_cast %79 : vector<1x128x128xbf16> to vector<128x128xbf16>
    %cst_54 = arith.constant dense<0.000000e+00> : vector<288x128xf32>
    %81 = tpu.matmul %78, %80, %cst_54 {dimension_numbers = #tpu.dot_dimension_numbers<[1], [0], [0], [1], [0, 0, 1, 1], [], []>} : vector<288x128xbf16>, vector<128x128xbf16>, vector<288x128xf32> -> vector<288x128xf32>
    %82 = arith.addf %76, %81 : vector<288x128xf32>
    %c36 = arith.constant 36 : index
    %c0_55 = arith.constant 0 : index
    %83 = vector.load %arg5[%c36, %c0_55] : memref<344x128xf32, #tpu.memory_space<vmem>>, vector<288x128xf32>
    %84 = arith.truncf %83 : vector<288x128xf32> to vector<288x128xbf16>
    %c6 = arith.constant 6 : index
    %c0_56 = arith.constant 0 : index
    %c0_57 = arith.constant 0 : index
    %85 = vector.load %arg3[%c6, %c0_56, %c0_57] : memref<9x128x128xbf16, #tpu.memory_space<vmem>>, vector<1x128x128xbf16>
    %86 = vector.shape_cast %85 : vector<1x128x128xbf16> to vector<128x128xbf16>
    %cst_58 = arith.constant dense<0.000000e+00> : vector<288x128xf32>
    %87 = tpu.matmul %84, %86, %cst_58 {dimension_numbers = #tpu.dot_dimension_numbers<[1], [0], [0], [1], [0, 0, 1, 1], [], []>} : vector<288x128xbf16>, vector<128x128xbf16>, vector<288x128xf32> -> vector<288x128xf32>
    %88 = arith.addf %82, %87 : vector<288x128xf32>
    %c37_59 = arith.constant 37 : index
    %c0_60 = arith.constant 0 : index
    %89 = vector.load %arg5[%c37_59, %c0_60] : memref<344x128xf32, #tpu.memory_space<vmem>>, vector<288x128xf32>
    %90 = arith.truncf %89 : vector<288x128xf32> to vector<288x128xbf16>
    %c7 = arith.constant 7 : index
    %c0_61 = arith.constant 0 : index
    %c0_62 = arith.constant 0 : index
    %91 = vector.load %arg3[%c7, %c0_61, %c0_62] : memref<9x128x128xbf16, #tpu.memory_space<vmem>>, vector<1x128x128xbf16>
    %92 = vector.shape_cast %91 : vector<1x128x128xbf16> to vector<128x128xbf16>
    %cst_63 = arith.constant dense<0.000000e+00> : vector<288x128xf32>
    %93 = tpu.matmul %90, %92, %cst_63 {dimension_numbers = #tpu.dot_dimension_numbers<[1], [0], [0], [1], [0, 0, 1, 1], [], []>} : vector<288x128xbf16>, vector<128x128xbf16>, vector<288x128xf32> -> vector<288x128xf32>
    %94 = arith.addf %88, %93 : vector<288x128xf32>
    %c38 = arith.constant 38 : index
    %c0_64 = arith.constant 0 : index
    %95 = vector.load %arg5[%c38, %c0_64] : memref<344x128xf32, #tpu.memory_space<vmem>>, vector<288x128xf32>
    %96 = arith.truncf %95 : vector<288x128xf32> to vector<288x128xbf16>
    %c8 = arith.constant 8 : index
    %c0_65 = arith.constant 0 : index
    %c0_66 = arith.constant 0 : index
    %97 = vector.load %arg3[%c8, %c0_65, %c0_66] : memref<9x128x128xbf16, #tpu.memory_space<vmem>>, vector<1x128x128xbf16>
    %98 = vector.shape_cast %97 : vector<1x128x128xbf16> to vector<128x128xbf16>
    %cst_67 = arith.constant dense<0.000000e+00> : vector<288x128xf32>
    %99 = tpu.matmul %96, %98, %cst_67 {dimension_numbers = #tpu.dot_dimension_numbers<[1], [0], [0], [1], [0, 0, 1, 1], [], []>} : vector<288x128xbf16>, vector<128x128xbf16>, vector<288x128xf32> -> vector<288x128xf32>
    %100 = arith.addf %94, %99 : vector<288x128xf32>
    %c0_68 = arith.constant 0 : index
    %c0_69 = arith.constant 0 : index
    %c0_70 = arith.constant 0 : index
    %101 = vector.load %arg4[%c0_68, %c0_69, %c0_70] : memref<1x288x128xf32, #tpu.memory_space<vmem>>, vector<1x288x128xf32>
    %102 = vector.shape_cast %101 : vector<1x288x128xf32> to vector<288x128xf32>
    %103 = vector.shape_cast %100 : vector<288x128xf32> to vector<1x288x128xf32>
    tpu.vector_store %arg4[%c0_68, %c0_69, %c0_70], %103 {strides = array<i32>} : memref<1x288x128xf32, #tpu.memory_space<vmem>>, vector<1x288x128xf32>,
    return
  }
  func.func @transform_0(%arg0: i32) -> (i32, i32, i32) {
    %c0_i32 = arith.constant 0 : i32
    %c0_i32_0 = arith.constant 0 : i32
    %c0_i32_1 = arith.constant 0 : i32
    return %arg0, %c0_i32, %c0_i32_0 : i32, i32, i32
  }
  func.func @transform_1(%arg0: i32) -> (i32, i32) {
    %c0_i32 = arith.constant 0 : i32
    %c0_i32_0 = arith.constant 0 : i32
    %c0_i32_1 = arith.constant 0 : i32
    return %c0_i32, %c0_i32_0 : i32, i32
  }
  func.func @transform_2(%arg0: i32) -> (i32, i32, i32) {
    %c0_i32 = arith.constant 0 : i32
    %c0_i32_0 = arith.constant 0 : i32
    %c0_i32_1 = arith.constant 0 : i32
    %c0_i32_2 = arith.constant 0 : i32
    return %c0_i32, %c0_i32_0, %c0_i32_1 : i32, i32, i32
  }
  func.func @transform_3(%arg0: i32) -> (i32, i32, i32) {
    %c0_i32 = arith.constant 0 : i32
    %c0_i32_0 = arith.constant 0 : i32
    %c0_i32_1 = arith.constant 0 : i32
    return %arg0, %c0_i32, %c0_i32_0 : i32, i32, i32
  }
}

</mosaic_0001>

<llo_original>
// kernel: basic_conv_block.2
$region0: #{basic_conv_block.2}
  #allocation0 [shape = 'u32[]', space=smem, size = 0x4, offset = 0x4, fixed_abs, tag = 'smem constant byte address 0x4 - core index']
  #allocation1 [shape = 'u32[72,128]{1,0:T(1,128)}', space=vmem, size = 0x9000, scoped, tag = 'internal scratch']
  %s0 = inlined_call_operand.vmem [shape: bf16[512,128], index: 0, kind: input, shape index: {}]
  %s1 = inlined_call_operand.vmem [shape: bf16[128,128], index: 1, kind: input, shape index: {}]
  %s2 = inlined_call_operand.vmem [shape: bf16[2,256,128], index: 2, kind: output, shape index: {0}]
  %s3 = inlined_call_operand.vmem [shape: f32[2,2,128], index: 3, kind: output, shape index: {1}]
  %4 = xla_tuple %s2, %s3
  %s5 = sld [smem:[#allocation0]]
  $region49: #{basic_conv_block.2} parent=0
    _
  %s7 = ssub.s32 1, %s5
  %s8 = scalar_select 0, %s7, %s5
  loop: start=0, step=1, limit=4
  $region2: #{basic_conv_block.2} parent=0 // loop_pre_header
    _
  $region3: #{basic_conv_block.2} parent=0 // loop_header
    %s10 = sphi 0, %s14
    %p11 = scmp.ge.s32.totalorder %s10, 4
    %s20 = sphi 0, %s22
    %s23 = sphi 0, %s20
    %s24 = sphi 0, %s23
    %s40 = sphi 0, %s24
    %s44 = sphi 0, %s44
    %s46 = sphi 0, %s44
    %s47 = sphi 0, %s46
    %s61 = sphi 0, %s47
    %s67 = sphi 0, %s69
    %s70 = sphi 0, %s67
    %s71 = sphi 0, %s70
    %s87 = sphi 0, %s71
    %s93 = sphi 0, %s95
    %s96 = sphi 0, %s93
    %s97 = sphi 0, %s96
    %s113 = sphi 0, %s97
  $region4: #{basic_conv_block.2} parent=0 // loop_header_branch
    %13 = sbr.rel (%p11) target = $region8
  $region5: #{basic_conv_block.2} parent=0 // loop_body
    %s15 = ssub.s32 %s10, 1
    %s16 = ssub.s32 %s10, 2
    %s17 = sadd.s32 %s10, 1
    %s18 = ssub.s32 %s10, %s17
    %p19 = scmp.eq.s32.totalorder %s18, 0
    %s21 = sadd.s32 %s20, 1
    %s22 = scalar_select %p19, %s20, %s21
    %p25 = pneg %p19
    %p26 = scmp.eq.s32.totalorder %s10, 1
    %p27 = por %p25, %p26
    %p28 = scmp.ne.s32.totalorder %s20, %s23
    %p29 = scmp.eq.s32.totalorder %s10, 0
    %p30 = por %p28, %p29
    %p31 = scmp.ne.s32.totalorder %s20, %s23
    %p32 = scmp.eq.s32.totalorder %s15, 1
    %p33 = por %p31, %p32
    %p34 = scmp.ne.s32.totalorder %s23, %s24
    %p35 = scmp.eq.s32.totalorder %s15, 0
    %p36 = por %p34, %p35
    %p37 = scmp.ne.s32.totalorder %s23, %s24
    %p38 = scmp.eq.s32.totalorder %s16, 1
    %p39 = por %p37, %p38
    %p41 = scmp.ne.s32.totalorder %s24, %s40
    %p42 = scmp.eq.s32.totalorder %s16, 0
    %p43 = por %p41, %p42
    %s45 = sadd.s32 %s44, 1
    %p48 = scmp.eq.s32.totalorder %s10, 1
    %p49 = scmp.ne.s32.totalorder %s44, %s46
    %p50 = scmp.eq.s32.totalorder %s10, 0
    %p51 = por %p49, %p50
    %p52 = scmp.ne.s32.totalorder %s44, %s46
    %p53 = scmp.eq.s32.totalorder %s15, 1
    %p54 = por %p52, %p53
    %p55 = scmp.ne.s32.totalorder %s46, %s47
    %p56 = scmp.eq.s32.totalorder %s15, 0
    %p57 = por %p55, %p56
    %p58 = scmp.ne.s32.totalorder %s46, %s47
    %p59 = scmp.eq.s32.totalorder %s16, 1
    %p60 = por %p58, %p59
    %p62 = scmp.ne.s32.totalorder %s47, %s61
    %p63 = scmp.eq.s32.totalorder %s16, 0
    %p64 = por %p62, %p63
    %s65 = ssub.s32 %s10, %s17
    %p66 = scmp.eq.s32.totalorder %s65, 0
    %s68 = sadd.s32 %s67, 1
    %s69 = scalar_select %p66, %s67, %s68
    %p72 = pneg %p66
    %p73 = scmp.eq.s32.totalorder %s10, 1
    %p74 = por %p72, %p73
    %p75 = scmp.ne.s32.totalorder %s67, %s70
    %p76 = scmp.eq.s32.totalorder %s10, 0
    %p77 = por %p75, %p76
    %p78 = scmp.ne.s32.totalorder %s67, %s70
    %p79 = scmp.eq.s32.totalorder %s15, 1
    %p80 = por %p78, %p79
    %p81 = scmp.ne.s32.totalorder %s70, %s71
    %p82 = scmp.eq.s32.totalorder %s15, 0
    %p83 = por %p81, %p82
    %p84 = scmp.ne.s32.totalorder %s70, %s71
    %p85 = scmp.eq.s32.totalorder %s16, 1
    %p86 = por %p84, %p85
    %p88 = scmp.ne.s32.totalorder %s71, %s87
    %p89 = scmp.eq.s32.totalorder %s16, 0
    %p90 = por %p88, %p89
    %s91 = ssub.s32 %s10, %s17
    %p92 = scmp.eq.s32.totalorder %s91, 0
    %s94 = sadd.s32 %s93, 1
    %s95 = scalar_select %p92, %s93, %s94
    %p98 = pneg %p92
    %p99 = scmp.eq.s32.totalorder %s10, 1
    %p100 = por %p98, %p99
    %p101 = scmp.ne.s32.totalorder %s93, %s96
    %p102 = scmp.eq.s32.totalorder %s10, 0
    %p103 = por %p101, %p102
    %p104 = scmp.ne.s32.totalorder %s93, %s96
    %p105 = scmp.eq.s32.totalorder %s15, 1
    %p106 = por %p104, %p105
    %p107 = scmp.ne.s32.totalorder %s96, %s97
    %p108 = scmp.eq.s32.totalorder %s15, 0
    %p109 = por %p107, %p108
    %p110 = scmp.ne.s32.totalorder %s96, %s97
    %p111 = scmp.eq.s32.totalorder %s16, 1
    %p112 = por %p110, %p111
    %p114 = scmp.ne.s32.totalorder %s97, %s113
    %p115 = scmp.eq.s32.totalorder %s16, 0
    %p116 = por %p114, %p115
    %p117 = scmp.le.s32.totalorder 1, %s10
    %p118 = scmp.lt.s32.totalorder %s10, 3
    %p119 = pnand %p117, %p118
    %p120 = pneg %p119
    // Predicated region
    $region9: #{basic_conv_block.2} parent=5 // pred_check
      _
    $region10: #{basic_conv_block.2} parent=5 // pred_check_branch
      %122 = sbr.rel (%p119) target = $region12
    $region11: #{basic_conv_block.2} parent=5 // pred_region
      %s123 = ssub.s32 %s10, 1
      // Predicated region
      $region13: #{basic_conv_block.2} parent=11 // pred_check
        %p124 = pneg %p57
      $region14: #{basic_conv_block.2} parent=11 // pred_check_branch
        %126 = sbr.rel (%p124) target = $region16
      $region15: #{basic_conv_block.2} parent=11 // pred_region
        _
      $region16: #{basic_conv_block.2} parent=11 // pred_fallthru
        _
    $region12: #{basic_conv_block.2} parent=5 // pred_fallthru
      _
    %p127 = scmp.lt.s32.totalorder %s10, 2
    // Predicated region
    $region17: #{basic_conv_block.2} parent=5 // pred_check
      %p128 = pneg %p127
    $region18: #{basic_conv_block.2} parent=5 // pred_check_branch
      %130 = sbr.rel (%p128) target = $region20
    $region19: #{basic_conv_block.2} parent=5 // pred_region
      // Predicated region
      $region21: #{basic_conv_block.2} parent=19 // pred_check
        %p131 = pneg %p30
      $region22: #{basic_conv_block.2} parent=19 // pred_check_branch
        %133 = sbr.rel (%p131) target = $region24
      $region23: #{basic_conv_block.2} parent=19 // pred_region
        %s134 = smul.u32 32, %s10
        %p135 = scmp.lt.s32.totalorder %s134, 63
        %s136 = scalar_select %p135, %s134, 63
        %s137 = smul.addr %s136, 4
        %s138 = scalar_lea.vmem %s0, %s137
        %s139 = smul.u32 32, %s10
      $region24: #{basic_conv_block.2} parent=19 // pred_fallthru
        _
    $region20: #{basic_conv_block.2} parent=5 // pred_fallthru
      _
    %p140 = scmp.le.s32.totalorder 1, %s10
    %p141 = scmp.lt.s32.totalorder %s10, 3
    %p142 = pnand %p140, %p141
    %p143 = pneg %p142
    // Predicated region
    $region25: #{basic_conv_block.2} parent=5 // pred_check
      _
    $region26: #{basic_conv_block.2} parent=5 // pred_check_branch
      %145 = sbr.rel (%p142) target = $region28
    $region27: #{basic_conv_block.2} parent=5 // pred_region
      %s146 = ssub.s32 %s10, 1
      %s147 = smul.u32 32, %s15
      %p148 = scmp.lt.s32.totalorder %s147, 63
      %s149 = scalar_select %p148, %s147, 63
      %s150 = smul.addr %s149, 4
      %s151 = scalar_lea.vmem %s0, %s150
      %p152 = pneg %p36
      %p153 = pneg %p33
      %p154 = pneg %p57
      %p155 = pneg %p54
      %p156 = pneg %p83
      %p157 = pneg %p80
      %p158 = scmp.lt.s32.totalorder %s15, 1
      %s159 = scalar_select %p158, %s15, 1
      %s160 = smul.addr %s159, 32
      %s161 = smul.addr %s160, 4
      %s162 = scalar_lea.vmem %s2, %s161
      %p163 = pneg %p109
      %p164 = pneg %p106
      %p165 = scmp.lt.s32.totalorder %s15, 1
      %s166 = scalar_select %p165, %s15, 1
      %s167 = smul.addr %s166, 2
      %s168 = scalar_lea.vmem %s3, %s167
      %s169 = smul.u32 32, %s15
      %p170 = scmp.lt.s32.totalorder %s169, 63
      %s171 = scalar_select %p170, %s169, 63
      %s172 = smul.addr %s171, 4
      %s173 = scalar_lea.vmem %s0, %s172
      %s174 = smul.u32 32, %s15
      %p175 = scmp.lt.s32.totalorder %s15, 1
      %s176 = scalar_select %p175, %s15, 1
      %s177 = smul.addr %s176, 32
      %s178 = smul.addr %s177, 4
      %s179 = scalar_lea.vmem %s2, %s178
      %p180 = scmp.lt.s32.totalorder %s15, 1
      %s181 = scalar_select %p180, %s15, 1
      %s182 = smul.addr %s181, 2
      %s183 = scalar_lea.vmem %s3, %s182
      %v184 = vld [vmem:[%s173] sm:$0xf]
      %v185 = vld [vmem:[%s173 + $0x4] sm:$0xf]
      %v186 = vld [vmem:[%s173 + $0x8] sm:$0xf]
      %v187 = vld [vmem:[%s173 + $0xc] sm:$0xf]
      %v188 = vld [vmem:[%s173 + $0x10] sm:$0xf]
      %v189 = vld [vmem:[%s173 + $0x14] sm:$0xf]
      %v190 = vld [vmem:[%s173 + $0x18] sm:$0xf]
      %v191 = vld [vmem:[%s173 + $0x1c] sm:$0xf]
      %v192 = vld [vmem:[%s173 + $0x20] sm:$0xf]
      %v193 = vld [vmem:[%s173 + $0x24] sm:$0xf]
      %v194 = vld [vmem:[%s173 + $0x28] sm:$0xf]
      %v195 = vld [vmem:[%s173 + $0x2c] sm:$0xf]
      %v196 = vld [vmem:[%s173 + $0x30] sm:$0xf]
      %v197 = vld [vmem:[%s173 + $0x34] sm:$0xf]
      %v198 = vld [vmem:[%s173 + $0x38] sm:$0xf]
      %v199 = vld [vmem:[%s173 + $0x3c] sm:$0xf]
      %v200 = vld [vmem:[%s173 + $0x40] sm:$0xf]
      %v201 = vld [vmem:[%s173 + $0x44] sm:$0xf]
      %v202 = vld [vmem:[%s173 + $0x48] sm:$0xf]
      %v203 = vld [vmem:[%s173 + $0x4c] sm:$0xf]
      %v204 = vld [vmem:[%s173 + $0x50] sm:$0xf]
      %v205 = vld [vmem:[%s173 + $0x54] sm:$0xf]
      %v206 = vld [vmem:[%s173 + $0x58] sm:$0xf]
      %v207 = vld [vmem:[%s173 + $0x5c] sm:$0xf]
      %v208 = vld [vmem:[%s173 + $0x60] sm:$0xf]
      %v209 = vld [vmem:[%s173 + $0x64] sm:$0xf]
      %v210 = vld [vmem:[%s173 + $0x68] sm:$0xf]
      %v211 = vld [vmem:[%s173 + $0x6c] sm:$0xf]
      %v212 = vld [vmem:[%s173 + $0x70] sm:$0xf]
      %v213 = vld [vmem:[%s173 + $0x74] sm:$0xf]
      %v214 = vld [vmem:[%s173 + $0x78] sm:$0xf]
      %v215 = vld [vmem:[%s173 + $0x7c] sm:$0xf]
      %v216 = vld [vmem:[%s1] sm:$0xf]
      %v217 = vld [vmem:[%s1 + $0x4] sm:$0xf]
      %v218 = vld [vmem:[%s1 + $0x8] sm:$0xf]
      %v219 = vld [vmem:[%s1 + $0xc] sm:$0xf]
      %v220 = vld [vmem:[%s1 + $0x10] sm:$0xf]
      %v221 = vld [vmem:[%s1 + $0x14] sm:$0xf]
      %v222 = vld [vmem:[%s1 + $0x18] sm:$0xf]
      %v223 = vld [vmem:[%s1 + $0x1c] sm:$0xf]
      %v224 = vld [vmem:[%s1 + $0x20] sm:$0xf]
      %v225 = vld [vmem:[%s1 + $0x24] sm:$0xf]
      %v226 = vld [vmem:[%s1 + $0x28] sm:$0xf]
      %v227 = vld [vmem:[%s1 + $0x2c] sm:$0xf]
      %v228 = vld [vmem:[%s1 + $0x30] sm:$0xf]
      %v229 = vld [vmem:[%s1 + $0x34] sm:$0xf]
      %v230 = vld [vmem:[%s1 + $0x38] sm:$0xf]
      %v231 = vld [vmem:[%s1 + $0x3c] sm:$0xf]
      %v264 = vunpack.c.l.b16 %v184
      %v265 = vunpack.c.l.b16 %v185
      %v266 = vunpack.c.l.b16 %v186
      %v267 = vunpack.c.l.b16 %v187
      %v268 = vunpack.c.l.b16 %v188
      %v269 = vunpack.c.l.b16 %v189
      %v270 = vunpack.c.l.b16 %v190
      %v271 = vunpack.c.l.b16 %v191
      %v272 = vunpack.c.l.b16 %v192
      %v273 = vunpack.c.l.b16 %v193
      %v274 = vunpack.c.l.b16 %v194
      %v275 = vunpack.c.l.b16 %v195
      %v276 = vunpack.c.l.b16 %v196
      %v277 = vunpack.c.l.b16 %v197
      %v278 = vunpack.c.l.b16 %v198
      %v279 = vunpack.c.l.b16 %v199
      %v280 = vunpack.c.l.b16 %v200
      %v281 = vunpack.c.l.b16 %v201
      %v282 = vunpack.c.l.b16 %v202
      %v283 = vunpack.c.l.b16 %v203
      %v284 = vunpack.c.l.b16 %v204
      %v285 = vunpack.c.l.b16 %v205
      %v286 = vunpack.c.l.b16 %v206
      %v287 = vunpack.c.l.b16 %v207
      %v288 = vunpack.c.l.b16 %v208
      %v289 = vunpack.c.l.b16 %v209
      %v290 = vunpack.c.l.b16 %v210
      %v291 = vunpack.c.l.b16 %v211
      %v292 = vunpack.c.l.b16 %v212
      %v293 = vunpack.c.l.b16 %v213
      %v294 = vunpack.c.l.b16 %v214
      %v295 = vunpack.c.l.b16 %v215
      %v296 = vpack.c.b16 %v265, %v264
      %v297 = vpack.c.b16 %v267, %v266
      %v298 = vpack.c.b16 %v269, %v268
      %v299 = vpack.c.b16 %v271, %v270
      %v300 = vpack.c.b16 %v273, %v272
      %v301 = vpack.c.b16 %v275, %v274
      %v302 = vpack.c.b16 %v277, %v276
      %v303 = vpack.c.b16 %v279, %v278
      %v304 = vpack.c.b16 %v281, %v280
      %v305 = vpack.c.b16 %v283, %v282
      %v306 = vpack.c.b16 %v285, %v284
      %v307 = vpack.c.b16 %v287, %v286
      %v308 = vpack.c.b16 %v289, %v288
      %v309 = vpack.c.b16 %v291, %v290
      %v310 = vpack.c.b16 %v293, %v292
      %v311 = vpack.c.b16 %v295, %v294
      %v344 = vunpack.c.l.b16 %v216
      %v345 = vunpack.c.l.b16 %v217
      %v346 = vunpack.c.l.b16 %v218
      %v347 = vunpack.c.l.b16 %v219
      %v348 = vunpack.c.l.b16 %v220
      %v349 = vunpack.c.l.b16 %v221
      %v350 = vunpack.c.l.b16 %v222
      %v351 = vunpack.c.l.b16 %v223
      %v352 = vunpack.c.l.b16 %v224
      %v353 = vunpack.c.l.b16 %v225
      %v354 = vunpack.c.l.b16 %v226
      %v355 = vunpack.c.l.b16 %v227
      %v356 = vunpack.c.l.b16 %v228
      %v357 = vunpack.c.l.b16 %v229
      %v358 = vunpack.c.l.b16 %v230
      %v359 = vunpack.c.l.b16 %v231
      %v360 = vpack.c.b16 %v345, %v344
      %v361 = vpack.c.b16 %v347, %v346
      %v362 = vpack.c.b16 %v349, %v348
      %v363 = vpack.c.b16 %v351, %v350
      %v364 = vpack.c.b16 %v353, %v352
      %v365 = vpack.c.b16 %v355, %v354
      %v366 = vpack.c.b16 %v357, %v356
      %v367 = vpack.c.b16 %v359, %v358
      %376 = vmatpush.bf16.msra.mxu0 %v367
      %377 = vmatpush.bf16.msra.mxu0 %v366
      %378 = vmatpush.bf16.msra.mxu0 %v365
      %379 = vmatpush.bf16.msra.mxu0 %v364
      %380 = vmatpush.bf16.msra.mxu0 %v363
      %381 = vmatpush.bf16.msra.mxu0 %v362
      %382 = vmatpush.bf16.msra.mxu0 %v361
      %383 = vmatpush.bf16.msra.mxu0 %v360
      %384 = vmatmul.bf16.gmra.mxu0 %v296
      %v385 = vpop.f32.mrf.mxu0
      %v386 = vadd.f32 0.0, %v385
      %v387 = vpop.f32.mrf.mxu0
      %v388 = vadd.f32 0.0, %v387
      %389 = vmatmul.bf16.gmra.mxu0 %v297
      %v390 = vpop.f32.mrf.mxu0
      %v391 = vadd.f32 0.0, %v390
      %v392 = vpop.f32.mrf.mxu0
      %v393 = vadd.f32 0.0, %v392
      %394 = vmatmul.bf16.gmra.mxu0 %v298
      %v395 = vpop.f32.mrf.mxu0
      %v396 = vadd.f32 0.0, %v395
      %v397 = vpop.f32.mrf.mxu0
      %v398 = vadd.f32 0.0, %v397
      %399 = vmatmul.bf16.gmra.mxu0 %v299
      %v400 = vpop.f32.mrf.mxu0
      %v401 = vadd.f32 0.0, %v400
      %v402 = vpop.f32.mrf.mxu0
      %v403 = vadd.f32 0.0, %v402
      %404 = vmatmul.bf16.gmra.mxu0 %v300
      %v405 = vpop.f32.mrf.mxu0
      %v406 = vadd.f32 0.0, %v405
      %v407 = vpop.f32.mrf.mxu0
      %v408 = vadd.f32 0.0, %v407
      %409 = vmatmul.bf16.gmra.mxu0 %v301
      %v410 = vpop.f32.mrf.mxu0
      %v411 = vadd.f32 0.0, %v410
      %v412 = vpop.f32.mrf.mxu0
      %v413 = vadd.f32 0.0, %v412
      %414 = vmatmul.bf16.gmra.mxu0 %v302
      %v415 = vpop.f32.mrf.mxu0
      %v416 = vadd.f32 0.0, %v415
      %v417 = vpop.f32.mrf.mxu0
      %v418 = vadd.f32 0.0, %v417
      %419 = vmatmul.bf16.gmra.mxu0 %v303
      %v420 = vpop.f32.mrf.mxu0
      %v421 = vadd.f32 0.0, %v420
      %v422 = vpop.f32.mrf.mxu0
      %v423 = vadd.f32 0.0, %v422
      %424 = vmatmul.bf16.gmra.mxu0 %v304
      %v425 = vpop.f32.mrf.mxu0
      %v426 = vadd.f32 0.0, %v425
      %v427 = vpop.f32.mrf.mxu0
      %v428 = vadd.f32 0.0, %v427
      %429 = vmatmul.bf16.gmra.mxu0 %v305
      %v430 = vpop.f32.mrf.mxu0
      %v431 = vadd.f32 0.0, %v430
      %v432 = vpop.f32.mrf.mxu0
      %v433 = vadd.f32 0.0, %v432
      %434 = vmatmul.bf16.gmra.mxu0 %v306
      %v435 = vpop.f32.mrf.mxu0
      %v436 = vadd.f32 0.0, %v435
      %v437 = vpop.f32.mrf.mxu0
      %v438 = vadd.f32 0.0, %v437
      %439 = vmatmul.bf16.gmra.mxu0 %v307
      %v440 = vpop.f32.mrf.mxu0
      %v441 = vadd.f32 0.0, %v440
      %v442 = vpop.f32.mrf.mxu0
      %v443 = vadd.f32 0.0, %v442
      %444 = vmatmul.bf16.gmra.mxu0 %v308
      %v445 = vpop.f32.mrf.mxu0
      %v446 = vadd.f32 0.0, %v445
      %v447 = vpop.f32.mrf.mxu0
      %v448 = vadd.f32 0.0, %v447
      %449 = vmatmul.bf16.gmra.mxu0 %v309
      %v450 = vpop.f32.mrf.mxu0
      %v451 = vadd.f32 0.0, %v450
      %v452 = vpop.f32.mrf.mxu0
      %v453 = vadd.f32 0.0, %v452
      %454 = vmatmul.bf16.gmra.mxu0 %v310
      %v455 = vpop.f32.mrf.mxu0
      %v456 = vadd.f32 0.0, %v455
      %v457 = vpop.f32.mrf.mxu0
      %v458 = vadd.f32 0.0, %v457
      %459 = vmatmul.bf16.gmra.mxu0 %v311
      %v460 = vpop.f32.mrf.mxu0
      %v461 = vadd.f32 0.0, %v460
      %v462 = vpop.f32.mrf.mxu0
      %v463 = vadd.f32 0.0, %v462
      %464 = vdwg.mxu0
      %v465 = vadd.f32 %v386, %v388
      %v466 = vadd.f32 %v465, %v391
      %v467 = vadd.f32 %v466, %v393
      %v468 = vadd.f32 %v467, %v396
      %v469 = vadd.f32 %v468, %v398
      %v470 = vadd.f32 %v469, %v401
      %v471 = vadd.f32 %v470, %v403
      %v472 = vadd.f32 %v471, %v406
      %v473 = vadd.f32 %v472, %v408
      %v474 = vadd.f32 %v473, %v411
      %v475 = vadd.f32 %v474, %v413
      %v476 = vadd.f32 %v475, %v416
      %v477 = vadd.f32 %v476, %v418
      %v478 = vadd.f32 %v477, %v421
      %v479 = vadd.f32 %v478, %v423
      %v480 = vadd.f32 %v479, %v426
      %v481 = vadd.f32 %v480, %v428
      %v482 = vadd.f32 %v481, %v431
      %v483 = vadd.f32 %v482, %v433
      %v484 = vadd.f32 %v483, %v436
      %v485 = vadd.f32 %v484, %v438
      %v486 = vadd.f32 %v485, %v441
      %v487 = vadd.f32 %v486, %v443
      %v488 = vadd.f32 %v487, %v446
      %v489 = vadd.f32 %v488, %v448
      %v490 = vadd.f32 %v489, %v451
      %v491 = vadd.f32 %v490, %v453
      %v492 = vadd.f32 %v491, %v456
      %v493 = vadd.f32 %v492, %v458
      %v494 = vadd.f32 %v493, %v461
      %v495 = vadd.f32 %v494, %v463
      %v496 = vrot.slane %v495, 4
      %v497 = vadd.f32 %v495, %v496
      %v498 = vrot.slane %v497, 2
      %v499 = vadd.f32 %v497, %v498
      %v500 = vrot.slane %v499, 1
      %v501 = vadd.f32 %v499, %v500
      %502 = vst [vmem:[%s183] sm:$0x1] %v501
      %v503 = vmul.f32 %v386, %v386
      %v504 = vmul.f32 %v388, %v388
      %v505 = vmul.f32 %v391, %v391
      %v506 = vmul.f32 %v393, %v393
      %v507 = vmul.f32 %v396, %v396
      %v508 = vmul.f32 %v398, %v398
      %v509 = vmul.f32 %v401, %v401
      %v510 = vmul.f32 %v403, %v403
      %v511 = vmul.f32 %v406, %v406
      %v512 = vmul.f32 %v408, %v408
      %v513 = vmul.f32 %v411, %v411
      %v514 = vmul.f32 %v413, %v413
      %v515 = vmul.f32 %v416, %v416
      %v516 = vmul.f32 %v418, %v418
      %v517 = vmul.f32 %v421, %v421
      %v518 = vmul.f32 %v423, %v423
      %v519 = vmul.f32 %v426, %v426
      %v520 = vmul.f32 %v428, %v428
      %v521 = vmul.f32 %v431, %v431
      %v522 = vmul.f32 %v433, %v433
      %v523 = vmul.f32 %v436, %v436
      %v524 = vmul.f32 %v438, %v438
      %v525 = vmul.f32 %v441, %v441
      %v526 = vmul.f32 %v443, %v443
      %v527 = vmul.f32 %v446, %v446
      %v528 = vmul.f32 %v448, %v448
      %v529 = vmul.f32 %v451, %v451
      %v530 = vmul.f32 %v453, %v453
      %v531 = vmul.f32 %v456, %v456
      %v532 = vmul.f32 %v458, %v458
      %v533 = vmul.f32 %v461, %v461
      %v534 = vmul.f32 %v463, %v463
      %v535 = vadd.f32 %v503, %v504
      %v536 = vadd.f32 %v535, %v505
      %v537 = vadd.f32 %v536, %v506
      %v538 = vadd.f32 %v537, %v507
      %v539 = vadd.f32 %v538, %v508
      %v540 = vadd.f32 %v539, %v509
      %v541 = vadd.f32 %v540, %v510
      %v542 = vadd.f32 %v541, %v511
      %v543 = vadd.f32 %v542, %v512
      %v544 = vadd.f32 %v543, %v513
      %v545 = vadd.f32 %v544, %v514
      %v546 = vadd.f32 %v545, %v515
      %v547 = vadd.f32 %v546, %v516
      %v548 = vadd.f32 %v547, %v517
      %v549 = vadd.f32 %v548, %v518
      %v550 = vadd.f32 %v549, %v519
      %v551 = vadd.f32 %v550, %v520
      %v552 = vadd.f32 %v551, %v521
      %v553 = vadd.f32 %v552, %v522
      %v554 = vadd.f32 %v553, %v523
      %v555 = vadd.f32 %v554, %v524
      %v556 = vadd.f32 %v555, %v525
      %v557 = vadd.f32 %v556, %v526
      %v558 = vadd.f32 %v557, %v527
      %v559 = vadd.f32 %v558, %v528
      %v560 = vadd.f32 %v559, %v529
      %v561 = vadd.f32 %v560, %v530
      %v562 = vadd.f32 %v561, %v531
      %v563 = vadd.f32 %v562, %v532
      %v564 = vadd.f32 %v563, %v533
      %v565 = vadd.f32 %v564, %v534
      %v566 = vrot.slane %v565, 4
      %v567 = vadd.f32 %v565, %v566
      %v568 = vrot.slane %v567, 2
      %v569 = vadd.f32 %v567, %v568
      %v570 = vrot.slane %v569, 1
      %v571 = vadd.f32 %v569, %v570
      %572 = vst [vmem:[%s183 + $0x1] sm:$0x1] %v571
      %v573 = vpack.c.bf16 %v386, %v386
      %v574 = vpack.c.bf16 %v388, %v388
      %v575 = vpack.c.bf16 %v391, %v391
      %v576 = vpack.c.bf16 %v393, %v393
      %v577 = vpack.c.bf16 %v396, %v396
      %v578 = vpack.c.bf16 %v398, %v398
      %v579 = vpack.c.bf16 %v401, %v401
      %v580 = vpack.c.bf16 %v403, %v403
      %v581 = vpack.c.bf16 %v406, %v406
      %v582 = vpack.c.bf16 %v408, %v408
      %v583 = vpack.c.bf16 %v411, %v411
      %v584 = vpack.c.bf16 %v413, %v413
      %v585 = vpack.c.bf16 %v416, %v416
      %v586 = vpack.c.bf16 %v418, %v418
      %v587 = vpack.c.bf16 %v421, %v421
      %v588 = vpack.c.bf16 %v423, %v423
      %v589 = vpack.c.bf16 %v426, %v426
      %v590 = vpack.c.bf16 %v428, %v428
      %v591 = vpack.c.bf16 %v431, %v431
      %v592 = vpack.c.bf16 %v433, %v433
      %v593 = vpack.c.bf16 %v436, %v436
      %v594 = vpack.c.bf16 %v438, %v438
      %v595 = vpack.c.bf16 %v441, %v441
      %v596 = vpack.c.bf16 %v443, %v443
      %v597 = vpack.c.bf16 %v446, %v446
      %v598 = vpack.c.bf16 %v448, %v448
      %v599 = vpack.c.bf16 %v451, %v451
      %v600 = vpack.c.bf16 %v453, %v453
      %v601 = vpack.c.bf16 %v456, %v456
      %v602 = vpack.c.bf16 %v458, %v458
      %v603 = vpack.c.bf16 %v461, %v461
      %v604 = vpack.c.bf16 %v463, %v463
      %605 = vst [vmem:[%s179] sm:$0xf] %v573
      %606 = vst [vmem:[%s179 + $0x4] sm:$0xf] %v574
      %607 = vst [vmem:[%s179 + $0x8] sm:$0xf] %v575
      %608 = vst [vmem:[%s179 + $0xc] sm:$0xf] %v576
      %609 = vst [vmem:[%s179 + $0x10] sm:$0xf] %v577
      %610 = vst [vmem:[%s179 + $0x14] sm:$0xf] %v578
      %611 = vst [vmem:[%s179 + $0x18] sm:$0xf] %v579
      %612 = vst [vmem:[%s179 + $0x1c] sm:$0xf] %v580
      %613 = vst [vmem:[%s179 + $0x20] sm:$0xf] %v581
      %614 = vst [vmem:[%s179 + $0x24] sm:$0xf] %v582
      %615 = vst [vmem:[%s179 + $0x28] sm:$0xf] %v583
      %616 = vst [vmem:[%s179 + $0x2c] sm:$0xf] %v584
      %617 = vst [vmem:[%s179 + $0x30] sm:$0xf] %v585
      %618 = vst [vmem:[%s179 + $0x34] sm:$0xf] %v586
      %619 = vst [vmem:[%s179 + $0x38] sm:$0xf] %v587
      %620 = vst [vmem:[%s179 + $0x3c] sm:$0xf] %v588
      %621 = vst [vmem:[%s179 + $0x40] sm:$0xf] %v589
      %622 = vst [vmem:[%s179 + $0x44] sm:$0xf] %v590
      %623 = vst [vmem:[%s179 + $0x48] sm:$0xf] %v591
      %624 = vst [vmem:[%s179 + $0x4c] sm:$0xf] %v592
      %625 = vst [vmem:[%s179 + $0x50] sm:$0xf] %v593
      %626 = vst [vmem:[%s179 + $0x54] sm:$0xf] %v594
      %627 = vst [vmem:[%s179 + $0x58] sm:$0xf] %v595
      %628 = vst [vmem:[%s179 + $0x5c] sm:$0xf] %v596
      %629 = vst [vmem:[%s179 + $0x60] sm:$0xf] %v597
      %630 = vst [vmem:[%s179 + $0x64] sm:$0xf] %v598
      %631 = vst [vmem:[%s179 + $0x68] sm:$0xf] %v599
      %632 = vst [vmem:[%s179 + $0x6c] sm:$0xf] %v600
      %633 = vst [vmem:[%s179 + $0x70] sm:$0xf] %v601
      %634 = vst [vmem:[%s179 + $0x74] sm:$0xf] %v602
      %635 = vst [vmem:[%s179 + $0x78] sm:$0xf] %v603
      %636 = vst [vmem:[%s179 + $0x7c] sm:$0xf] %v604
      %p637 = scmp.lt.s32.totalorder %s15, 1
      %s638 = scalar_select %p637, %s15, 1
      %s639 = smul.addr %s638, 32
      %s640 = smul.addr %s639, 4
      %s641 = scalar_lea.vmem %s2, %s640
      %p642 = scmp.lt.s32.totalorder %s15, 1
      %s643 = scalar_select %p642, %s15, 1
      %s644 = smul.addr %s643, 2
      %s645 = scalar_lea.vmem %s3, %s644
      // Predicated region
      $region29: #{basic_conv_block.2} parent=27 // pred_check
        %p646 = pneg %p80
      $region30: #{basic_conv_block.2} parent=27 // pred_check_branch
        %648 = sbr.rel (%p646) target = $region32
      $region31: #{basic_conv_block.2} parent=27 // pred_region
        _
      $region32: #{basic_conv_block.2} parent=27 // pred_fallthru
        _
      // Predicated region
      $region33: #{basic_conv_block.2} parent=27 // pred_check
        %p649 = pneg %p106
      $region34: #{basic_conv_block.2} parent=27 // pred_check_branch
        %651 = sbr.rel (%p649) target = $region36
      $region35: #{basic_conv_block.2} parent=27 // pred_region
        _
      $region36: #{basic_conv_block.2} parent=27 // pred_fallthru
        _
    $region28: #{basic_conv_block.2} parent=5 // pred_fallthru
      _
    %p652 = scmp.le.s32.totalorder 2, %s10
    // Predicated region
    $region37: #{basic_conv_block.2} parent=5 // pred_check
      %p653 = pneg %p652
    $region38: #{basic_conv_block.2} parent=5 // pred_check_branch
      %655 = sbr.rel (%p653) target = $region40
    $region39: #{basic_conv_block.2} parent=5 // pred_region
      %s656 = ssub.s32 %s10, 2
      // Predicated region
      $region41: #{basic_conv_block.2} parent=39 // pred_check
        %p657 = pneg %p86
      $region42: #{basic_conv_block.2} parent=39 // pred_check_branch
        %659 = sbr.rel (%p657) target = $region44
      $region43: #{basic_conv_block.2} parent=39 // pred_region
        %p660 = scmp.lt.s32.totalorder %s16, 1
        %s661 = scalar_select %p660, %s16, 1
        %s662 = smul.addr %s661, 32
        %s663 = smul.addr %s662, 4
        %s664 = scalar_lea.vmem %s2, %s663
      $region44: #{basic_conv_block.2} parent=39 // pred_fallthru
        _
      // Predicated region
      $region45: #{basic_conv_block.2} parent=39 // pred_check
        %p665 = pneg %p112
      $region46: #{basic_conv_block.2} parent=39 // pred_check_branch
        %667 = sbr.rel (%p665) target = $region48
      $region47: #{basic_conv_block.2} parent=39 // pred_region
        %p668 = scmp.lt.s32.totalorder %s16, 1
        %s669 = scalar_select %p668, %s16, 1
        %s670 = smul.addr %s669, 2
        %s671 = scalar_lea.vmem %s3, %s670
      $region48: #{basic_conv_block.2} parent=39 // pred_fallthru
        _
    $region40: #{basic_conv_block.2} parent=5 // pred_fallthru
      _
  $region6: #{basic_conv_block.2} parent=0 // loop_footer
    %s14 = sadd.s32 1, %s10
  $region7: #{basic_conv_block.2} parent=0 // loop_footer_branch
    %9 = sbr.rel target = $region3
  $region8: #{basic_conv_block.2} parent=0 // loop_exit
    _

// kernel: basic_conv_block.3
$region0: #{basic_conv_block.3}
  #allocation0 [shape = 'u32[]', space=smem, size = 0x4, offset = 0x4, fixed_abs, tag = 'smem constant byte address 0x4 - core index']
  #allocation1 [shape = 'u32[72,128]{1,0:T(1,128)}', space=vmem, size = 0x9000, scoped, tag = 'internal scratch']
  #allocation2 [shape = 'f32[344,128]{1,0:T(8,128)}', space=vmem, size = 0x2b000, scoped, tag = 'scratch operand']
  %s0 = inlined_call_operand.vmem [shape: bf16[2,256,128], index: 0, kind: input, shape index: {}]
  %s1 = inlined_call_operand.vmem [shape: f32[8,128], index: 1, kind: input, shape index: {}]
  %s2 = inlined_call_operand.vmem [shape: bf16[9,128,128], index: 2, kind: input, shape index: {}]
  %s3 = inlined_call_operand.vmem [shape: f32[2,288,128], index: 3, kind: output, shape index: {}]
  %s4 = sld [smem:[#allocation0]]
  $region45: #{basic_conv_block.3} parent=0
    _
  %s6 = ssub.s32 1, %s4
  %s7 = scalar_select 0, %s6, %s4
  loop: start=0, step=1, limit=4
  $region2: #{basic_conv_block.3} parent=0 // loop_pre_header
    _
  $region3: #{basic_conv_block.3} parent=0 // loop_header
    %s9 = sphi 0, %s13
    %p10 = scmp.ge.s32.totalorder %s9, 4
    %s19 = sphi 0, %s21
    %s22 = sphi 0, %s19
    %s23 = sphi 0, %s22
    %s39 = sphi 0, %s23
    %s43 = sphi 0, %s43
    %s45 = sphi 0, %s43
    %s46 = sphi 0, %s45
    %s60 = sphi 0, %s46
    %s64 = sphi 0, %s64
    %s66 = sphi 0, %s64
    %s67 = sphi 0, %s66
    %s81 = sphi 0, %s67
    %s87 = sphi 0, %s89
    %s90 = sphi 0, %s87
    %s91 = sphi 0, %s90
    %s107 = sphi 0, %s91
  $region4: #{basic_conv_block.3} parent=0 // loop_header_branch
    %12 = sbr.rel (%p10) target = $region8
  $region5: #{basic_conv_block.3} parent=0 // loop_body
    %s14 = ssub.s32 %s9, 1
    %s15 = ssub.s32 %s9, 2
    %s16 = sadd.s32 %s9, 1
    %s17 = ssub.s32 %s9, %s16
    %p18 = scmp.eq.s32.totalorder %s17, 0
    %s20 = sadd.s32 %s19, 1
    %s21 = scalar_select %p18, %s19, %s20
    %p24 = pneg %p18
    %p25 = scmp.eq.s32.totalorder %s9, 1
    %p26 = por %p24, %p25
    %p27 = scmp.ne.s32.totalorder %s19, %s22
    %p28 = scmp.eq.s32.totalorder %s9, 0
    %p29 = por %p27, %p28
    %p30 = scmp.ne.s32.totalorder %s19, %s22
    %p31 = scmp.eq.s32.totalorder %s14, 1
    %p32 = por %p30, %p31
    %p33 = scmp.ne.s32.totalorder %s22, %s23
    %p34 = scmp.eq.s32.totalorder %s14, 0
    %p35 = por %p33, %p34
    %p36 = scmp.ne.s32.totalorder %s22, %s23
    %p37 = scmp.eq.s32.totalorder %s15, 1
    %p38 = por %p36, %p37
    %p40 = scmp.ne.s32.totalorder %s23, %s39
    %p41 = scmp.eq.s32.totalorder %s15, 0
    %p42 = por %p40, %p41
    %s44 = sadd.s32 %s43, 1
    %p47 = scmp.eq.s32.totalorder %s9, 1
    %p48 = scmp.ne.s32.totalorder %s43, %s45
    %p49 = scmp.eq.s32.totalorder %s9, 0
    %p50 = por %p48, %p49
    %p51 = scmp.ne.s32.totalorder %s43, %s45
    %p52 = scmp.eq.s32.totalorder %s14, 1
    %p53 = por %p51, %p52
    %p54 = scmp.ne.s32.totalorder %s45, %s46
    %p55 = scmp.eq.s32.totalorder %s14, 0
    %p56 = por %p54, %p55
    %p57 = scmp.ne.s32.totalorder %s45, %s46
    %p58 = scmp.eq.s32.totalorder %s15, 1
    %p59 = por %p57, %p58
    %p61 = scmp.ne.s32.totalorder %s46, %s60
    %p62 = scmp.eq.s32.totalorder %s15, 0
    %p63 = por %p61, %p62
    %s65 = sadd.s32 %s64, 1
    %p68 = scmp.eq.s32.totalorder %s9, 1
    %p69 = scmp.ne.s32.totalorder %s64, %s66
    %p70 = scmp.eq.s32.totalorder %s9, 0
    %p71 = por %p69, %p70
    %p72 = scmp.ne.s32.totalorder %s64, %s66
    %p73 = scmp.eq.s32.totalorder %s14, 1
    %p74 = por %p72, %p73
    %p75 = scmp.ne.s32.totalorder %s66, %s67
    %p76 = scmp.eq.s32.totalorder %s14, 0
    %p77 = por %p75, %p76
    %p78 = scmp.ne.s32.totalorder %s66, %s67
    %p79 = scmp.eq.s32.totalorder %s15, 1
    %p80 = por %p78, %p79
    %p82 = scmp.ne.s32.totalorder %s67, %s81
    %p83 = scmp.eq.s32.totalorder %s15, 0
    %p84 = por %p82, %p83
    %s85 = ssub.s32 %s9, %s16
    %p86 = scmp.eq.s32.totalorder %s85, 0
    %s88 = sadd.s32 %s87, 1
    %s89 = scalar_select %p86, %s87, %s88
    %p92 = pneg %p86
    %p93 = scmp.eq.s32.totalorder %s9, 1
    %p94 = por %p92, %p93
    %p95 = scmp.ne.s32.totalorder %s87, %s90
    %p96 = scmp.eq.s32.totalorder %s9, 0
    %p97 = por %p95, %p96
    %p98 = scmp.ne.s32.totalorder %s87, %s90
    %p99 = scmp.eq.s32.totalorder %s14, 1
    %p100 = por %p98, %p99
    %p101 = scmp.ne.s32.totalorder %s90, %s91
    %p102 = scmp.eq.s32.totalorder %s14, 0
    %p103 = por %p101, %p102
    %p104 = scmp.ne.s32.totalorder %s90, %s91
    %p105 = scmp.eq.s32.totalorder %s15, 1
    %p106 = por %p104, %p105
    %p108 = scmp.ne.s32.totalorder %s91, %s107
    %p109 = scmp.eq.s32.totalorder %s15, 0
    %p110 = por %p108, %p109
    %p111 = scmp.le.s32.totalorder 1, %s9
    %p112 = scmp.lt.s32.totalorder %s9, 3
    %p113 = pnand %p111, %p112
    %p114 = pneg %p113
    // Predicated region
    $region9: #{basic_conv_block.3} parent=5 // pred_check
      _
    $region10: #{basic_conv_block.3} parent=5 // pred_check_branch
      %116 = sbr.rel (%p113) target = $region12
    $region11: #{basic_conv_block.3} parent=5 // pred_region
      %s117 = ssub.s32 %s9, 1
      // Predicated region
      $region13: #{basic_conv_block.3} parent=11 // pred_check
        %p118 = pneg %p56
      $region14: #{basic_conv_block.3} parent=11 // pred_check_branch
        %120 = sbr.rel (%p118) target = $region16
      $region15: #{basic_conv_block.3} parent=11 // pred_region
        _
      $region16: #{basic_conv_block.3} parent=11 // pred_fallthru
        _
      // Predicated region
      $region17: #{basic_conv_block.3} parent=11 // pred_check
        %p121 = pneg %p77
      $region18: #{basic_conv_block.3} parent=11 // pred_check_branch
        %123 = sbr.rel (%p121) target = $region20
      $region19: #{basic_conv_block.3} parent=11 // pred_region
        _
      $region20: #{basic_conv_block.3} parent=11 // pred_fallthru
        _
    $region12: #{basic_conv_block.3} parent=5 // pred_fallthru
      _
    %p124 = scmp.lt.s32.totalorder %s9, 2
    // Predicated region
    $region21: #{basic_conv_block.3} parent=5 // pred_check
      %p125 = pneg %p124
    $region22: #{basic_conv_block.3} parent=5 // pred_check_branch
      %127 = sbr.rel (%p125) target = $region24
    $region23: #{basic_conv_block.3} parent=5 // pred_region
      // Predicated region
      $region25: #{basic_conv_block.3} parent=23 // pred_check
        %p128 = pneg %p29
      $region26: #{basic_conv_block.3} parent=23 // pred_check_branch
        %130 = sbr.rel (%p128) target = $region28
      $region27: #{basic_conv_block.3} parent=23 // pred_region
        %p131 = scmp.lt.s32.totalorder %s9, 1
        %s132 = scalar_select %p131, %s9, 1
        %s133 = smul.addr %s132, 32
        %s134 = smul.addr %s133, 4
        %s135 = scalar_lea.vmem %s0, %s134
      $region28: #{basic_conv_block.3} parent=23 // pred_fallthru
        _
    $region24: #{basic_conv_block.3} parent=5 // pred_fallthru
      _
    %p136 = scmp.le.s32.totalorder 1, %s9
    %p137 = scmp.lt.s32.totalorder %s9, 3
    %p138 = pnand %p136, %p137
    %p139 = pneg %p138
    // Predicated region
    $region29: #{basic_conv_block.3} parent=5 // pred_check
      _
    $region30: #{basic_conv_block.3} parent=5 // pred_check_branch
      %141 = sbr.rel (%p138) target = $region32
    $region31: #{basic_conv_block.3} parent=5 // pred_region
      %s142 = ssub.s32 %s9, 1
      %p143 = scmp.lt.s32.totalorder %s14, 1
      %s144 = scalar_select %p143, %s14, 1
      %s145 = smul.addr %s144, 32
      %s146 = smul.addr %s145, 4
      %s147 = scalar_lea.vmem %s0, %s146
      %p148 = pneg %p35
      %p149 = pneg %p32
      %p150 = pneg %p56
      %p151 = pneg %p53
      %p152 = pneg %p77
      %p153 = pneg %p74
      %p154 = pneg %p103
      %p155 = pneg %p100
      %p156 = scmp.lt.s32.totalorder %s14, 1
      %s157 = scalar_select %p156, %s14, 1
      %s158 = smul.addr %s157, 36
      %s159 = smul.addr %s158, 8
      %s160 = scalar_lea.vmem %s3, %s159
      %p161 = scmp.lt.s32.totalorder %s14, 1
      %s162 = scalar_select %p161, %s14, 1
      %s163 = smul.addr %s162, 32
      %s164 = smul.addr %s163, 4
      %s165 = scalar_lea.vmem %s0, %s164
      %p166 = scmp.lt.s32.totalorder %s14, 1
      %s167 = scalar_select %p166, %s14, 1
      %s168 = smul.addr %s167, 36
      %s169 = smul.addr %s168, 8
      %s170 = scalar_lea.vmem %s3, %s169
      %v171 = vld [vmem:[%s1] sm:$0x1]
      %v172 = vld [vmem:[%s1 + $0x1] sm:$0x1]
      %v173 = vld [vmem:[%s165] sm:$0xf]
      %v174 = vld [vmem:[%s165 + $0x4] sm:$0xf]
      %v175 = vld [vmem:[%s165 + $0x8] sm:$0xf]
      %v176 = vld [vmem:[%s165 + $0xc] sm:$0xf]
      %v177 = vld [vmem:[%s165 + $0x10] sm:$0xf]
      %v178 = vld [vmem:[%s165 + $0x14] sm:$0xf]
      %v179 = vld [vmem:[%s165 + $0x18] sm:$0xf]
      %v180 = vld [vmem:[%s165 + $0x1c] sm:$0xf]
      %v181 = vld [vmem:[%s165 + $0x20] sm:$0xf]
      %v182 = vld [vmem:[%s165 + $0x24] sm:$0xf]
      %v183 = vld [vmem:[%s165 + $0x28] sm:$0xf]
      %v184 = vld [vmem:[%s165 + $0x2c] sm:$0xf]
      %v185 = vld [vmem:[%s165 + $0x30] sm:$0xf]
      %v186 = vld [vmem:[%s165 + $0x34] sm:$0xf]
      %v187 = vld [vmem:[%s165 + $0x38] sm:$0xf]
      %v188 = vld [vmem:[%s165 + $0x3c] sm:$0xf]
      %v189 = vld [vmem:[%s165 + $0x40] sm:$0xf]
      %v190 = vld [vmem:[%s165 + $0x44] sm:$0xf]
      %v191 = vld [vmem:[%s165 + $0x48] sm:$0xf]
      %v192 = vld [vmem:[%s165 + $0x4c] sm:$0xf]
      %v193 = vld [vmem:[%s165 + $0x50] sm:$0xf]
      %v194 = vld [vmem:[%s165 + $0x54] sm:$0xf]
      %v195 = vld [vmem:[%s165 + $0x58] sm:$0xf]
      %v196 = vld [vmem:[%s165 + $0x5c] sm:$0xf]
      %v197 = vld [vmem:[%s165 + $0x60] sm:$0xf]
      %v198 = vld [vmem:[%s165 + $0x64] sm:$0xf]
      %v199 = vld [vmem:[%s165 + $0x68] sm:$0xf]
      %v200 = vld [vmem:[%s165 + $0x6c] sm:$0xf]
      %v201 = vld [vmem:[%s165 + $0x70] sm:$0xf]
      %v202 = vld [vmem:[%s165 + $0x74] sm:$0xf]
      %v203 = vld [vmem:[%s165 + $0x78] sm:$0xf]
      %v204 = vld [vmem:[%s165 + $0x7c] sm:$0xf]
      %v205 = vunpack.c.l.bf16 %v173
      %v206 = vunpack.c.l.bf16 %v174
      %v207 = vunpack.c.l.bf16 %v175
      %v208 = vunpack.c.l.bf16 %v176
      %v209 = vunpack.c.l.bf16 %v177
      %v210 = vunpack.c.l.bf16 %v178
      %v211 = vunpack.c.l.bf16 %v179
      %v212 = vunpack.c.l.bf16 %v180
      %v213 = vunpack.c.l.bf16 %v181
      %v214 = vunpack.c.l.bf16 %v182
      %v215 = vunpack.c.l.bf16 %v183
      %v216 = vunpack.c.l.bf16 %v184
      %v217 = vunpack.c.l.bf16 %v185
      %v218 = vunpack.c.l.bf16 %v186
      %v219 = vunpack.c.l.bf16 %v187
      %v220 = vunpack.c.l.bf16 %v188
      %v221 = vunpack.c.l.bf16 %v189
      %v222 = vunpack.c.l.bf16 %v190
      %v223 = vunpack.c.l.bf16 %v191
      %v224 = vunpack.c.l.bf16 %v192
      %v225 = vunpack.c.l.bf16 %v193
      %v226 = vunpack.c.l.bf16 %v194
      %v227 = vunpack.c.l.bf16 %v195
      %v228 = vunpack.c.l.bf16 %v196
      %v229 = vunpack.c.l.bf16 %v197
      %v230 = vunpack.c.l.bf16 %v198
      %v231 = vunpack.c.l.bf16 %v199
      %v232 = vunpack.c.l.bf16 %v200
      %v233 = vunpack.c.l.bf16 %v201
      %v234 = vunpack.c.l.bf16 %v202
      %v235 = vunpack.c.l.bf16 %v203
      %v236 = vunpack.c.l.bf16 %v204
      %v237 = vperm.slane %v171, 0
      %v238 = vmul.f32 %v205, %v237
      %v239 = vmul.f32 %v206, %v237
      %v240 = vmul.f32 %v207, %v237
      %v241 = vmul.f32 %v208, %v237
      %v242 = vmul.f32 %v209, %v237
      %v243 = vmul.f32 %v210, %v237
      %v244 = vmul.f32 %v211, %v237
      %v245 = vmul.f32 %v212, %v237
      %v246 = vmul.f32 %v213, %v237
      %v247 = vmul.f32 %v214, %v237
      %v248 = vmul.f32 %v215, %v237
      %v249 = vmul.f32 %v216, %v237
      %v250 = vmul.f32 %v217, %v237
      %v251 = vmul.f32 %v218, %v237
      %v252 = vmul.f32 %v219, %v237
      %v253 = vmul.f32 %v220, %v237
      %v254 = vmul.f32 %v221, %v237
      %v255 = vmul.f32 %v222, %v237
      %v256 = vmul.f32 %v223, %v237
      %v257 = vmul.f32 %v224, %v237
      %v258 = vmul.f32 %v225, %v237
      %v259 = vmul.f32 %v226, %v237
      %v260 = vmul.f32 %v227, %v237
      %v261 = vmul.f32 %v228, %v237
      %v262 = vmul.f32 %v229, %v237
      %v263 = vmul.f32 %v230, %v237
      %v264 = vmul.f32 %v231, %v237
      %v265 = vmul.f32 %v232, %v237
      %v266 = vmul.f32 %v233, %v237
      %v267 = vmul.f32 %v234, %v237
      %v268 = vmul.f32 %v235, %v237
      %v269 = vmul.f32 %v236, %v237
      %v270 = vperm.slane %v172, 0
      %v271 = vadd.f32 %v238, %v270
      %v272 = vadd.f32 %v239, %v270
      %v273 = vadd.f32 %v240, %v270
      %v274 = vadd.f32 %v241, %v270
      %v275 = vadd.f32 %v242, %v270
      %v276 = vadd.f32 %v243, %v270
      %v277 = vadd.f32 %v244, %v270
      %v278 = vadd.f32 %v245, %v270
      %v279 = vadd.f32 %v246, %v270
      %v280 = vadd.f32 %v247, %v270
      %v281 = vadd.f32 %v248, %v270
      %v282 = vadd.f32 %v249, %v270
      %v283 = vadd.f32 %v250, %v270
      %v284 = vadd.f32 %v251, %v270
      %v285 = vadd.f32 %v252, %v270
      %v286 = vadd.f32 %v253, %v270
      %v287 = vadd.f32 %v254, %v270
      %v288 = vadd.f32 %v255, %v270
      %v289 = vadd.f32 %v256, %v270
      %v290 = vadd.f32 %v257, %v270
      %v291 = vadd.f32 %v258, %v270
      %v292 = vadd.f32 %v259, %v270
      %v293 = vadd.f32 %v260, %v270
      %v294 = vadd.f32 %v261, %v270
      %v295 = vadd.f32 %v262, %v270
      %v296 = vadd.f32 %v263, %v270
      %v297 = vadd.f32 %v264, %v270
      %v298 = vadd.f32 %v265, %v270
      %v299 = vadd.f32 %v266, %v270
      %v300 = vadd.f32 %v267, %v270
      %v301 = vadd.f32 %v268, %v270
      %v302 = vadd.f32 %v269, %v270
      %vm303 = vcmp.gt.f32.partialorder %v271, 0.0
      %vm304 = vcmp.gt.f32.partialorder %v272, 0.0
      %vm305 = vcmp.gt.f32.partialorder %v273, 0.0
      %vm306 = vcmp.gt.f32.partialorder %v274, 0.0
      %vm307 = vcmp.gt.f32.partialorder %v275, 0.0
      %vm308 = vcmp.gt.f32.partialorder %v276, 0.0
      %vm309 = vcmp.gt.f32.partialorder %v277, 0.0
      %vm310 = vcmp.gt.f32.partialorder %v278, 0.0
      %vm311 = vcmp.gt.f32.partialorder %v279, 0.0
      %vm312 = vcmp.gt.f32.partialorder %v280, 0.0
      %vm313 = vcmp.gt.f32.partialorder %v281, 0.0
      %vm314 = vcmp.gt.f32.partialorder %v282, 0.0
      %vm315 = vcmp.gt.f32.partialorder %v283, 0.0
      %vm316 = vcmp.gt.f32.partialorder %v284, 0.0
      %vm317 = vcmp.gt.f32.partialorder %v285, 0.0
      %vm318 = vcmp.gt.f32.partialorder %v286, 0.0
      %vm319 = vcmp.gt.f32.partialorder %v287, 0.0
      %vm320 = vcmp.gt.f32.partialorder %v288, 0.0
      %vm321 = vcmp.gt.f32.partialorder %v289, 0.0
      %vm322 = vcmp.gt.f32.partialorder %v290, 0.0
      %vm323 = vcmp.gt.f32.partialorder %v291, 0.0
      %vm324 = vcmp.gt.f32.partialorder %v292, 0.0
      %vm325 = vcmp.gt.f32.partialorder %v293, 0.0
      %vm326 = vcmp.gt.f32.partialorder %v294, 0.0
      %vm327 = vcmp.gt.f32.partialorder %v295, 0.0
      %vm328 = vcmp.gt.f32.partialorder %v296, 0.0
      %vm329 = vcmp.gt.f32.partialorder %v297, 0.0
      %vm330 = vcmp.gt.f32.partialorder %v298, 0.0
      %vm331 = vcmp.gt.f32.partialorder %v299, 0.0
      %vm332 = vcmp.gt.f32.partialorder %v300, 0.0
      %vm333 = vcmp.gt.f32.partialorder %v301, 0.0
      %vm334 = vcmp.gt.f32.partialorder %v302, 0.0
      %v335 = vmul.f32 %v271, 0.1
      %v336 = vmul.f32 %v272, 0.1
      %v337 = vmul.f32 %v273, 0.1
      %v338 = vmul.f32 %v274, 0.1
      %v339 = vmul.f32 %v275, 0.1
      %v340 = vmul.f32 %v276, 0.1
      %v341 = vmul.f32 %v277, 0.1
      %v342 = vmul.f32 %v278, 0.1
      %v343 = vmul.f32 %v279, 0.1
      %v344 = vmul.f32 %v280, 0.1
      %v345 = vmul.f32 %v281, 0.1
      %v346 = vmul.f32 %v282, 0.1
      %v347 = vmul.f32 %v283, 0.1
      %v348 = vmul.f32 %v284, 0.1
      %v349 = vmul.f32 %v285, 0.1
      %v350 = vmul.f32 %v286, 0.1
      %v351 = vmul.f32 %v287, 0.1
      %v352 = vmul.f32 %v288, 0.1
      %v353 = vmul.f32 %v289, 0.1
      %v354 = vmul.f32 %v290, 0.1
      %v355 = vmul.f32 %v291, 0.1
      %v356 = vmul.f32 %v292, 0.1
      %v357 = vmul.f32 %v293, 0.1
      %v358 = vmul.f32 %v294, 0.1
      %v359 = vmul.f32 %v295, 0.1
      %v360 = vmul.f32 %v296, 0.1
      %v361 = vmul.f32 %v297, 0.1
      %v362 = vmul.f32 %v298, 0.1
      %v363 = vmul.f32 %v299, 0.1
      %v364 = vmul.f32 %v300, 0.1
      %v365 = vmul.f32 %v301, 0.1
      %v366 = vmul.f32 %v302, 0.1
      %v367 = vsel %vm303, %v271, %v335
      %v368 = vsel %vm304, %v272, %v336
      %v369 = vsel %vm305, %v273, %v337
      %v370 = vsel %vm306, %v274, %v338
      %v371 = vsel %vm307, %v275, %v339
      %v372 = vsel %vm308, %v276, %v340
      %v373 = vsel %vm309, %v277, %v341
      %v374 = vsel %vm310, %v278, %v342
      %v375 = vsel %vm311, %v279, %v343
      %v376 = vsel %vm312, %v280, %v344
      %v377 = vsel %vm313, %v281, %v345
      %v378 = vsel %vm314, %v282, %v346
      %v379 = vsel %vm315, %v283, %v347
      %v380 = vsel %vm316, %v284, %v348
      %v381 = vsel %vm317, %v285, %v349
      %v382 = vsel %vm318, %v286, %v350
      %v383 = vsel %vm319, %v287, %v351
      %v384 = vsel %vm320, %v288, %v352
      %v385 = vsel %vm321, %v289, %v353
      %v386 = vsel %vm322, %v290, %v354
      %v387 = vsel %vm323, %v291, %v355
      %v388 = vsel %vm324, %v292, %v356
      %v389 = vsel %vm325, %v293, %v357
      %v390 = vsel %vm326, %v294, %v358
      %v391 = vsel %vm327, %v295, %v359
      %v392 = vsel %vm328, %v296, %v360
      %v393 = vsel %vm329, %v297, %v361
      %v394 = vsel %vm330, %v298, %v362
      %v395 = vsel %vm331, %v299, %v363
      %v396 = vsel %vm332, %v300, %v364
      %v397 = vsel %vm333, %v301, %v365
      %v398 = vsel %vm334, %v302, %v366
      %399 = vst [vmem:[#allocation2] sm:$0xff] 0.0
      %400 = vst [vmem:[#allocation2 + $0x8] sm:$0xff] 0.0
      %401 = vst [vmem:[#allocation2 + $0x10] sm:$0xff] 0.0
      %402 = vst [vmem:[#allocation2 + $0x18] sm:$0xff] 0.0
      %403 = vst [vmem:[#allocation2 + $0x20] sm:$0xff] 0.0
      %404 = vst [vmem:[#allocation2 + $0x28] sm:$0xff] 0.0
      %405 = vst [vmem:[#allocation2 + $0x30] sm:$0xff] 0.0
      %406 = vst [vmem:[#allocation2 + $0x38] sm:$0xff] 0.0
      %407 = vst [vmem:[#allocation2 + $0x40] sm:$0xff] 0.0
      %408 = vst [vmem:[#allocation2 + $0x48] sm:$0xff] 0.0
      %409 = vst [vmem:[#allocation2 + $0x50] sm:$0xff] 0.0
      %410 = vst [vmem:[#allocation2 + $0x58] sm:$0xff] 0.0
      %411 = vst [vmem:[#allocation2 + $0x60] sm:$0xff] 0.0
      %412 = vst [vmem:[#allocation2 + $0x68] sm:$0xff] 0.0
      %413 = vst [vmem:[#allocation2 + $0x70] sm:$0xff] 0.0
      %414 = vst [vmem:[#allocation2 + $0x78] sm:$0xff] 0.0
      %415 = vst [vmem:[#allocation2 + $0x80] sm:$0xff] 0.0
      %416 = vst [vmem:[#allocation2 + $0x88] sm:$0xff] 0.0
      %417 = vst [vmem:[#allocation2 + $0x90] sm:$0xff] 0.0
      %418 = vst [vmem:[#allocation2 + $0x98] sm:$0xff] 0.0
      %419 = vst [vmem:[#allocation2 + $0xa0] sm:$0xff] 0.0
      %420 = vst [vmem:[#allocation2 + $0xa8] sm:$0xff] 0.0
      %421 = vst [vmem:[#allocation2 + $0xb0] sm:$0xff] 0.0
      %422 = vst [vmem:[#allocation2 + $0xb8] sm:$0xff] 0.0
      %423 = vst [vmem:[#allocation2 + $0xc0] sm:$0xff] 0.0
      %424 = vst [vmem:[#allocation2 + $0xc8] sm:$0xff] 0.0
      %425 = vst [vmem:[#allocation2 + $0xd0] sm:$0xff] 0.0
      %426 = vst [vmem:[#allocation2 + $0xd8] sm:$0xff] 0.0
      %427 = vst [vmem:[#allocation2 + $0xe0] sm:$0xff] 0.0
      %428 = vst [vmem:[#allocation2 + $0xe8] sm:$0xff] 0.0
      %429 = vst [vmem:[#allocation2 + $0xf0] sm:$0xff] 0.0
      %430 = vst [vmem:[#allocation2 + $0xf8] sm:$0xff] 0.0
      %431 = vst [vmem:[#allocation2 + $0x100] sm:$0xff] 0.0
      %432 = vst [vmem:[#allocation2 + $0x108] sm:$0xff] 0.0
      %433 = vst [vmem:[#allocation2 + $0x110] sm:$0xff] 0.0
      %434 = vst [vmem:[#allocation2 + $0x118] sm:$0xff] 0.0
      %435 = vst [vmem:[#allocation2 + $0x120] sm:$0xff] 0.0
      %436 = vst [vmem:[#allocation2 + $0x128] sm:$0xff] 0.0
      %437 = vst [vmem:[#allocation2 + $0x130] sm:$0xff] 0.0
      %438 = vst [vmem:[#allocation2 + $0x138] sm:$0xff] 0.0
      %439 = vst [vmem:[#allocation2 + $0x140] sm:$0xff] 0.0
      %440 = vst [vmem:[#allocation2 + $0x148] sm:$0xff] 0.0
      %441 = vst [vmem:[#allocation2 + $0x150] sm:$0xff] 0.0
      %442 = vst [vmem:[#allocation2 + $0x13] sm:$0xff] %v367
      %443 = vst [vmem:[#allocation2 + $0x1b] sm:$0xff] %v368
      %444 = vst [vmem:[#allocation2 + $0x25] sm:$0xff] %v369
      %445 = vst [vmem:[#allocation2 + $0x2d] sm:$0xff] %v370
      %446 = vst [vmem:[#allocation2 + $0x37] sm:$0xff] %v371
      %447 = vst [vmem:[#allocation2 + $0x3f] sm:$0xff] %v372
      %448 = vst [vmem:[#allocation2 + $0x49] sm:$0xff] %v373
      %449 = vst [vmem:[#allocation2 + $0x51] sm:$0xff] %v374
      %450 = vst [vmem:[#allocation2 + $0x5b] sm:$0xff] %v375
      %451 = vst [vmem:[#allocation2 + $0x63] sm:$0xff] %v376
      %452 = vst [vmem:[#allocation2 + $0x6d] sm:$0xff] %v377
      %453 = vst [vmem:[#allocation2 + $0x75] sm:$0xff] %v378
      %454 = vst [vmem:[#allocation2 + $0x7f] sm:$0xff] %v379
      %455 = vst [vmem:[#allocation2 + $0x87] sm:$0xff] %v380
      %456 = vst [vmem:[#allocation2 + $0x91] sm:$0xff] %v381
      %457 = vst [vmem:[#allocation2 + $0x99] sm:$0xff] %v382
      %458 = vst [vmem:[#allocation2 + $0xa3] sm:$0xff] %v383
      %459 = vst [vmem:[#allocation2 + $0xab] sm:$0xff] %v384
      %460 = vst [vmem:[#allocation2 + $0xb5] sm:$0xff] %v385
      %461 = vst [vmem:[#allocation2 + $0xbd] sm:$0xff] %v386
      %462 = vst [vmem:[#allocation2 + $0xc7] sm:$0xff] %v387
      %463 = vst [vmem:[#allocation2 + $0xcf] sm:$0xff] %v388
      %464 = vst [vmem:[#allocation2 + $0xd9] sm:$0xff] %v389
      %465 = vst [vmem:[#allocation2 + $0xe1] sm:$0xff] %v390
      %466 = vst [vmem:[#allocation2 + $0xeb] sm:$0xff] %v391
      %467 = vst [vmem:[#allocation2 + $0xf3] sm:$0xff] %v392
      %468 = vst [vmem:[#allocation2 + $0xfd] sm:$0xff] %v393
      %469 = vst [vmem:[#allocation2 + $0x105] sm:$0xff] %v394
      %470 = vst [vmem:[#allocation2 + $0x10f] sm:$0xff] %v395
      %471 = vst [vmem:[#allocation2 + $0x117] sm:$0xff] %v396
      %472 = vst [vmem:[#allocation2 + $0x121] sm:$0xff] %v397
      %473 = vst [vmem:[#allocation2 + $0x129] sm:$0xff] %v398
      %v474 = vld [vmem:[#allocation2] sm:$0xff]
      %v475 = vld [vmem:[#allocation2 + $0x8] sm:$0xff]
      %v476 = vld [vmem:[#allocation2 + $0x10] sm:$0xff]
      %v477 = vld [vmem:[#allocation2 + $0x18] sm:$0xff]
      %v478 = vld [vmem:[#allocation2 + $0x20] sm:$0xff]
      %v479 = vld [vmem:[#allocation2 + $0x28] sm:$0xff]
      %v480 = vld [vmem:[#allocation2 + $0x30] sm:$0xff]
      %v481 = vld [vmem:[#allocation2 + $0x38] sm:$0xff]
      %v482 = vld [vmem:[#allocation2 + $0x40] sm:$0xff]
      %v483 = vld [vmem:[#allocation2 + $0x48] sm:$0xff]
      %v484 = vld [vmem:[#allocation2 + $0x50] sm:$0xff]
      %v485 = vld [vmem:[#allocation2 + $0x58] sm:$0xff]
      %v486 = vld [vmem:[#allocation2 + $0x60] sm:$0xff]
      %v487 = vld [vmem:[#allocation2 + $0x68] sm:$0xff]
      %v488 = vld [vmem:[#allocation2 + $0x70] sm:$0xff]
      %v489 = vld [vmem:[#allocation2 + $0x78] sm:$0xff]
      %v490 = vld [vmem:[#allocation2 + $0x80] sm:$0xff]
      %v491 = vld [vmem:[#allocation2 + $0x88] sm:$0xff]
      %v492 = vld [vmem:[#allocation2 + $0x90] sm:$0xff]
      %v493 = vld [vmem:[#allocation2 + $0x98] sm:$0xff]
      %v494 = vld [vmem:[#allocation2 + $0xa0] sm:$0xff]
      %v495 = vld [vmem:[#allocation2 + $0xa8] sm:$0xff]
      %v496 = vld [vmem:[#allocation2 + $0xb0] sm:$0xff]
      %v497 = vld [vmem:[#allocation2 + $0xb8] sm:$0xff]
      %v498 = vld [vmem:[#allocation2 + $0xc0] sm:$0xff]
      %v499 = vld [vmem:[#allocation2 + $0xc8] sm:$0xff]
      %v500 = vld [vmem:[#allocation2 + $0xd0] sm:$0xff]
      %v501 = vld [vmem:[#allocation2 + $0xd8] sm:$0xff]
      %v502 = vld [vmem:[#allocation2 + $0xe0] sm:$0xff]
      %v503 = vld [vmem:[#allocation2 + $0xe8] sm:$0xff]
      %v504 = vld [vmem:[#allocation2 + $0xf0] sm:$0xff]
      %v505 = vld [vmem:[#allocation2 + $0xf8] sm:$0xff]
      %v506 = vld [vmem:[#allocation2 + $0x100] sm:$0xff]
      %v507 = vld [vmem:[#allocation2 + $0x108] sm:$0xff]
      %v508 = vld [vmem:[#allocation2 + $0x110] sm:$0xff]
      %v509 = vld [vmem:[#allocation2 + $0x118] sm:$0xff]
      %v510 = vpack.c.bf16 %v475, %v474
      %v511 = vpack.c.bf16 %v477, %v476
      %v512 = vpack.c.bf16 %v479, %v478
      %v513 = vpack.c.bf16 %v481, %v480
      %v514 = vpack.c.bf16 %v483, %v482
      %v515 = vpack.c.bf16 %v485, %v484
      %v516 = vpack.c.bf16 %v487, %v486
      %v517 = vpack.c.bf16 %v489, %v488
      %v518 = vpack.c.bf16 %v491, %v490
      %v519 = vpack.c.bf16 %v493, %v492
      %v520 = vpack.c.bf16 %v495, %v494
      %v521 = vpack.c.bf16 %v497, %v496
      %v522 = vpack.c.bf16 %v499, %v498
      %v523 = vpack.c.bf16 %v501, %v500
      %v524 = vpack.c.bf16 %v503, %v502
      %v525 = vpack.c.bf16 %v505, %v504
      %v526 = vpack.c.bf16 %v507, %v506
      %v527 = vpack.c.bf16 %v509, %v508
      %v528 = vld [vmem:[%s2] sm:$0xf]
      %v529 = vld [vmem:[%s2 + $0x4] sm:$0xf]
      %v530 = vld [vmem:[%s2 + $0x8] sm:$0xf]
      %v531 = vld [vmem:[%s2 + $0xc] sm:$0xf]
      %v532 = vld [vmem:[%s2 + $0x10] sm:$0xf]
      %v533 = vld [vmem:[%s2 + $0x14] sm:$0xf]
      %v534 = vld [vmem:[%s2 + $0x18] sm:$0xf]
      %v535 = vld [vmem:[%s2 + $0x1c] sm:$0xf]
      %v536 = vld [vmem:[%s2 + $0x20] sm:$0xf]
      %v537 = vld [vmem:[%s2 + $0x24] sm:$0xf]
      %v538 = vld [vmem:[%s2 + $0x28] sm:$0xf]
      %v539 = vld [vmem:[%s2 + $0x2c] sm:$0xf]
      %v540 = vld [vmem:[%s2 + $0x30] sm:$0xf]
      %v541 = vld [vmem:[%s2 + $0x34] sm:$0xf]
      %v542 = vld [vmem:[%s2 + $0x38] sm:$0xf]
      %v543 = vld [vmem:[%s2 + $0x3c] sm:$0xf]
      %v544 = vld [vmem:[#allocation2 + $0x1] sm:$0xff]
      %v545 = vld [vmem:[#allocation2 + $0x9] sm:$0xff]
      %v546 = vld [vmem:[#allocation2 + $0x11] sm:$0xff]
      %v547 = vld [vmem:[#allocation2 + $0x19] sm:$0xff]
      %v548 = vld [vmem:[#allocation2 + $0x21] sm:$0xff]
      %v549 = vld [vmem:[#allocation2 + $0x29] sm:$0xff]
      %v550 = vld [vmem:[#allocation2 + $0x31] sm:$0xff]
      %v551 = vld [vmem:[#allocation2 + $0x39] sm:$0xff]
      %v552 = vld [vmem:[#allocation2 + $0x41] sm:$0xff]
      %v553 = vld [vmem:[#allocation2 + $0x49] sm:$0xff]
      %v554 = vld [vmem:[#allocation2 + $0x51] sm:$0xff]
      %v555 = vld [vmem:[#allocation2 + $0x59] sm:$0xff]
      %v556 = vld [vmem:[#allocation2 + $0x61] sm:$0xff]
      %v557 = vld [vmem:[#allocation2 + $0x69] sm:$0xff]
      %v558 = vld [vmem:[#allocation2 + $0x71] sm:$0xff]
      %v559 = vld [vmem:[#allocation2 + $0x79] sm:$0xff]
      %v560 = vld [vmem:[#allocation2 + $0x81] sm:$0xff]
      %v561 = vld [vmem:[#allocation2 + $0x89] sm:$0xff]
      %v562 = vld [vmem:[#allocation2 + $0x91] sm:$0xff]
      %v563 = vld [vmem:[#allocation2 + $0x99] sm:$0xff]
      %v564 = vld [vmem:[#allocation2 + $0xa1] sm:$0xff]
      %v565 = vld [vmem:[#allocation2 + $0xa9] sm:$0xff]
      %v566 = vld [vmem:[#allocation2 + $0xb1] sm:$0xff]
      %v567 = vld [vmem:[#allocation2 + $0xb9] sm:$0xff]
      %v568 = vld [vmem:[#allocation2 + $0xc1] sm:$0xff]
      %v569 = vld [vmem:[#allocation2 + $0xc9] sm:$0xff]
      %v570 = vld [vmem:[#allocation2 + $0xd1] sm:$0xff]
      %v571 = vld [vmem:[#allocation2 + $0xd9] sm:$0xff]
      %v572 = vld [vmem:[#allocation2 + $0xe1] sm:$0xff]
      %v573 = vld [vmem:[#allocation2 + $0xe9] sm:$0xff]
      %v574 = vld [vmem:[#allocation2 + $0xf1] sm:$0xff]
      %v575 = vld [vmem:[#allocation2 + $0xf9] sm:$0xff]
      %v576 = vld [vmem:[#allocation2 + $0x101] sm:$0xff]
      %v577 = vld [vmem:[#allocation2 + $0x109] sm:$0xff]
      %v578 = vld [vmem:[#allocation2 + $0x111] sm:$0xff]
      %v579 = vld [vmem:[#allocation2 + $0x119] sm:$0xff]
      %v580 = vpack.c.bf16 %v545, %v544
      %v581 = vpack.c.bf16 %v547, %v546
      %v582 = vpack.c.bf16 %v549, %v548
      %v583 = vpack.c.bf16 %v551, %v550
      %v584 = vpack.c.bf16 %v553, %v552
      %v585 = vpack.c.bf16 %v555, %v554
      %v586 = vpack.c.bf16 %v557, %v556
      %v587 = vpack.c.bf16 %v559, %v558
      %v588 = vpack.c.bf16 %v561, %v560
      %v589 = vpack.c.bf16 %v563, %v562
      %v590 = vpack.c.bf16 %v565, %v564
      %v591 = vpack.c.bf16 %v567, %v566
      %v592 = vpack.c.bf16 %v569, %v568
      %v593 = vpack.c.bf16 %v571, %v570
      %v594 = vpack.c.bf16 %v573, %v572
      %v595 = vpack.c.bf16 %v575, %v574
      %v596 = vpack.c.bf16 %v577, %v576
      %v597 = vpack.c.bf16 %v579, %v578
      %s598 = scalar_lea.vmem %s2, 64
      %v599 = vld [vmem:[%s598] sm:$0xf]
      %v600 = vld [vmem:[%s598 + $0x4] sm:$0xf]
      %v601 = vld [vmem:[%s598 + $0x8] sm:$0xf]
      %v602 = vld [vmem:[%s598 + $0xc] sm:$0xf]
      %v603 = vld [vmem:[%s598 + $0x10] sm:$0xf]
      %v604 = vld [vmem:[%s598 + $0x14] sm:$0xf]
      %v605 = vld [vmem:[%s598 + $0x18] sm:$0xf]
      %v606 = vld [vmem:[%s598 + $0x1c] sm:$0xf]
      %v607 = vld [vmem:[%s598 + $0x20] sm:$0xf]
      %v608 = vld [vmem:[%s598 + $0x24] sm:$0xf]
      %v609 = vld [vmem:[%s598 + $0x28] sm:$0xf]
      %v610 = vld [vmem:[%s598 + $0x2c] sm:$0xf]
      %v611 = vld [vmem:[%s598 + $0x30] sm:$0xf]
      %v612 = vld [vmem:[%s598 + $0x34] sm:$0xf]
      %v613 = vld [vmem:[%s598 + $0x38] sm:$0xf]
      %v614 = vld [vmem:[%s598 + $0x3c] sm:$0xf]
      %v631 = vunpack.c.l.b16 %v599
      %v632 = vunpack.c.l.b16 %v600
      %v633 = vunpack.c.l.b16 %v601
      %v634 = vunpack.c.l.b16 %v602
      %v635 = vunpack.c.l.b16 %v603
      %v636 = vunpack.c.l.b16 %v604
      %v637 = vunpack.c.l.b16 %v605
      %v638 = vunpack.c.l.b16 %v606
      %v639 = vunpack.c.l.b16 %v607
      %v640 = vunpack.c.l.b16 %v608
      %v641 = vunpack.c.l.b16 %v609
      %v642 = vunpack.c.l.b16 %v610
      %v643 = vunpack.c.l.b16 %v611
      %v644 = vunpack.c.l.b16 %v612
      %v645 = vunpack.c.l.b16 %v613
      %v646 = vunpack.c.l.b16 %v614
      %v647 = vpack.c.b16 %v632, %v631
      %v648 = vpack.c.b16 %v634, %v633
      %v649 = vpack.c.b16 %v636, %v635
      %v650 = vpack.c.b16 %v638, %v637
      %v651 = vpack.c.b16 %v640, %v639
      %v652 = vpack.c.b16 %v642, %v641
      %v653 = vpack.c.b16 %v644, %v643
      %v654 = vpack.c.b16 %v646, %v645
      %663 = vmatpush.bf16.msra.mxu0 %v654
      %664 = vmatpush.bf16.msra.mxu0 %v653
      %665 = vmatpush.bf16.msra.mxu0 %v652
      %666 = vmatpush.bf16.msra.mxu0 %v651
      %667 = vmatpush.bf16.msra.mxu0 %v650
      %668 = vmatpush.bf16.msra.mxu0 %v649
      %669 = vmatpush.bf16.msra.mxu0 %v648
      %670 = vmatpush.bf16.msra.mxu0 %v647
      %671 = vmatmul.bf16.gmra.mxu0 %v580
      %v672 = vpop.f32.mrf.mxu0
      %v673 = vadd.f32 0.0, %v672
      %v674 = vpop.f32.mrf.mxu0
      %v675 = vadd.f32 0.0, %v674
      %676 = vmatmul.bf16.gmra.mxu0 %v581
      %v677 = vpop.f32.mrf.mxu0
      %v678 = vadd.f32 0.0, %v677
      %v679 = vpop.f32.mrf.mxu0
      %v680 = vadd.f32 0.0, %v679
      %681 = vmatmul.bf16.gmra.mxu0 %v582
      %v682 = vpop.f32.mrf.mxu0
      %v683 = vadd.f32 0.0, %v682
      %v684 = vpop.f32.mrf.mxu0
      %v685 = vadd.f32 0.0, %v684
      %686 = vmatmul.bf16.gmra.mxu0 %v583
      %v687 = vpop.f32.mrf.mxu0
      %v688 = vadd.f32 0.0, %v687
      %v689 = vpop.f32.mrf.mxu0
      %v690 = vadd.f32 0.0, %v689
      %691 = vmatmul.bf16.gmra.mxu0 %v584
      %v692 = vpop.f32.mrf.mxu0
      %v693 = vadd.f32 0.0, %v692
      %v694 = vpop.f32.mrf.mxu0
      %v695 = vadd.f32 0.0, %v694
      %696 = vmatmul.bf16.gmra.mxu0 %v585
      %v697 = vpop.f32.mrf.mxu0
      %v698 = vadd.f32 0.0, %v697
      %v699 = vpop.f32.mrf.mxu0
      %v700 = vadd.f32 0.0, %v699
      %701 = vmatmul.bf16.gmra.mxu0 %v586
      %v702 = vpop.f32.mrf.mxu0
      %v703 = vadd.f32 0.0, %v702
      %v704 = vpop.f32.mrf.mxu0
      %v705 = vadd.f32 0.0, %v704
      %706 = vmatmul.bf16.gmra.mxu0 %v587
      %v707 = vpop.f32.mrf.mxu0
      %v708 = vadd.f32 0.0, %v707
      %v709 = vpop.f32.mrf.mxu0
      %v710 = vadd.f32 0.0, %v709
      %711 = vmatmul.bf16.gmra.mxu0 %v588
      %v712 = vpop.f32.mrf.mxu0
      %v713 = vadd.f32 0.0, %v712
      %v714 = vpop.f32.mrf.mxu0
      %v715 = vadd.f32 0.0, %v714
      %716 = vmatmul.bf16.gmra.mxu0 %v589
      %v717 = vpop.f32.mrf.mxu0
      %v718 = vadd.f32 0.0, %v717
      %v719 = vpop.f32.mrf.mxu0
      %v720 = vadd.f32 0.0, %v719
      %721 = vmatmul.bf16.gmra.mxu0 %v590
      %v722 = vpop.f32.mrf.mxu0
      %v723 = vadd.f32 0.0, %v722
      %v724 = vpop.f32.mrf.mxu0
      %v725 = vadd.f32 0.0, %v724
      %726 = vmatmul.bf16.gmra.mxu0 %v591
      %v727 = vpop.f32.mrf.mxu0
      %v728 = vadd.f32 0.0, %v727
      %v729 = vpop.f32.mrf.mxu0
      %v730 = vadd.f32 0.0, %v729
      %731 = vmatmul.bf16.gmra.mxu0 %v592
      %v732 = vpop.f32.mrf.mxu0
      %v733 = vadd.f32 0.0, %v732
      %v734 = vpop.f32.mrf.mxu0
      %v735 = vadd.f32 0.0, %v734
      %736 = vmatmul.bf16.gmra.mxu0 %v593
      %v737 = vpop.f32.mrf.mxu0
      %v738 = vadd.f32 0.0, %v737
      %v739 = vpop.f32.mrf.mxu0
      %v740 = vadd.f32 0.0, %v739
      %741 = vmatmul.bf16.gmra.mxu0 %v594
      %v742 = vpop.f32.mrf.mxu0
      %v743 = vadd.f32 0.0, %v742
      %v744 = vpop.f32.mrf.mxu0
      %v745 = vadd.f32 0.0, %v744
      %746 = vmatmul.bf16.gmra.mxu0 %v595
      %v747 = vpop.f32.mrf.mxu0
      %v748 = vadd.f32 0.0, %v747
      %v749 = vpop.f32.mrf.mxu0
      %v750 = vadd.f32 0.0, %v749
      %751 = vmatmul.bf16.gmra.mxu0 %v596
      %v752 = vpop.f32.mrf.mxu0
      %v753 = vadd.f32 0.0, %v752
      %v754 = vpop.f32.mrf.mxu0
      %v755 = vadd.f32 0.0, %v754
      %756 = vmatmul.bf16.gmra.mxu0 %v597
      %v757 = vpop.f32.mrf.mxu0
      %v758 = vadd.f32 0.0, %v757
      %v759 = vpop.f32.mrf.mxu0
      %v760 = vadd.f32 0.0, %v759
      %761 = vdwg.mxu0
      %v778 = vunpack.c.l.b16 %v528
      %v779 = vunpack.c.l.b16 %v529
      %v780 = vunpack.c.l.b16 %v530
      %v781 = vunpack.c.l.b16 %v531
      %v782 = vunpack.c.l.b16 %v532
      %v783 = vunpack.c.l.b16 %v533
      %v784 = vunpack.c.l.b16 %v534
      %v785 = vunpack.c.l.b16 %v535
      %v786 = vunpack.c.l.b16 %v536
      %v787 = vunpack.c.l.b16 %v537
      %v788 = vunpack.c.l.b16 %v538
      %v789 = vunpack.c.l.b16 %v539
      %v790 = vunpack.c.l.b16 %v540
      %v791 = vunpack.c.l.b16 %v541
      %v792 = vunpack.c.l.b16 %v542
      %v793 = vunpack.c.l.b16 %v543
      %v794 = vpack.c.b16 %v779, %v778
      %v795 = vpack.c.b16 %v781, %v780
      %v796 = vpack.c.b16 %v783, %v782
      %v797 = vpack.c.b16 %v785, %v784
      %v798 = vpack.c.b16 %v787, %v786
      %v799 = vpack.c.b16 %v789, %v788
      %v800 = vpack.c.b16 %v791, %v790
      %v801 = vpack.c.b16 %v793, %v792
      %810 = vmatpush.bf16.msra.mxu0 %v801
      %811 = vmatpush.bf16.msra.mxu0 %v800
      %812 = vmatpush.bf16.msra.mxu0 %v799
      %813 = vmatpush.bf16.msra.mxu0 %v798
      %814 = vmatpush.bf16.msra.mxu0 %v797
      %815 = vmatpush.bf16.msra.mxu0 %v796
      %816 = vmatpush.bf16.msra.mxu0 %v795
      %817 = vmatpush.bf16.msra.mxu0 %v794
      %818 = vmatmul.bf16.gmra.mxu0 %v510
      %v819 = vpop.f32.mrf.mxu0
      %v820 = vadd.f32 %v673, %v819
      %v821 = vpop.f32.mrf.mxu0
      %v822 = vadd.f32 %v675, %v821
      %823 = vmatmul.bf16.gmra.mxu0 %v511
      %v824 = vpop.f32.mrf.mxu0
      %v825 = vadd.f32 %v678, %v824
      %v826 = vpop.f32.mrf.mxu0
      %v827 = vadd.f32 %v680, %v826
      %828 = vmatmul.bf16.gmra.mxu0 %v512
      %v829 = vpop.f32.mrf.mxu0
      %v830 = vadd.f32 %v683, %v829
      %v831 = vpop.f32.mrf.mxu0
      %v832 = vadd.f32 %v685, %v831
      %833 = vmatmul.bf16.gmra.mxu0 %v513
      %v834 = vpop.f32.mrf.mxu0
      %v835 = vadd.f32 %v688, %v834
      %v836 = vpop.f32.mrf.mxu0
      %v837 = vadd.f32 %v690, %v836
      %838 = vmatmul.bf16.gmra.mxu0 %v514
      %v839 = vpop.f32.mrf.mxu0
      %v840 = vadd.f32 %v693, %v839
      %v841 = vpop.f32.mrf.mxu0
      %v842 = vadd.f32 %v695, %v841
      %843 = vmatmul.bf16.gmra.mxu0 %v515
      %v844 = vpop.f32.mrf.mxu0
      %v845 = vadd.f32 %v698, %v844
      %v846 = vpop.f32.mrf.mxu0
      %v847 = vadd.f32 %v700, %v846
      %848 = vmatmul.bf16.gmra.mxu0 %v516
      %v849 = vpop.f32.mrf.mxu0
      %v850 = vadd.f32 %v703, %v849
      %v851 = vpop.f32.mrf.mxu0
      %v852 = vadd.f32 %v705, %v851
      %853 = vmatmul.bf16.gmra.mxu0 %v517
      %v854 = vpop.f32.mrf.mxu0
      %v855 = vadd.f32 %v708, %v854
      %v856 = vpop.f32.mrf.mxu0
      %v857 = vadd.f32 %v710, %v856
      %858 = vmatmul.bf16.gmra.mxu0 %v518
      %v859 = vpop.f32.mrf.mxu0
      %v860 = vadd.f32 %v713, %v859
      %v861 = vpop.f32.mrf.mxu0
      %v862 = vadd.f32 %v715, %v861
      %863 = vmatmul.bf16.gmra.mxu0 %v519
      %v864 = vpop.f32.mrf.mxu0
      %v865 = vadd.f32 %v718, %v864
      %v866 = vpop.f32.mrf.mxu0
      %v867 = vadd.f32 %v720, %v866
      %868 = vmatmul.bf16.gmra.mxu0 %v520
      %v869 = vpop.f32.mrf.mxu0
      %v870 = vadd.f32 %v723, %v869
      %v871 = vpop.f32.mrf.mxu0
      %v872 = vadd.f32 %v725, %v871
      %873 = vmatmul.bf16.gmra.mxu0 %v521
      %v874 = vpop.f32.mrf.mxu0
      %v875 = vadd.f32 %v728, %v874
      %v876 = vpop.f32.mrf.mxu0
      %v877 = vadd.f32 %v730, %v876
      %878 = vmatmul.bf16.gmra.mxu0 %v522
      %v879 = vpop.f32.mrf.mxu0
      %v880 = vadd.f32 %v733, %v879
      %v881 = vpop.f32.mrf.mxu0
      %v882 = vadd.f32 %v735, %v881
      %883 = vmatmul.bf16.gmra.mxu0 %v523
      %v884 = vpop.f32.mrf.mxu0
      %v885 = vadd.f32 %v738, %v884
      %v886 = vpop.f32.mrf.mxu0
      %v887 = vadd.f32 %v740, %v886
      %888 = vmatmul.bf16.gmra.mxu0 %v524
      %v889 = vpop.f32.mrf.mxu0
      %v890 = vadd.f32 %v743, %v889
      %v891 = vpop.f32.mrf.mxu0
      %v892 = vadd.f32 %v745, %v891
      %893 = vmatmul.bf16.gmra.mxu0 %v525
      %v894 = vpop.f32.mrf.mxu0
      %v895 = vadd.f32 %v748, %v894
      %v896 = vpop.f32.mrf.mxu0
      %v897 = vadd.f32 %v750, %v896
      %898 = vmatmul.bf16.gmra.mxu0 %v526
      %v899 = vpop.f32.mrf.mxu0
      %v900 = vadd.f32 %v753, %v899
      %v901 = vpop.f32.mrf.mxu0
      %v902 = vadd.f32 %v755, %v901
      %903 = vmatmul.bf16.gmra.mxu0 %v527
      %v904 = vpop.f32.mrf.mxu0
      %v905 = vadd.f32 %v758, %v904
      %v906 = vpop.f32.mrf.mxu0
      %v907 = vadd.f32 %v760, %v906
      %908 = vdwg.mxu0
      %v909 = vld [vmem:[#allocation2 + $0x2] sm:$0xff]
      %v910 = vld [vmem:[#allocation2 + $0xa] sm:$0xff]
      %v911 = vld [vmem:[#allocation2 + $0x12] sm:$0xff]
      %v912 = vld [vmem:[#allocation2 + $0x1a] sm:$0xff]
      %v913 = vld [vmem:[#allocation2 + $0x22] sm:$0xff]
      %v914 = vld [vmem:[#allocation2 + $0x2a] sm:$0xff]
      %v915 = vld [vmem:[#allocation2 + $0x32] sm:$0xff]
      %v916 = vld [vmem:[#allocation2 + $0x3a] sm:$0xff]
      %v917 = vld [vmem:[#allocation2 + $0x42] sm:$0xff]
      %v918 = vld [vmem:[#allocation2 + $0x4a] sm:$0xff]
      %v919 = vld [vmem:[#allocation2 + $0x52] sm:$0xff]
      %v920 = vld [vmem:[#allocation2 + $0x5a] sm:$0xff]
      %v921 = vld [vmem:[#allocation2 + $0x62] sm:$0xff]
      %v922 = vld [vmem:[#allocation2 + $0x6a] sm:$0xff]
      %v923 = vld [vmem:[#allocation2 + $0x72] sm:$0xff]
      %v924 = vld [vmem:[#allocation2 + $0x7a] sm:$0xff]
      %v925 = vld [vmem:[#allocation2 + $0x82] sm:$0xff]
      %v926 = vld [vmem:[#allocation2 + $0x8a] sm:$0xff]
      %v927 = vld [vmem:[#allocation2 + $0x92] sm:$0xff]
      %v928 = vld [vmem:[#allocation2 + $0x9a] sm:$0xff]
      %v929 = vld [vmem:[#allocation2 + $0xa2] sm:$0xff]
      %v930 = vld [vmem:[#allocation2 + $0xaa] sm:$0xff]
      %v931 = vld [vmem:[#allocation2 + $0xb2] sm:$0xff]
      %v932 = vld [vmem:[#allocation2 + $0xba] sm:$0xff]
      %v933 = vld [vmem:[#allocation2 + $0xc2] sm:$0xff]
      %v934 = vld [vmem:[#allocation2 + $0xca] sm:$0xff]
      %v935 = vld [vmem:[#allocation2 + $0xd2] sm:$0xff]
      %v936 = vld [vmem:[#allocation2 + $0xda] sm:$0xff]
      %v937 = vld [vmem:[#allocation2 + $0xe2] sm:$0xff]
      %v938 = vld [vmem:[#allocation2 + $0xea] sm:$0xff]
      %v939 = vld [vmem:[#allocation2 + $0xf2] sm:$0xff]
      %v940 = vld [vmem:[#allocation2 + $0xfa] sm:$0xff]
      %v941 = vld [vmem:[#allocation2 + $0x102] sm:$0xff]
      %v942 = vld [vmem:[#allocation2 + $0x10a] sm:$0xff]
      %v943 = vld [vmem:[#allocation2 + $0x112] sm:$0xff]
      %v944 = vld [vmem:[#allocation2 + $0x11a] sm:$0xff]
      %v945 = vpack.c.bf16 %v910, %v909
      %v946 = vpack.c.bf16 %v912, %v911
      %v947 = vpack.c.bf16 %v914, %v913
      %v948 = vpack.c.bf16 %v916, %v915
      %v949 = vpack.c.bf16 %v918, %v917
      %v950 = vpack.c.bf16 %v920, %v919
      %v951 = vpack.c.bf16 %v922, %v921
      %v952 = vpack.c.bf16 %v924, %v923
      %v953 = vpack.c.bf16 %v926, %v925
      %v954 = vpack.c.bf16 %v928, %v927
      %v955 = vpack.c.bf16 %v930, %v929
      %v956 = vpack.c.bf16 %v932, %v931
      %v957 = vpack.c.bf16 %v934, %v933
      %v958 = vpack.c.bf16 %v936, %v935
      %v959 = vpack.c.bf16 %v938, %v937
      %v960 = vpack.c.bf16 %v940, %v939
      %v961 = vpack.c.bf16 %v942, %v941
      %v962 = vpack.c.bf16 %v944, %v943
      %s963 = scalar_lea.vmem %s2, 128
      %v964 = vld [vmem:[%s963] sm:$0xf]
      %v965 = vld [vmem:[%s963 + $0x4] sm:$0xf]
      %v966 = vld [vmem:[%s963 + $0x8] sm:$0xf]
      %v967 = vld [vmem:[%s963 + $0xc] sm:$0xf]
      %v968 = vld [vmem:[%s963 + $0x10] sm:$0xf]
      %v969 = vld [vmem:[%s963 + $0x14] sm:$0xf]
      %v970 = vld [vmem:[%s963 + $0x18] sm:$0xf]
      %v971 = vld [vmem:[%s963 + $0x1c] sm:$0xf]
      %v972 = vld [vmem:[%s963 + $0x20] sm:$0xf]
      %v973 = vld [vmem:[%s963 + $0x24] sm:$0xf]
      %v974 = vld [vmem:[%s963 + $0x28] sm:$0xf]
      %v975 = vld [vmem:[%s963 + $0x2c] sm:$0xf]
      %v976 = vld [vmem:[%s963 + $0x30] sm:$0xf]
      %v977 = vld [vmem:[%s963 + $0x34] sm:$0xf]
      %v978 = vld [vmem:[%s963 + $0x38] sm:$0xf]
      %v979 = vld [vmem:[%s963 + $0x3c] sm:$0xf]
      %v996 = vunpack.c.l.b16 %v964
      %v997 = vunpack.c.l.b16 %v965
      %v998 = vunpack.c.l.b16 %v966
      %v999 = vunpack.c.l.b16 %v967
      %v1000 = vunpack.c.l.b16 %v968
      %v1001 = vunpack.c.l.b16 %v969
      %v1002 = vunpack.c.l.b16 %v970
      %v1003 = vunpack.c.l.b16 %v971
      %v1004 = vunpack.c.l.b16 %v972
      %v1005 = vunpack.c.l.b16 %v973
      %v1006 = vunpack.c.l.b16 %v974
      %v1007 = vunpack.c.l.b16 %v975
      %v1008 = vunpack.c.l.b16 %v976
      %v1009 = vunpack.c.l.b16 %v977
      %v1010 = vunpack.c.l.b16 %v978
      %v1011 = vunpack.c.l.b16 %v979
      %v1012 = vpack.c.b16 %v997, %v996
      %v1013 = vpack.c.b16 %v999, %v998
      %v1014 = vpack.c.b16 %v1001, %v1000
      %v1015 = vpack.c.b16 %v1003, %v1002
      %v1016 = vpack.c.b16 %v1005, %v1004
      %v1017 = vpack.c.b16 %v1007, %v1006
      %v1018 = vpack.c.b16 %v1009, %v1008
      %v1019 = vpack.c.b16 %v1011, %v1010
      %1028 = vmatpush.bf16.msra.mxu0 %v1019
      %1029 = vmatpush.bf16.msra.mxu0 %v1018
      %1030 = vmatpush.bf16.msra.mxu0 %v1017
      %1031 = vmatpush.bf16.msra.mxu0 %v1016
      %1032 = vmatpush.bf16.msra.mxu0 %v1015
      %1033 = vmatpush.bf16.msra.mxu0 %v1014
      %1034 = vmatpush.bf16.msra.mxu0 %v1013
      %1035 = vmatpush.bf16.msra.mxu0 %v1012
      %1036 = vmatmul.bf16.gmra.mxu0 %v945
      %v1037 = vpop.f32.mrf.mxu0
      %v1038 = vadd.f32 0.0, %v1037
      %v1039 = vpop.f32.mrf.mxu0
      %v1040 = vadd.f32 0.0, %v1039
      %1041 = vmatmul.bf16.gmra.mxu0 %v946
      %v1042 = vpop.f32.mrf.mxu0
      %v1043 = vadd.f32 0.0, %v1042
      %v1044 = vpop.f32.mrf.mxu0
      %v1045 = vadd.f32 0.0, %v1044
      %1046 = vmatmul.bf16.gmra.mxu0 %v947
      %v1047 = vpop.f32.mrf.mxu0
      %v1048 = vadd.f32 0.0, %v1047
      %v1049 = vpop.f32.mrf.mxu0
      %v1050 = vadd.f32 0.0, %v1049
      %1051 = vmatmul.bf16.gmra.mxu0 %v948
      %v1052 = vpop.f32.mrf.mxu0
      %v1053 = vadd.f32 0.0, %v1052
      %v1054 = vpop.f32.mrf.mxu0
      %v1055 = vadd.f32 0.0, %v1054
      %1056 = vmatmul.bf16.gmra.mxu0 %v949
      %v1057 = vpop.f32.mrf.mxu0
      %v1058 = vadd.f32 0.0, %v1057
      %v1059 = vpop.f32.mrf.mxu0
      %v1060 = vadd.f32 0.0, %v1059
      %1061 = vmatmul.bf16.gmra.mxu0 %v950
      %v1062 = vpop.f32.mrf.mxu0
      %v1063 = vadd.f32 0.0, %v1062
      %v1064 = vpop.f32.mrf.mxu0
      %v1065 = vadd.f32 0.0, %v1064
      %1066 = vmatmul.bf16.gmra.mxu0 %v951
      %v1067 = vpop.f32.mrf.mxu0
      %v1068 = vadd.f32 0.0, %v1067
      %v1069 = vpop.f32.mrf.mxu0
      %v1070 = vadd.f32 0.0, %v1069
      %1071 = vmatmul.bf16.gmra.mxu0 %v952
      %v1072 = vpop.f32.mrf.mxu0
      %v1073 = vadd.f32 0.0, %v1072
      %v1074 = vpop.f32.mrf.mxu0
      %v1075 = vadd.f32 0.0, %v1074
      %1076 = vmatmul.bf16.gmra.mxu0 %v953
      %v1077 = vpop.f32.mrf.mxu0
      %v1078 = vadd.f32 0.0, %v1077
      %v1079 = vpop.f32.mrf.mxu0
      %v1080 = vadd.f32 0.0, %v1079
      %1081 = vmatmul.bf16.gmra.mxu0 %v954
      %v1082 = vpop.f32.mrf.mxu0
      %v1083 = vadd.f32 0.0, %v1082
      %v1084 = vpop.f32.mrf.mxu0
      %v1085 = vadd.f32 0.0, %v1084
      %1086 = vmatmul.bf16.gmra.mxu0 %v955
      %v1087 = vpop.f32.mrf.mxu0
      %v1088 = vadd.f32 0.0, %v1087
      %v1089 = vpop.f32.mrf.mxu0
      %v1090 = vadd.f32 0.0, %v1089
      %1091 = vmatmul.bf16.gmra.mxu0 %v956
      %v1092 = vpop.f32.mrf.mxu0
      %v1093 = vadd.f32 0.0, %v1092
      %v1094 = vpop.f32.mrf.mxu0
      %v1095 = vadd.f32 0.0, %v1094
      %1096 = vmatmul.bf16.gmra.mxu0 %v957
      %v1097 = vpop.f32.mrf.mxu0
      %v1098 = vadd.f32 0.0, %v1097
      %v1099 = vpop.f32.mrf.mxu0
      %v1100 = vadd.f32 0.0, %v1099
      %1101 = vmatmul.bf16.gmra.mxu0 %v958
      %v1102 = vpop.f32.mrf.mxu0
      %v1103 = vadd.f32 0.0, %v1102
      %v1104 = vpop.f32.mrf.mxu0
      %v1105 = vadd.f32 0.0, %v1104
      %1106 = vmatmul.bf16.gmra.mxu0 %v959
      %v1107 = vpop.f32.mrf.mxu0
      %v1108 = vadd.f32 0.0, %v1107
      %v1109 = vpop.f32.mrf.mxu0
      %v1110 = vadd.f32 0.0, %v1109
      %1111 = vmatmul.bf16.gmra.mxu0 %v960
      %v1112 = vpop.f32.mrf.mxu0
      %v1113 = vadd.f32 0.0, %v1112
      %v1114 = vpop.f32.mrf.mxu0
      %v1115 = vadd.f32 0.0, %v1114
      %1116 = vmatmul.bf16.gmra.mxu0 %v961
      %v1117 = vpop.f32.mrf.mxu0
      %v1118 = vadd.f32 0.0, %v1117
      %v1119 = vpop.f32.mrf.mxu0
      %v1120 = vadd.f32 0.0, %v1119
      %1121 = vmatmul.bf16.gmra.mxu0 %v962
      %v1122 = vpop.f32.mrf.mxu0
      %v1123 = vadd.f32 0.0, %v1122
      %v1124 = vpop.f32.mrf.mxu0
      %v1125 = vadd.f32 0.0, %v1124
      %1126 = vdwg.mxu0
      %v1127 = vadd.f32 %v820, %v1038
      %v1128 = vadd.f32 %v822, %v1040
      %v1129 = vadd.f32 %v825, %v1043
      %v1130 = vadd.f32 %v827, %v1045
      %v1131 = vadd.f32 %v830, %v1048
      %v1132 = vadd.f32 %v832, %v1050
      %v1133 = vadd.f32 %v835, %v1053
      %v1134 = vadd.f32 %v837, %v1055
      %v1135 = vadd.f32 %v840, %v1058
      %v1136 = vadd.f32 %v842, %v1060
      %v1137 = vadd.f32 %v845, %v1063
      %v1138 = vadd.f32 %v847, %v1065
      %v1139 = vadd.f32 %v850, %v1068
      %v1140 = vadd.f32 %v852, %v1070
      %v1141 = vadd.f32 %v855, %v1073
      %v1142 = vadd.f32 %v857, %v1075
      %v1143 = vadd.f32 %v860, %v1078
      %v1144 = vadd.f32 %v862, %v1080
      %v1145 = vadd.f32 %v865, %v1083
      %v1146 = vadd.f32 %v867, %v1085
      %v1147 = vadd.f32 %v870, %v1088
      %v1148 = vadd.f32 %v872, %v1090
      %v1149 = vadd.f32 %v875, %v1093
      %v1150 = vadd.f32 %v877, %v1095
      %v1151 = vadd.f32 %v880, %v1098
      %v1152 = vadd.f32 %v882, %v1100
      %v1153 = vadd.f32 %v885, %v1103
      %v1154 = vadd.f32 %v887, %v1105
      %v1155 = vadd.f32 %v890, %v1108
      %v1156 = vadd.f32 %v892, %v1110
      %v1157 = vadd.f32 %v895, %v1113
      %v1158 = vadd.f32 %v897, %v1115
      %v1159 = vadd.f32 %v900, %v1118
      %v1160 = vadd.f32 %v902, %v1120
      %v1161 = vadd.f32 %v905, %v1123
      %v1162 = vadd.f32 %v907, %v1125
      %v1163 = vld [vmem:[#allocation2 + $0x12] sm:$0xff]
      %v1164 = vld [vmem:[#allocation2 + $0x1a] sm:$0xff]
      %v1165 = vld [vmem:[#allocation2 + $0x22] sm:$0xff]
      %v1166 = vld [vmem:[#allocation2 + $0x2a] sm:$0xff]
      %v1167 = vld [vmem:[#allocation2 + $0x32] sm:$0xff]
      %v1168 = vld [vmem:[#allocation2 + $0x3a] sm:$0xff]
      %v1169 = vld [vmem:[#allocation2 + $0x42] sm:$0xff]
      %v1170 = vld [vmem:[#allocation2 + $0x4a] sm:$0xff]
      %v1171 = vld [vmem:[#allocation2 + $0x52] sm:$0xff]
      %v1172 = vld [vmem:[#allocation2 + $0x5a] sm:$0xff]
      %v1173 = vld [vmem:[#allocation2 + $0x62] sm:$0xff]
      %v1174 = vld [vmem:[#allocation2 + $0x6a] sm:$0xff]
      %v1175 = vld [vmem:[#allocation2 + $0x72] sm:$0xff]
      %v1176 = vld [vmem:[#allocation2 + $0x7a] sm:$0xff]
      %v1177 = vld [vmem:[#allocation2 + $0x82] sm:$0xff]
      %v1178 = vld [vmem:[#allocation2 + $0x8a] sm:$0xff]
      %v1179 = vld [vmem:[#allocation2 + $0x92] sm:$0xff]
      %v1180 = vld [vmem:[#allocation2 + $0x9a] sm:$0xff]
      %v1181 = vld [vmem:[#allocation2 + $0xa2] sm:$0xff]
      %v1182 = vld [vmem:[#allocation2 + $0xaa] sm:$0xff]
      %v1183 = vld [vmem:[#allocation2 + $0xb2] sm:$0xff]
      %v1184 = vld [vmem:[#allocation2 + $0xba] sm:$0xff]
      %v1185 = vld [vmem:[#allocation2 + $0xc2] sm:$0xff]
      %v1186 = vld [vmem:[#allocation2 + $0xca] sm:$0xff]
      %v1187 = vld [vmem:[#allocation2 + $0xd2] sm:$0xff]
      %v1188 = vld [vmem:[#allocation2 + $0xda] sm:$0xff]
      %v1189 = vld [vmem:[#allocation2 + $0xe2] sm:$0xff]
      %v1190 = vld [vmem:[#allocation2 + $0xea] sm:$0xff]
      %v1191 = vld [vmem:[#allocation2 + $0xf2] sm:$0xff]
      %v1192 = vld [vmem:[#allocation2 + $0xfa] sm:$0xff]
      %v1193 = vld [vmem:[#allocation2 + $0x102] sm:$0xff]
      %v1194 = vld [vmem:[#allocation2 + $0x10a] sm:$0xff]
      %v1195 = vld [vmem:[#allocation2 + $0x112] sm:$0xff]
      %v1196 = vld [vmem:[#allocation2 + $0x11a] sm:$0xff]
      %v1197 = vld [vmem:[#allocation2 + $0x122] sm:$0xff]
      %v1198 = vld [vmem:[#allocation2 + $0x12a] sm:$0xff]
      %v1199 = vpack.c.bf16 %v1164, %v1163
      %v1200 = vpack.c.bf16 %v1166, %v1165
      %v1201 = vpack.c.bf16 %v1168, %v1167
      %v1202 = vpack.c.bf16 %v1170, %v1169
      %v1203 = vpack.c.bf16 %v1172, %v1171
      %v1204 = vpack.c.bf16 %v1174, %v1173
      %v1205 = vpack.c.bf16 %v1176, %v1175
      %v1206 = vpack.c.bf16 %v1178, %v1177
      %v1207 = vpack.c.bf16 %v1180, %v1179
      %v1208 = vpack.c.bf16 %v1182, %v1181
      %v1209 = vpack.c.bf16 %v1184, %v1183
      %v1210 = vpack.c.bf16 %v1186, %v1185
      %v1211 = vpack.c.bf16 %v1188, %v1187
      %v1212 = vpack.c.bf16 %v1190, %v1189
      %v1213 = vpack.c.bf16 %v1192, %v1191
      %v1214 = vpack.c.bf16 %v1194, %v1193
      %v1215 = vpack.c.bf16 %v1196, %v1195
      %v1216 = vpack.c.bf16 %v1198, %v1197
      %s1217 = scalar_lea.vmem %s2, 192
      %v1218 = vld [vmem:[%s1217] sm:$0xf]
      %v1219 = vld [vmem:[%s1217 + $0x4] sm:$0xf]
      %v1220 = vld [vmem:[%s1217 + $0x8] sm:$0xf]
      %v1221 = vld [vmem:[%s1217 + $0xc] sm:$0xf]
      %v1222 = vld [vmem:[%s1217 + $0x10] sm:$0xf]
      %v1223 = vld [vmem:[%s1217 + $0x14] sm:$0xf]
      %v1224 = vld [vmem:[%s1217 + $0x18] sm:$0xf]
      %v1225 = vld [vmem:[%s1217 + $0x1c] sm:$0xf]
      %v1226 = vld [vmem:[%s1217 + $0x20] sm:$0xf]
      %v1227 = vld [vmem:[%s1217 + $0x24] sm:$0xf]
      %v1228 = vld [vmem:[%s1217 + $0x28] sm:$0xf]
      %v1229 = vld [vmem:[%s1217 + $0x2c] sm:$0xf]
      %v1230 = vld [vmem:[%s1217 + $0x30] sm:$0xf]
      %v1231 = vld [vmem:[%s1217 + $0x34] sm:$0xf]
      %v1232 = vld [vmem:[%s1217 + $0x38] sm:$0xf]
      %v1233 = vld [vmem:[%s1217 + $0x3c] sm:$0xf]
      %v1250 = vunpack.c.l.b16 %v1218
      %v1251 = vunpack.c.l.b16 %v1219
      %v1252 = vunpack.c.l.b16 %v1220
      %v1253 = vunpack.c.l.b16 %v1221
      %v1254 = vunpack.c.l.b16 %v1222
      %v1255 = vunpack.c.l.b16 %v1223
      %v1256 = vunpack.c.l.b16 %v1224
      %v1257 = vunpack.c.l.b16 %v1225
      %v1258 = vunpack.c.l.b16 %v1226
      %v1259 = vunpack.c.l.b16 %v1227
      %v1260 = vunpack.c.l.b16 %v1228
      %v1261 = vunpack.c.l.b16 %v1229
      %v1262 = vunpack.c.l.b16 %v1230
      %v1263 = vunpack.c.l.b16 %v1231
      %v1264 = vunpack.c.l.b16 %v1232
      %v1265 = vunpack.c.l.b16 %v1233
      %v1266 = vpack.c.b16 %v1251, %v1250
      %v1267 = vpack.c.b16 %v1253, %v1252
      %v1268 = vpack.c.b16 %v1255, %v1254
      %v1269 = vpack.c.b16 %v1257, %v1256
      %v1270 = vpack.c.b16 %v1259, %v1258
      %v1271 = vpack.c.b16 %v1261, %v1260
      %v1272 = vpack.c.b16 %v1263, %v1262
      %v1273 = vpack.c.b16 %v1265, %v1264
      %1282 = vmatpush.bf16.msra.mxu0 %v1273
      %1283 = vmatpush.bf16.msra.mxu0 %v1272
      %1284 = vmatpush.bf16.msra.mxu0 %v1271
      %1285 = vmatpush.bf16.msra.mxu0 %v1270
      %1286 = vmatpush.bf16.msra.mxu0 %v1269
      %1287 = vmatpush.bf16.msra.mxu0 %v1268
      %1288 = vmatpush.bf16.msra.mxu0 %v1267
      %1289 = vmatpush.bf16.msra.mxu0 %v1266
      %1290 = vmatmul.bf16.gmra.mxu0 %v1199
      %v1291 = vpop.f32.mrf.mxu0
      %v1292 = vadd.f32 0.0, %v1291
      %v1293 = vpop.f32.mrf.mxu0
      %v1294 = vadd.f32 0.0, %v1293
      %1295 = vmatmul.bf16.gmra.mxu0 %v1200
      %v1296 = vpop.f32.mrf.mxu0
      %v1297 = vadd.f32 0.0, %v1296
      %v1298 = vpop.f32.mrf.mxu0
      %v1299 = vadd.f32 0.0, %v1298
      %1300 = vmatmul.bf16.gmra.mxu0 %v1201
      %v1301 = vpop.f32.mrf.mxu0
      %v1302 = vadd.f32 0.0, %v1301
      %v1303 = vpop.f32.mrf.mxu0
      %v1304 = vadd.f32 0.0, %v1303
      %1305 = vmatmul.bf16.gmra.mxu0 %v1202
      %v1306 = vpop.f32.mrf.mxu0
      %v1307 = vadd.f32 0.0, %v1306
      %v1308 = vpop.f32.mrf.mxu0
      %v1309 = vadd.f32 0.0, %v1308
      %1310 = vmatmul.bf16.gmra.mxu0 %v1203
      %v1311 = vpop.f32.mrf.mxu0
      %v1312 = vadd.f32 0.0, %v1311
      %v1313 = vpop.f32.mrf.mxu0
      %v1314 = vadd.f32 0.0, %v1313
      %1315 = vmatmul.bf16.gmra.mxu0 %v1204
      %v1316 = vpop.f32.mrf.mxu0
      %v1317 = vadd.f32 0.0, %v1316
      %v1318 = vpop.f32.mrf.mxu0
      %v1319 = vadd.f32 0.0, %v1318
      %1320 = vmatmul.bf16.gmra.mxu0 %v1205
      %v1321 = vpop.f32.mrf.mxu0
      %v1322 = vadd.f32 0.0, %v1321
      %v1323 = vpop.f32.mrf.mxu0
      %v1324 = vadd.f32 0.0, %v1323
      %1325 = vmatmul.bf16.gmra.mxu0 %v1206
      %v1326 = vpop.f32.mrf.mxu0
      %v1327 = vadd.f32 0.0, %v1326
      %v1328 = vpop.f32.mrf.mxu0
      %v1329 = vadd.f32 0.0, %v1328
      %1330 = vmatmul.bf16.gmra.mxu0 %v1207
      %v1331 = vpop.f32.mrf.mxu0
      %v1332 = vadd.f32 0.0, %v1331
      %v1333 = vpop.f32.mrf.mxu0
      %v1334 = vadd.f32 0.0, %v1333
      %1335 = vmatmul.bf16.gmra.mxu0 %v1208
      %v1336 = vpop.f32.mrf.mxu0
      %v1337 = vadd.f32 0.0, %v1336
      %v1338 = vpop.f32.mrf.mxu0
      %v1339 = vadd.f32 0.0, %v1338
      %1340 = vmatmul.bf16.gmra.mxu0 %v1209
      %v1341 = vpop.f32.mrf.mxu0
      %v1342 = vadd.f32 0.0, %v1341
      %v1343 = vpop.f32.mrf.mxu0
      %v1344 = vadd.f32 0.0, %v1343
      %1345 = vmatmul.bf16.gmra.mxu0 %v1210
      %v1346 = vpop.f32.mrf.mxu0
      %v1347 = vadd.f32 0.0, %v1346
      %v1348 = vpop.f32.mrf.mxu0
      %v1349 = vadd.f32 0.0, %v1348
      %1350 = vmatmul.bf16.gmra.mxu0 %v1211
      %v1351 = vpop.f32.mrf.mxu0
      %v1352 = vadd.f32 0.0, %v1351
      %v1353 = vpop.f32.mrf.mxu0
      %v1354 = vadd.f32 0.0, %v1353
      %1355 = vmatmul.bf16.gmra.mxu0 %v1212
      %v1356 = vpop.f32.mrf.mxu0
      %v1357 = vadd.f32 0.0, %v1356
      %v1358 = vpop.f32.mrf.mxu0
      %v1359 = vadd.f32 0.0, %v1358
      %1360 = vmatmul.bf16.gmra.mxu0 %v1213
      %v1361 = vpop.f32.mrf.mxu0
      %v1362 = vadd.f32 0.0, %v1361
      %v1363 = vpop.f32.mrf.mxu0
      %v1364 = vadd.f32 0.0, %v1363
      %1365 = vmatmul.bf16.gmra.mxu0 %v1214
      %v1366 = vpop.f32.mrf.mxu0
      %v1367 = vadd.f32 0.0, %v1366
      %v1368 = vpop.f32.mrf.mxu0
      %v1369 = vadd.f32 0.0, %v1368
      %1370 = vmatmul.bf16.gmra.mxu0 %v1215
      %v1371 = vpop.f32.mrf.mxu0
      %v1372 = vadd.f32 0.0, %v1371
      %v1373 = vpop.f32.mrf.mxu0
      %v1374 = vadd.f32 0.0, %v1373
      %1375 = vmatmul.bf16.gmra.mxu0 %v1216
      %v1376 = vpop.f32.mrf.mxu0
      %v1377 = vadd.f32 0.0, %v1376
      %v1378 = vpop.f32.mrf.mxu0
      %v1379 = vadd.f32 0.0, %v1378
      %1380 = vdwg.mxu0
      %v1381 = vadd.f32 %v1127, %v1292
      %v1382 = vadd.f32 %v1128, %v1294
      %v1383 = vadd.f32 %v1129, %v1297
      %v1384 = vadd.f32 %v1130, %v1299
      %v1385 = vadd.f32 %v1131, %v1302
      %v1386 = vadd.f32 %v1132, %v1304
      %v1387 = vadd.f32 %v1133, %v1307
      %v1388 = vadd.f32 %v1134, %v1309
      %v1389 = vadd.f32 %v1135, %v1312
      %v1390 = vadd.f32 %v1136, %v1314
      %v1391 = vadd.f32 %v1137, %v1317
      %v1392 = vadd.f32 %v1138, %v1319
      %v1393 = vadd.f32 %v1139, %v1322
      %v1394 = vadd.f32 %v1140, %v1324
      %v1395 = vadd.f32 %v1141, %v1327
      %v1396 = vadd.f32 %v1142, %v1329
      %v1397 = vadd.f32 %v1143, %v1332
      %v1398 = vadd.f32 %v1144, %v1334
      %v1399 = vadd.f32 %v1145, %v1337
      %v1400 = vadd.f32 %v1146, %v1339
      %v1401 = vadd.f32 %v1147, %v1342
      %v1402 = vadd.f32 %v1148, %v1344
      %v1403 = vadd.f32 %v1149, %v1347
      %v1404 = vadd.f32 %v1150, %v1349
      %v1405 = vadd.f32 %v1151, %v1352
      %v1406 = vadd.f32 %v1152, %v1354
      %v1407 = vadd.f32 %v1153, %v1357
      %v1408 = vadd.f32 %v1154, %v1359
      %v1409 = vadd.f32 %v1155, %v1362
      %v1410 = vadd.f32 %v1156, %v1364
      %v1411 = vadd.f32 %v1157, %v1367
      %v1412 = vadd.f32 %v1158, %v1369
      %v1413 = vadd.f32 %v1159, %v1372
      %v1414 = vadd.f32 %v1160, %v1374
      %v1415 = vadd.f32 %v1161, %v1377
      %v1416 = vadd.f32 %v1162, %v1379
      %v1417 = vld [vmem:[#allocation2 + $0x13] sm:$0xff]
      %v1418 = vld [vmem:[#allocation2 + $0x1b] sm:$0xff]
      %v1419 = vld [vmem:[#allocation2 + $0x23] sm:$0xff]
      %v1420 = vld [vmem:[#allocation2 + $0x2b] sm:$0xff]
      %v1421 = vld [vmem:[#allocation2 + $0x33] sm:$0xff]
      %v1422 = vld [vmem:[#allocation2 + $0x3b] sm:$0xff]
      %v1423 = vld [vmem:[#allocation2 + $0x43] sm:$0xff]
      %v1424 = vld [vmem:[#allocation2 + $0x4b] sm:$0xff]
      %v1425 = vld [vmem:[#allocation2 + $0x53] sm:$0xff]
      %v1426 = vld [vmem:[#allocation2 + $0x5b] sm:$0xff]
      %v1427 = vld [vmem:[#allocation2 + $0x63] sm:$0xff]
      %v1428 = vld [vmem:[#allocation2 + $0x6b] sm:$0xff]
      %v1429 = vld [vmem:[#allocation2 + $0x73] sm:$0xff]
      %v1430 = vld [vmem:[#allocation2 + $0x7b] sm:$0xff]
      %v1431 = vld [vmem:[#allocation2 + $0x83] sm:$0xff]
      %v1432 = vld [vmem:[#allocation2 + $0x8b] sm:$0xff]
      %v1433 = vld [vmem:[#allocation2 + $0x93] sm:$0xff]
      %v1434 = vld [vmem:[#allocation2 + $0x9b] sm:$0xff]
      %v1435 = vld [vmem:[#allocation2 + $0xa3] sm:$0xff]
      %v1436 = vld [vmem:[#allocation2 + $0xab] sm:$0xff]
      %v1437 = vld [vmem:[#allocation2 + $0xb3] sm:$0xff]
      %v1438 = vld [vmem:[#allocation2 + $0xbb] sm:$0xff]
      %v1439 = vld [vmem:[#allocation2 + $0xc3] sm:$0xff]
      %v1440 = vld [vmem:[#allocation2 + $0xcb] sm:$0xff]
      %v1441 = vld [vmem:[#allocation2 + $0xd3] sm:$0xff]
      %v1442 = vld [vmem:[#allocation2 + $0xdb] sm:$0xff]
      %v1443 = vld [vmem:[#allocation2 + $0xe3] sm:$0xff]
      %v1444 = vld [vmem:[#allocation2 + $0xeb] sm:$0xff]
      %v1445 = vld [vmem:[#allocation2 + $0xf3] sm:$0xff]
      %v1446 = vld [vmem:[#allocation2 + $0xfb] sm:$0xff]
      %v1447 = vld [vmem:[#allocation2 + $0x103] sm:$0xff]
      %v1448 = vld [vmem:[#allocation2 + $0x10b] sm:$0xff]
      %v1449 = vld [vmem:[#allocation2 + $0x113] sm:$0xff]
      %v1450 = vld [vmem:[#allocation2 + $0x11b] sm:$0xff]
      %v1451 = vld [vmem:[#allocation2 + $0x123] sm:$0xff]
      %v1452 = vld [vmem:[#allocation2 + $0x12b] sm:$0xff]
      %v1453 = vpack.c.bf16 %v1418, %v1417
      %v1454 = vpack.c.bf16 %v1420, %v1419
      %v1455 = vpack.c.bf16 %v1422, %v1421
      %v1456 = vpack.c.bf16 %v1424, %v1423
      %v1457 = vpack.c.bf16 %v1426, %v1425
      %v1458 = vpack.c.bf16 %v1428, %v1427
      %v1459 = vpack.c.bf16 %v1430, %v1429
      %v1460 = vpack.c.bf16 %v1432, %v1431
      %v1461 = vpack.c.bf16 %v1434, %v1433
      %v1462 = vpack.c.bf16 %v1436, %v1435
      %v1463 = vpack.c.bf16 %v1438, %v1437
      %v1464 = vpack.c.bf16 %v1440, %v1439
      %v1465 = vpack.c.bf16 %v1442, %v1441
      %v1466 = vpack.c.bf16 %v1444, %v1443
      %v1467 = vpack.c.bf16 %v1446, %v1445
      %v1468 = vpack.c.bf16 %v1448, %v1447
      %v1469 = vpack.c.bf16 %v1450, %v1449
      %v1470 = vpack.c.bf16 %v1452, %v1451
      %s1471 = scalar_lea.vmem %s2, 256
      %v1472 = vld [vmem:[%s1471] sm:$0xf]
      %v1473 = vld [vmem:[%s1471 + $0x4] sm:$0xf]
      %v1474 = vld [vmem:[%s1471 + $0x8] sm:$0xf]
      %v1475 = vld [vmem:[%s1471 + $0xc] sm:$0xf]
      %v1476 = vld [vmem:[%s1471 + $0x10] sm:$0xf]
      %v1477 = vld [vmem:[%s1471 + $0x14] sm:$0xf]
      %v1478 = vld [vmem:[%s1471 + $0x18] sm:$0xf]
      %v1479 = vld [vmem:[%s1471 + $0x1c] sm:$0xf]
      %v1480 = vld [vmem:[%s1471 + $0x20] sm:$0xf]
      %v1481 = vld [vmem:[%s1471 + $0x24] sm:$0xf]
      %v1482 = vld [vmem:[%s1471 + $0x28] sm:$0xf]
      %v1483 = vld [vmem:[%s1471 + $0x2c] sm:$0xf]
      %v1484 = vld [vmem:[%s1471 + $0x30] sm:$0xf]
      %v1485 = vld [vmem:[%s1471 + $0x34] sm:$0xf]
      %v1486 = vld [vmem:[%s1471 + $0x38] sm:$0xf]
      %v1487 = vld [vmem:[%s1471 + $0x3c] sm:$0xf]
      %v1504 = vunpack.c.l.b16 %v1472
      %v1505 = vunpack.c.l.b16 %v1473
      %v1506 = vunpack.c.l.b16 %v1474
      %v1507 = vunpack.c.l.b16 %v1475
      %v1508 = vunpack.c.l.b16 %v1476
      %v1509 = vunpack.c.l.b16 %v1477
      %v1510 = vunpack.c.l.b16 %v1478
      %v1511 = vunpack.c.l.b16 %v1479
      %v1512 = vunpack.c.l.b16 %v1480
      %v1513 = vunpack.c.l.b16 %v1481
      %v1514 = vunpack.c.l.b16 %v1482
      %v1515 = vunpack.c.l.b16 %v1483
      %v1516 = vunpack.c.l.b16 %v1484
      %v1517 = vunpack.c.l.b16 %v1485
      %v1518 = vunpack.c.l.b16 %v1486
      %v1519 = vunpack.c.l.b16 %v1487
      %v1520 = vpack.c.b16 %v1505, %v1504
      %v1521 = vpack.c.b16 %v1507, %v1506
      %v1522 = vpack.c.b16 %v1509, %v1508
      %v1523 = vpack.c.b16 %v1511, %v1510
      %v1524 = vpack.c.b16 %v1513, %v1512
      %v1525 = vpack.c.b16 %v1515, %v1514
      %v1526 = vpack.c.b16 %v1517, %v1516
      %v1527 = vpack.c.b16 %v1519, %v1518
      %1536 = vmatpush.bf16.msra.mxu0 %v1527
      %1537 = vmatpush.bf16.msra.mxu0 %v1526
      %1538 = vmatpush.bf16.msra.mxu0 %v1525
      %1539 = vmatpush.bf16.msra.mxu0 %v1524
      %1540 = vmatpush.bf16.msra.mxu0 %v1523
      %1541 = vmatpush.bf16.msra.mxu0 %v1522
      %1542 = vmatpush.bf16.msra.mxu0 %v1521
      %1543 = vmatpush.bf16.msra.mxu0 %v1520
      %1544 = vmatmul.bf16.gmra.mxu0 %v1453
      %v1545 = vpop.f32.mrf.mxu0
      %v1546 = vadd.f32 0.0, %v1545
      %v1547 = vpop.f32.mrf.mxu0
      %v1548 = vadd.f32 0.0, %v1547
      %1549 = vmatmul.bf16.gmra.mxu0 %v1454
      %v1550 = vpop.f32.mrf.mxu0
      %v1551 = vadd.f32 0.0, %v1550
      %v1552 = vpop.f32.mrf.mxu0
      %v1553 = vadd.f32 0.0, %v1552
      %1554 = vmatmul.bf16.gmra.mxu0 %v1455
      %v1555 = vpop.f32.mrf.mxu0
      %v1556 = vadd.f32 0.0, %v1555
      %v1557 = vpop.f32.mrf.mxu0
      %v1558 = vadd.f32 0.0, %v1557
      %1559 = vmatmul.bf16.gmra.mxu0 %v1456
      %v1560 = vpop.f32.mrf.mxu0
      %v1561 = vadd.f32 0.0, %v1560
      %v1562 = vpop.f32.mrf.mxu0
      %v1563 = vadd.f32 0.0, %v1562
      %1564 = vmatmul.bf16.gmra.mxu0 %v1457
      %v1565 = vpop.f32.mrf.mxu0
      %v1566 = vadd.f32 0.0, %v1565
      %v1567 = vpop.f32.mrf.mxu0
      %v1568 = vadd.f32 0.0, %v1567
      %1569 = vmatmul.bf16.gmra.mxu0 %v1458
      %v1570 = vpop.f32.mrf.mxu0
      %v1571 = vadd.f32 0.0, %v1570
      %v1572 = vpop.f32.mrf.mxu0
      %v1573 = vadd.f32 0.0, %v1572
      %1574 = vmatmul.bf16.gmra.mxu0 %v1459
      %v1575 = vpop.f32.mrf.mxu0
      %v1576 = vadd.f32 0.0, %v1575
      %v1577 = vpop.f32.mrf.mxu0
      %v1578 = vadd.f32 0.0, %v1577
      %1579 = vmatmul.bf16.gmra.mxu0 %v1460
      %v1580 = vpop.f32.mrf.mxu0
      %v1581 = vadd.f32 0.0, %v1580
      %v1582 = vpop.f32.mrf.mxu0
      %v1583 = vadd.f32 0.0, %v1582
      %1584 = vmatmul.bf16.gmra.mxu0 %v1461
      %v1585 = vpop.f32.mrf.mxu0
      %v1586 = vadd.f32 0.0, %v1585
      %v1587 = vpop.f32.mrf.mxu0
      %v1588 = vadd.f32 0.0, %v1587
      %1589 = vmatmul.bf16.gmra.mxu0 %v1462
      %v1590 = vpop.f32.mrf.mxu0
      %v1591 = vadd.f32 0.0, %v1590
      %v1592 = vpop.f32.mrf.mxu0
      %v1593 = vadd.f32 0.0, %v1592
      %1594 = vmatmul.bf16.gmra.mxu0 %v1463
      %v1595 = vpop.f32.mrf.mxu0
      %v1596 = vadd.f32 0.0, %v1595
      %v1597 = vpop.f32.mrf.mxu0
      %v1598 = vadd.f32 0.0, %v1597
      %1599 = vmatmul.bf16.gmra.mxu0 %v1464
      %v1600 = vpop.f32.mrf.mxu0
      %v1601 = vadd.f32 0.0, %v1600
      %v1602 = vpop.f32.mrf.mxu0
      %v1603 = vadd.f32 0.0, %v1602
      %1604 = vmatmul.bf16.gmra.mxu0 %v1465
      %v1605 = vpop.f32.mrf.mxu0
      %v1606 = vadd.f32 0.0, %v1605
      %v1607 = vpop.f32.mrf.mxu0
      %v1608 = vadd.f32 0.0, %v1607
      %1609 = vmatmul.bf16.gmra.mxu0 %v1466
      %v1610 = vpop.f32.mrf.mxu0
      %v1611 = vadd.f32 0.0, %v1610
      %v1612 = vpop.f32.mrf.mxu0
      %v1613 = vadd.f32 0.0, %v1612
      %1614 = vmatmul.bf16.gmra.mxu0 %v1467
      %v1615 = vpop.f32.mrf.mxu0
      %v1616 = vadd.f32 0.0, %v1615
      %v1617 = vpop.f32.mrf.mxu0
      %v1618 = vadd.f32 0.0, %v1617
      %1619 = vmatmul.bf16.gmra.mxu0 %v1468
      %v1620 = vpop.f32.mrf.mxu0
      %v1621 = vadd.f32 0.0, %v1620
      %v1622 = vpop.f32.mrf.mxu0
      %v1623 = vadd.f32 0.0, %v1622
      %1624 = vmatmul.bf16.gmra.mxu0 %v1469
      %v1625 = vpop.f32.mrf.mxu0
      %v1626 = vadd.f32 0.0, %v1625
      %v1627 = vpop.f32.mrf.mxu0
      %v1628 = vadd.f32 0.0, %v1627
      %1629 = vmatmul.bf16.gmra.mxu0 %v1470
      %v1630 = vpop.f32.mrf.mxu0
      %v1631 = vadd.f32 0.0, %v1630
      %v1632 = vpop.f32.mrf.mxu0
      %v1633 = vadd.f32 0.0, %v1632
      %1634 = vdwg.mxu0
      %v1635 = vadd.f32 %v1381, %v1546
      %v1636 = vadd.f32 %v1382, %v1548
      %v1637 = vadd.f32 %v1383, %v1551
      %v1638 = vadd.f32 %v1384, %v1553
      %v1639 = vadd.f32 %v1385, %v1556
      %v1640 = vadd.f32 %v1386, %v1558
      %v1641 = vadd.f32 %v1387, %v1561
      %v1642 = vadd.f32 %v1388, %v1563
      %v1643 = vadd.f32 %v1389, %v1566
      %v1644 = vadd.f32 %v1390, %v1568
      %v1645 = vadd.f32 %v1391, %v1571
      %v1646 = vadd.f32 %v1392, %v1573
      %v1647 = vadd.f32 %v1393, %v1576
      %v1648 = vadd.f32 %v1394, %v1578
      %v1649 = vadd.f32 %v1395, %v1581
      %v1650 = vadd.f32 %v1396, %v1583
      %v1651 = vadd.f32 %v1397, %v1586
      %v1652 = vadd.f32 %v1398, %v1588
      %v1653 = vadd.f32 %v1399, %v1591
      %v1654 = vadd.f32 %v1400, %v1593
      %v1655 = vadd.f32 %v1401, %v1596
      %v1656 = vadd.f32 %v1402, %v1598
      %v1657 = vadd.f32 %v1403, %v1601
      %v1658 = vadd.f32 %v1404, %v1603
      %v1659 = vadd.f32 %v1405, %v1606
      %v1660 = vadd.f32 %v1406, %v1608
      %v1661 = vadd.f32 %v1407, %v1611
      %v1662 = vadd.f32 %v1408, %v1613
      %v1663 = vadd.f32 %v1409, %v1616
      %v1664 = vadd.f32 %v1410, %v1618
      %v1665 = vadd.f32 %v1411, %v1621
      %v1666 = vadd.f32 %v1412, %v1623
      %v1667 = vadd.f32 %v1413, %v1626
      %v1668 = vadd.f32 %v1414, %v1628
      %v1669 = vadd.f32 %v1415, %v1631
      %v1670 = vadd.f32 %v1416, %v1633
      %v1671 = vld [vmem:[#allocation2 + $0x14] sm:$0xff]
      %v1672 = vld [vmem:[#allocation2 + $0x1c] sm:$0xff]
      %v1673 = vld [vmem:[#allocation2 + $0x24] sm:$0xff]
      %v1674 = vld [vmem:[#allocation2 + $0x2c] sm:$0xff]
      %v1675 = vld [vmem:[#allocation2 + $0x34] sm:$0xff]
      %v1676 = vld [vmem:[#allocation2 + $0x3c] sm:$0xff]
      %v1677 = vld [vmem:[#allocation2 + $0x44] sm:$0xff]
      %v1678 = vld [vmem:[#allocation2 + $0x4c] sm:$0xff]
      %v1679 = vld [vmem:[#allocation2 + $0x54] sm:$0xff]
      %v1680 = vld [vmem:[#allocation2 + $0x5c] sm:$0xff]
      %v1681 = vld [vmem:[#allocation2 + $0x64] sm:$0xff]
      %v1682 = vld [vmem:[#allocation2 + $0x6c] sm:$0xff]
      %v1683 = vld [vmem:[#allocation2 + $0x74] sm:$0xff]
      %v1684 = vld [vmem:[#allocation2 + $0x7c] sm:$0xff]
      %v1685 = vld [vmem:[#allocation2 + $0x84] sm:$0xff]
      %v1686 = vld [vmem:[#allocation2 + $0x8c] sm:$0xff]
      %v1687 = vld [vmem:[#allocation2 + $0x94] sm:$0xff]
      %v1688 = vld [vmem:[#allocation2 + $0x9c] sm:$0xff]
      %v1689 = vld [vmem:[#allocation2 + $0xa4] sm:$0xff]
      %v1690 = vld [vmem:[#allocation2 + $0xac] sm:$0xff]
      %v1691 = vld [vmem:[#allocation2 + $0xb4] sm:$0xff]
      %v1692 = vld [vmem:[#allocation2 + $0xbc] sm:$0xff]
      %v1693 = vld [vmem:[#allocation2 + $0xc4] sm:$0xff]
      %v1694 = vld [vmem:[#allocation2 + $0xcc] sm:$0xff]
      %v1695 = vld [vmem:[#allocation2 + $0xd4] sm:$0xff]
      %v1696 = vld [vmem:[#allocation2 + $0xdc] sm:$0xff]
      %v1697 = vld [vmem:[#allocation2 + $0xe4] sm:$0xff]
      %v1698 = vld [vmem:[#allocation2 + $0xec] sm:$0xff]
      %v1699 = vld [vmem:[#allocation2 + $0xf4] sm:$0xff]
      %v1700 = vld [vmem:[#allocation2 + $0xfc] sm:$0xff]
      %v1701 = vld [vmem:[#allocation2 + $0x104] sm:$0xff]
      %v1702 = vld [vmem:[#allocation2 + $0x10c] sm:$0xff]
      %v1703 = vld [vmem:[#allocation2 + $0x114] sm:$0xff]
      %v1704 = vld [vmem:[#allocation2 + $0x11c] sm:$0xff]
      %v1705 = vld [vmem:[#allocation2 + $0x124] sm:$0xff]
      %v1706 = vld [vmem:[#allocation2 + $0x12c] sm:$0xff]
      %v1707 = vpack.c.bf16 %v1672, %v1671
      %v1708 = vpack.c.bf16 %v1674, %v1673
      %v1709 = vpack.c.bf16 %v1676, %v1675
      %v1710 = vpack.c.bf16 %v1678, %v1677
      %v1711 = vpack.c.bf16 %v1680, %v1679
      %v1712 = vpack.c.bf16 %v1682, %v1681
      %v1713 = vpack.c.bf16 %v1684, %v1683
      %v1714 = vpack.c.bf16 %v1686, %v1685
      %v1715 = vpack.c.bf16 %v1688, %v1687
      %v1716 = vpack.c.bf16 %v1690, %v1689
      %v1717 = vpack.c.bf16 %v1692, %v1691
      %v1718 = vpack.c.bf16 %v1694, %v1693
      %v1719 = vpack.c.bf16 %v1696, %v1695
      %v1720 = vpack.c.bf16 %v1698, %v1697
      %v1721 = vpack.c.bf16 %v1700, %v1699
      %v1722 = vpack.c.bf16 %v1702, %v1701
      %v1723 = vpack.c.bf16 %v1704, %v1703
      %v1724 = vpack.c.bf16 %v1706, %v1705
      %s1725 = scalar_lea.vmem %s2, 320
      %v1726 = vld [vmem:[%s1725] sm:$0xf]
      %v1727 = vld [vmem:[%s1725 + $0x4] sm:$0xf]
      %v1728 = vld [vmem:[%s1725 + $0x8] sm:$0xf]
      %v1729 = vld [vmem:[%s1725 + $0xc] sm:$0xf]
      %v1730 = vld [vmem:[%s1725 + $0x10] sm:$0xf]
      %v1731 = vld [vmem:[%s1725 + $0x14] sm:$0xf]
      %v1732 = vld [vmem:[%s1725 + $0x18] sm:$0xf]
      %v1733 = vld [vmem:[%s1725 + $0x1c] sm:$0xf]
      %v1734 = vld [vmem:[%s1725 + $0x20] sm:$0xf]
      %v1735 = vld [vmem:[%s1725 + $0x24] sm:$0xf]
      %v1736 = vld [vmem:[%s1725 + $0x28] sm:$0xf]
      %v1737 = vld [vmem:[%s1725 + $0x2c] sm:$0xf]
      %v1738 = vld [vmem:[%s1725 + $0x30] sm:$0xf]
      %v1739 = vld [vmem:[%s1725 + $0x34] sm:$0xf]
      %v1740 = vld [vmem:[%s1725 + $0x38] sm:$0xf]
      %v1741 = vld [vmem:[%s1725 + $0x3c] sm:$0xf]
      %v1758 = vunpack.c.l.b16 %v1726
      %v1759 = vunpack.c.l.b16 %v1727
      %v1760 = vunpack.c.l.b16 %v1728
      %v1761 = vunpack.c.l.b16 %v1729
      %v1762 = vunpack.c.l.b16 %v1730
      %v1763 = vunpack.c.l.b16 %v1731
      %v1764 = vunpack.c.l.b16 %v1732
      %v1765 = vunpack.c.l.b16 %v1733
      %v1766 = vunpack.c.l.b16 %v1734
      %v1767 = vunpack.c.l.b16 %v1735
      %v1768 = vunpack.c.l.b16 %v1736
      %v1769 = vunpack.c.l.b16 %v1737
      %v1770 = vunpack.c.l.b16 %v1738
      %v1771 = vunpack.c.l.b16 %v1739
      %v1772 = vunpack.c.l.b16 %v1740
      %v1773 = vunpack.c.l.b16 %v1741
      %v1774 = vpack.c.b16 %v1759, %v1758
      %v1775 = vpack.c.b16 %v1761, %v1760
      %v1776 = vpack.c.b16 %v1763, %v1762
      %v1777 = vpack.c.b16 %v1765, %v1764
      %v1778 = vpack.c.b16 %v1767, %v1766
      %v1779 = vpack.c.b16 %v1769, %v1768
      %v1780 = vpack.c.b16 %v1771, %v1770
      %v1781 = vpack.c.b16 %v1773, %v1772
      %1790 = vmatpush.bf16.msra.mxu0 %v1781
      %1791 = vmatpush.bf16.msra.mxu0 %v1780
      %1792 = vmatpush.bf16.msra.mxu0 %v1779
      %1793 = vmatpush.bf16.msra.mxu0 %v1778
      %1794 = vmatpush.bf16.msra.mxu0 %v1777
      %1795 = vmatpush.bf16.msra.mxu0 %v1776
      %1796 = vmatpush.bf16.msra.mxu0 %v1775
      %1797 = vmatpush.bf16.msra.mxu0 %v1774
      %1798 = vmatmul.bf16.gmra.mxu0 %v1707
      %v1799 = vpop.f32.mrf.mxu0
      %v1800 = vadd.f32 0.0, %v1799
      %v1801 = vpop.f32.mrf.mxu0
      %v1802 = vadd.f32 0.0, %v1801
      %1803 = vmatmul.bf16.gmra.mxu0 %v1708
      %v1804 = vpop.f32.mrf.mxu0
      %v1805 = vadd.f32 0.0, %v1804
      %v1806 = vpop.f32.mrf.mxu0
      %v1807 = vadd.f32 0.0, %v1806
      %1808 = vmatmul.bf16.gmra.mxu0 %v1709
      %v1809 = vpop.f32.mrf.mxu0
      %v1810 = vadd.f32 0.0, %v1809
      %v1811 = vpop.f32.mrf.mxu0
      %v1812 = vadd.f32 0.0, %v1811
      %1813 = vmatmul.bf16.gmra.mxu0 %v1710
      %v1814 = vpop.f32.mrf.mxu0
      %v1815 = vadd.f32 0.0, %v1814
      %v1816 = vpop.f32.mrf.mxu0
      %v1817 = vadd.f32 0.0, %v1816
      %1818 = vmatmul.bf16.gmra.mxu0 %v1711
      %v1819 = vpop.f32.mrf.mxu0
      %v1820 = vadd.f32 0.0, %v1819
      %v1821 = vpop.f32.mrf.mxu0
      %v1822 = vadd.f32 0.0, %v1821
      %1823 = vmatmul.bf16.gmra.mxu0 %v1712
      %v1824 = vpop.f32.mrf.mxu0
      %v1825 = vadd.f32 0.0, %v1824
      %v1826 = vpop.f32.mrf.mxu0
      %v1827 = vadd.f32 0.0, %v1826
      %1828 = vmatmul.bf16.gmra.mxu0 %v1713
      %v1829 = vpop.f32.mrf.mxu0
      %v1830 = vadd.f32 0.0, %v1829
      %v1831 = vpop.f32.mrf.mxu0
      %v1832 = vadd.f32 0.0, %v1831
      %1833 = vmatmul.bf16.gmra.mxu0 %v1714
      %v1834 = vpop.f32.mrf.mxu0
      %v1835 = vadd.f32 0.0, %v1834
      %v1836 = vpop.f32.mrf.mxu0
      %v1837 = vadd.f32 0.0, %v1836
      %1838 = vmatmul.bf16.gmra.mxu0 %v1715
      %v1839 = vpop.f32.mrf.mxu0
      %v1840 = vadd.f32 0.0, %v1839
      %v1841 = vpop.f32.mrf.mxu0
      %v1842 = vadd.f32 0.0, %v1841
      %1843 = vmatmul.bf16.gmra.mxu0 %v1716
      %v1844 = vpop.f32.mrf.mxu0
      %v1845 = vadd.f32 0.0, %v1844
      %v1846 = vpop.f32.mrf.mxu0
      %v1847 = vadd.f32 0.0, %v1846
      %1848 = vmatmul.bf16.gmra.mxu0 %v1717
      %v1849 = vpop.f32.mrf.mxu0
      %v1850 = vadd.f32 0.0, %v1849
      %v1851 = vpop.f32.mrf.mxu0
      %v1852 = vadd.f32 0.0, %v1851
      %1853 = vmatmul.bf16.gmra.mxu0 %v1718
      %v1854 = vpop.f32.mrf.mxu0
      %v1855 = vadd.f32 0.0, %v1854
      %v1856 = vpop.f32.mrf.mxu0
      %v1857 = vadd.f32 0.0, %v1856
      %1858 = vmatmul.bf16.gmra.mxu0 %v1719
      %v1859 = vpop.f32.mrf.mxu0
      %v1860 = vadd.f32 0.0, %v1859
      %v1861 = vpop.f32.mrf.mxu0
      %v1862 = vadd.f32 0.0, %v1861
      %1863 = vmatmul.bf16.gmra.mxu0 %v1720
      %v1864 = vpop.f32.mrf.mxu0
      %v1865 = vadd.f32 0.0, %v1864
      %v1866 = vpop.f32.mrf.mxu0
      %v1867 = vadd.f32 0.0, %v1866
      %1868 = vmatmul.bf16.gmra.mxu0 %v1721
      %v1869 = vpop.f32.mrf.mxu0
      %v1870 = vadd.f32 0.0, %v1869
      %v1871 = vpop.f32.mrf.mxu0
      %v1872 = vadd.f32 0.0, %v1871
      %1873 = vmatmul.bf16.gmra.mxu0 %v1722
      %v1874 = vpop.f32.mrf.mxu0
      %v1875 = vadd.f32 0.0, %v1874
      %v1876 = vpop.f32.mrf.mxu0
      %v1877 = vadd.f32 0.0, %v1876
      %1878 = vmatmul.bf16.gmra.mxu0 %v1723
      %v1879 = vpop.f32.mrf.mxu0
      %v1880 = vadd.f32 0.0, %v1879
      %v1881 = vpop.f32.mrf.mxu0
      %v1882 = vadd.f32 0.0, %v1881
      %1883 = vmatmul.bf16.gmra.mxu0 %v1724
      %v1884 = vpop.f32.mrf.mxu0
      %v1885 = vadd.f32 0.0, %v1884
      %v1886 = vpop.f32.mrf.mxu0
      %v1887 = vadd.f32 0.0, %v1886
      %1888 = vdwg.mxu0
      %v1889 = vadd.f32 %v1635, %v1800
      %v1890 = vadd.f32 %v1636, %v1802
      %v1891 = vadd.f32 %v1637, %v1805
      %v1892 = vadd.f32 %v1638, %v1807
      %v1893 = vadd.f32 %v1639, %v1810
      %v1894 = vadd.f32 %v1640, %v1812
      %v1895 = vadd.f32 %v1641, %v1815
      %v1896 = vadd.f32 %v1642, %v1817
      %v1897 = vadd.f32 %v1643, %v1820
      %v1898 = vadd.f32 %v1644, %v1822
      %v1899 = vadd.f32 %v1645, %v1825
      %v1900 = vadd.f32 %v1646, %v1827
      %v1901 = vadd.f32 %v1647, %v1830
      %v1902 = vadd.f32 %v1648, %v1832
      %v1903 = vadd.f32 %v1649, %v1835
      %v1904 = vadd.f32 %v1650, %v1837
      %v1905 = vadd.f32 %v1651, %v1840
      %v1906 = vadd.f32 %v1652, %v1842
      %v1907 = vadd.f32 %v1653, %v1845
      %v1908 = vadd.f32 %v1654, %v1847
      %v1909 = vadd.f32 %v1655, %v1850
      %v1910 = vadd.f32 %v1656, %v1852
      %v1911 = vadd.f32 %v1657, %v1855
      %v1912 = vadd.f32 %v1658, %v1857
      %v1913 = vadd.f32 %v1659, %v1860
      %v1914 = vadd.f32 %v1660, %v1862
      %v1915 = vadd.f32 %v1661, %v1865
      %v1916 = vadd.f32 %v1662, %v1867
      %v1917 = vadd.f32 %v1663, %v1870
      %v1918 = vadd.f32 %v1664, %v1872
      %v1919 = vadd.f32 %v1665, %v1875
      %v1920 = vadd.f32 %v1666, %v1877
      %v1921 = vadd.f32 %v1667, %v1880
      %v1922 = vadd.f32 %v1668, %v1882
      %v1923 = vadd.f32 %v1669, %v1885
      %v1924 = vadd.f32 %v1670, %v1887
      %v1925 = vld [vmem:[#allocation2 + $0x24] sm:$0xff]
      %v1926 = vld [vmem:[#allocation2 + $0x2c] sm:$0xff]
      %v1927 = vld [vmem:[#allocation2 + $0x34] sm:$0xff]
      %v1928 = vld [vmem:[#allocation2 + $0x3c] sm:$0xff]
      %v1929 = vld [vmem:[#allocation2 + $0x44] sm:$0xff]
      %v1930 = vld [vmem:[#allocation2 + $0x4c] sm:$0xff]
      %v1931 = vld [vmem:[#allocation2 + $0x54] sm:$0xff]
      %v1932 = vld [vmem:[#allocation2 + $0x5c] sm:$0xff]
      %v1933 = vld [vmem:[#allocation2 + $0x64] sm:$0xff]
      %v1934 = vld [vmem:[#allocation2 + $0x6c] sm:$0xff]
      %v1935 = vld [vmem:[#allocation2 + $0x74] sm:$0xff]
      %v1936 = vld [vmem:[#allocation2 + $0x7c] sm:$0xff]
      %v1937 = vld [vmem:[#allocation2 + $0x84] sm:$0xff]
      %v1938 = vld [vmem:[#allocation2 + $0x8c] sm:$0xff]
      %v1939 = vld [vmem:[#allocation2 + $0x94] sm:$0xff]
      %v1940 = vld [vmem:[#allocation2 + $0x9c] sm:$0xff]
      %v1941 = vld [vmem:[#allocation2 + $0xa4] sm:$0xff]
      %v1942 = vld [vmem:[#allocation2 + $0xac] sm:$0xff]
      %v1943 = vld [vmem:[#allocation2 + $0xb4] sm:$0xff]
      %v1944 = vld [vmem:[#allocation2 + $0xbc] sm:$0xff]
      %v1945 = vld [vmem:[#allocation2 + $0xc4] sm:$0xff]
      %v1946 = vld [vmem:[#allocation2 + $0xcc] sm:$0xff]
      %v1947 = vld [vmem:[#allocation2 + $0xd4] sm:$0xff]
      %v1948 = vld [vmem:[#allocation2 + $0xdc] sm:$0xff]
      %v1949 = vld [vmem:[#allocation2 + $0xe4] sm:$0xff]
      %v1950 = vld [vmem:[#allocation2 + $0xec] sm:$0xff]
      %v1951 = vld [vmem:[#allocation2 + $0xf4] sm:$0xff]
      %v1952 = vld [vmem:[#allocation2 + $0xfc] sm:$0xff]
      %v1953 = vld [vmem:[#allocation2 + $0x104] sm:$0xff]
      %v1954 = vld [vmem:[#allocation2 + $0x10c] sm:$0xff]
      %v1955 = vld [vmem:[#allocation2 + $0x114] sm:$0xff]
      %v1956 = vld [vmem:[#allocation2 + $0x11c] sm:$0xff]
      %v1957 = vld [vmem:[#allocation2 + $0x124] sm:$0xff]
      %v1958 = vld [vmem:[#allocation2 + $0x12c] sm:$0xff]
      %v1959 = vld [vmem:[#allocation2 + $0x134] sm:$0xff]
      %v1960 = vld [vmem:[#allocation2 + $0x13c] sm:$0xff]
      %v1961 = vpack.c.bf16 %v1926, %v1925
      %v1962 = vpack.c.bf16 %v1928, %v1927
      %v1963 = vpack.c.bf16 %v1930, %v1929
      %v1964 = vpack.c.bf16 %v1932, %v1931
      %v1965 = vpack.c.bf16 %v1934, %v1933
      %v1966 = vpack.c.bf16 %v1936, %v1935
      %v1967 = vpack.c.bf16 %v1938, %v1937
      %v1968 = vpack.c.bf16 %v1940, %v1939
      %v1969 = vpack.c.bf16 %v1942, %v1941
      %v1970 = vpack.c.bf16 %v1944, %v1943
      %v1971 = vpack.c.bf16 %v1946, %v1945
      %v1972 = vpack.c.bf16 %v1948, %v1947
      %v1973 = vpack.c.bf16 %v1950, %v1949
      %v1974 = vpack.c.bf16 %v1952, %v1951
      %v1975 = vpack.c.bf16 %v1954, %v1953
      %v1976 = vpack.c.bf16 %v1956, %v1955
      %v1977 = vpack.c.bf16 %v1958, %v1957
      %v1978 = vpack.c.bf16 %v1960, %v1959
      %s1979 = scalar_lea.vmem %s2, 384
      %v1980 = vld [vmem:[%s1979] sm:$0xf]
      %v1981 = vld [vmem:[%s1979 + $0x4] sm:$0xf]
      %v1982 = vld [vmem:[%s1979 + $0x8] sm:$0xf]
      %v1983 = vld [vmem:[%s1979 + $0xc] sm:$0xf]
      %v1984 = vld [vmem:[%s1979 + $0x10] sm:$0xf]
      %v1985 = vld [vmem:[%s1979 + $0x14] sm:$0xf]
      %v1986 = vld [vmem:[%s1979 + $0x18] sm:$0xf]
      %v1987 = vld [vmem:[%s1979 + $0x1c] sm:$0xf]
      %v1988 = vld [vmem:[%s1979 + $0x20] sm:$0xf]
      %v1989 = vld [vmem:[%s1979 + $0x24] sm:$0xf]
      %v1990 = vld [vmem:[%s1979 + $0x28] sm:$0xf]
      %v1991 = vld [vmem:[%s1979 + $0x2c] sm:$0xf]
      %v1992 = vld [vmem:[%s1979 + $0x30] sm:$0xf]
      %v1993 = vld [vmem:[%s1979 + $0x34] sm:$0xf]
      %v1994 = vld [vmem:[%s1979 + $0x38] sm:$0xf]
      %v1995 = vld [vmem:[%s1979 + $0x3c] sm:$0xf]
      %v2012 = vunpack.c.l.b16 %v1980
      %v2013 = vunpack.c.l.b16 %v1981
      %v2014 = vunpack.c.l.b16 %v1982
      %v2015 = vunpack.c.l.b16 %v1983
      %v2016 = vunpack.c.l.b16 %v1984
      %v2017 = vunpack.c.l.b16 %v1985
      %v2018 = vunpack.c.l.b16 %v1986
      %v2019 = vunpack.c.l.b16 %v1987
      %v2020 = vunpack.c.l.b16 %v1988
      %v2021 = vunpack.c.l.b16 %v1989
      %v2022 = vunpack.c.l.b16 %v1990
      %v2023 = vunpack.c.l.b16 %v1991
      %v2024 = vunpack.c.l.b16 %v1992
      %v2025 = vunpack.c.l.b16 %v1993
      %v2026 = vunpack.c.l.b16 %v1994
      %v2027 = vunpack.c.l.b16 %v1995
      %v2028 = vpack.c.b16 %v2013, %v2012
      %v2029 = vpack.c.b16 %v2015, %v2014
      %v2030 = vpack.c.b16 %v2017, %v2016
      %v2031 = vpack.c.b16 %v2019, %v2018
      %v2032 = vpack.c.b16 %v2021, %v2020
      %v2033 = vpack.c.b16 %v2023, %v2022
      %v2034 = vpack.c.b16 %v2025, %v2024
      %v2035 = vpack.c.b16 %v2027, %v2026
      %2044 = vmatpush.bf16.msra.mxu0 %v2035
      %2045 = vmatpush.bf16.msra.mxu0 %v2034
      %2046 = vmatpush.bf16.msra.mxu0 %v2033
      %2047 = vmatpush.bf16.msra.mxu0 %v2032
      %2048 = vmatpush.bf16.msra.mxu0 %v2031
      %2049 = vmatpush.bf16.msra.mxu0 %v2030
      %2050 = vmatpush.bf16.msra.mxu0 %v2029
      %2051 = vmatpush.bf16.msra.mxu0 %v2028
      %2052 = vmatmul.bf16.gmra.mxu0 %v1961
      %v2053 = vpop.f32.mrf.mxu0
      %v2054 = vadd.f32 0.0, %v2053
      %v2055 = vpop.f32.mrf.mxu0
      %v2056 = vadd.f32 0.0, %v2055
      %2057 = vmatmul.bf16.gmra.mxu0 %v1962
      %v2058 = vpop.f32.mrf.mxu0
      %v2059 = vadd.f32 0.0, %v2058
      %v2060 = vpop.f32.mrf.mxu0
      %v2061 = vadd.f32 0.0, %v2060
      %2062 = vmatmul.bf16.gmra.mxu0 %v1963
      %v2063 = vpop.f32.mrf.mxu0
      %v2064 = vadd.f32 0.0, %v2063
      %v2065 = vpop.f32.mrf.mxu0
      %v2066 = vadd.f32 0.0, %v2065
      %2067 = vmatmul.bf16.gmra.mxu0 %v1964
      %v2068 = vpop.f32.mrf.mxu0
      %v2069 = vadd.f32 0.0, %v2068
      %v2070 = vpop.f32.mrf.mxu0
      %v2071 = vadd.f32 0.0, %v2070
      %2072 = vmatmul.bf16.gmra.mxu0 %v1965
      %v2073 = vpop.f32.mrf.mxu0
      %v2074 = vadd.f32 0.0, %v2073
      %v2075 = vpop.f32.mrf.mxu0
      %v2076 = vadd.f32 0.0, %v2075
      %2077 = vmatmul.bf16.gmra.mxu0 %v1966
      %v2078 = vpop.f32.mrf.mxu0
      %v2079 = vadd.f32 0.0, %v2078
      %v2080 = vpop.f32.mrf.mxu0
      %v2081 = vadd.f32 0.0, %v2080
      %2082 = vmatmul.bf16.gmra.mxu0 %v1967
      %v2083 = vpop.f32.mrf.mxu0
      %v2084 = vadd.f32 0.0, %v2083
      %v2085 = vpop.f32.mrf.mxu0
      %v2086 = vadd.f32 0.0, %v2085
      %2087 = vmatmul.bf16.gmra.mxu0 %v1968
      %v2088 = vpop.f32.mrf.mxu0
      %v2089 = vadd.f32 0.0, %v2088
      %v2090 = vpop.f32.mrf.mxu0
      %v2091 = vadd.f32 0.0, %v2090
      %2092 = vmatmul.bf16.gmra.mxu0 %v1969
      %v2093 = vpop.f32.mrf.mxu0
      %v2094 = vadd.f32 0.0, %v2093
      %v2095 = vpop.f32.mrf.mxu0
      %v2096 = vadd.f32 0.0, %v2095
      %2097 = vmatmul.bf16.gmra.mxu0 %v1970
      %v2098 = vpop.f32.mrf.mxu0
      %v2099 = vadd.f32 0.0, %v2098
      %v2100 = vpop.f32.mrf.mxu0
      %v2101 = vadd.f32 0.0, %v2100
      %2102 = vmatmul.bf16.gmra.mxu0 %v1971
      %v2103 = vpop.f32.mrf.mxu0
      %v2104 = vadd.f32 0.0, %v2103
      %v2105 = vpop.f32.mrf.mxu0
      %v2106 = vadd.f32 0.0, %v2105
      %2107 = vmatmul.bf16.gmra.mxu0 %v1972
      %v2108 = vpop.f32.mrf.mxu0
      %v2109 = vadd.f32 0.0, %v2108
      %v2110 = vpop.f32.mrf.mxu0
      %v2111 = vadd.f32 0.0, %v2110
      %2112 = vmatmul.bf16.gmra.mxu0 %v1973
      %v2113 = vpop.f32.mrf.mxu0
      %v2114 = vadd.f32 0.0, %v2113
      %v2115 = vpop.f32.mrf.mxu0
      %v2116 = vadd.f32 0.0, %v2115
      %2117 = vmatmul.bf16.gmra.mxu0 %v1974
      %v2118 = vpop.f32.mrf.mxu0
      %v2119 = vadd.f32 0.0, %v2118
      %v2120 = vpop.f32.mrf.mxu0
      %v2121 = vadd.f32 0.0, %v2120
      %2122 = vmatmul.bf16.gmra.mxu0 %v1975
      %v2123 = vpop.f32.mrf.mxu0
      %v2124 = vadd.f32 0.0, %v2123
      %v2125 = vpop.f32.mrf.mxu0
      %v2126 = vadd.f32 0.0, %v2125
      %2127 = vmatmul.bf16.gmra.mxu0 %v1976
      %v2128 = vpop.f32.mrf.mxu0
      %v2129 = vadd.f32 0.0, %v2128
      %v2130 = vpop.f32.mrf.mxu0
      %v2131 = vadd.f32 0.0, %v2130
      %2132 = vmatmul.bf16.gmra.mxu0 %v1977
      %v2133 = vpop.f32.mrf.mxu0
      %v2134 = vadd.f32 0.0, %v2133
      %v2135 = vpop.f32.mrf.mxu0
      %v2136 = vadd.f32 0.0, %v2135
      %2137 = vmatmul.bf16.gmra.mxu0 %v1978
      %v2138 = vpop.f32.mrf.mxu0
      %v2139 = vadd.f32 0.0, %v2138
      %v2140 = vpop.f32.mrf.mxu0
      %v2141 = vadd.f32 0.0, %v2140
      %2142 = vdwg.mxu0
      %v2143 = vadd.f32 %v1889, %v2054
      %v2144 = vadd.f32 %v1890, %v2056
      %v2145 = vadd.f32 %v1891, %v2059
      %v2146 = vadd.f32 %v1892, %v2061
      %v2147 = vadd.f32 %v1893, %v2064
      %v2148 = vadd.f32 %v1894, %v2066
      %v2149 = vadd.f32 %v1895, %v2069
      %v2150 = vadd.f32 %v1896, %v2071
      %v2151 = vadd.f32 %v1897, %v2074
      %v2152 = vadd.f32 %v1898, %v2076
      %v2153 = vadd.f32 %v1899, %v2079
      %v2154 = vadd.f32 %v1900, %v2081
      %v2155 = vadd.f32 %v1901, %v2084
      %v2156 = vadd.f32 %v1902, %v2086
      %v2157 = vadd.f32 %v1903, %v2089
      %v2158 = vadd.f32 %v1904, %v2091
      %v2159 = vadd.f32 %v1905, %v2094
      %v2160 = vadd.f32 %v1906, %v2096
      %v2161 = vadd.f32 %v1907, %v2099
      %v2162 = vadd.f32 %v1908, %v2101
      %v2163 = vadd.f32 %v1909, %v2104
      %v2164 = vadd.f32 %v1910, %v2106
      %v2165 = vadd.f32 %v1911, %v2109
      %v2166 = vadd.f32 %v1912, %v2111
      %v2167 = vadd.f32 %v1913, %v2114
      %v2168 = vadd.f32 %v1914, %v2116
      %v2169 = vadd.f32 %v1915, %v2119
      %v2170 = vadd.f32 %v1916, %v2121
      %v2171 = vadd.f32 %v1917, %v2124
      %v2172 = vadd.f32 %v1918, %v2126
      %v2173 = vadd.f32 %v1919, %v2129
      %v2174 = vadd.f32 %v1920, %v2131
      %v2175 = vadd.f32 %v1921, %v2134
      %v2176 = vadd.f32 %v1922, %v2136
      %v2177 = vadd.f32 %v1923, %v2139
      %v2178 = vadd.f32 %v1924, %v2141
      %v2179 = vld [vmem:[#allocation2 + $0x25] sm:$0xff]
      %v2180 = vld [vmem:[#allocation2 + $0x2d] sm:$0xff]
      %v2181 = vld [vmem:[#allocation2 + $0x35] sm:$0xff]
      %v2182 = vld [vmem:[#allocation2 + $0x3d] sm:$0xff]
      %v2183 = vld [vmem:[#allocation2 + $0x45] sm:$0xff]
      %v2184 = vld [vmem:[#allocation2 + $0x4d] sm:$0xff]
      %v2185 = vld [vmem:[#allocation2 + $0x55] sm:$0xff]
      %v2186 = vld [vmem:[#allocation2 + $0x5d] sm:$0xff]
      %v2187 = vld [vmem:[#allocation2 + $0x65] sm:$0xff]
      %v2188 = vld [vmem:[#allocation2 + $0x6d] sm:$0xff]
      %v2189 = vld [vmem:[#allocation2 + $0x75] sm:$0xff]
      %v2190 = vld [vmem:[#allocation2 + $0x7d] sm:$0xff]
      %v2191 = vld [vmem:[#allocation2 + $0x85] sm:$0xff]
      %v2192 = vld [vmem:[#allocation2 + $0x8d] sm:$0xff]
      %v2193 = vld [vmem:[#allocation2 + $0x95] sm:$0xff]
      %v2194 = vld [vmem:[#allocation2 + $0x9d] sm:$0xff]
      %v2195 = vld [vmem:[#allocation2 + $0xa5] sm:$0xff]
      %v2196 = vld [vmem:[#allocation2 + $0xad] sm:$0xff]
      %v2197 = vld [vmem:[#allocation2 + $0xb5] sm:$0xff]
      %v2198 = vld [vmem:[#allocation2 + $0xbd] sm:$0xff]
      %v2199 = vld [vmem:[#allocation2 + $0xc5] sm:$0xff]
      %v2200 = vld [vmem:[#allocation2 + $0xcd] sm:$0xff]
      %v2201 = vld [vmem:[#allocation2 + $0xd5] sm:$0xff]
      %v2202 = vld [vmem:[#allocation2 + $0xdd] sm:$0xff]
      %v2203 = vld [vmem:[#allocation2 + $0xe5] sm:$0xff]
      %v2204 = vld [vmem:[#allocation2 + $0xed] sm:$0xff]
      %v2205 = vld [vmem:[#allocation2 + $0xf5] sm:$0xff]
      %v2206 = vld [vmem:[#allocation2 + $0xfd] sm:$0xff]
      %v2207 = vld [vmem:[#allocation2 + $0x105] sm:$0xff]
      %v2208 = vld [vmem:[#allocation2 + $0x10d] sm:$0xff]
      %v2209 = vld [vmem:[#allocation2 + $0x115] sm:$0xff]
      %v2210 = vld [vmem:[#allocation2 + $0x11d] sm:$0xff]
      %v2211 = vld [vmem:[#allocation2 + $0x125] sm:$0xff]
      %v2212 = vld [vmem:[#allocation2 + $0x12d] sm:$0xff]
      %v2213 = vld [vmem:[#allocation2 + $0x135] sm:$0xff]
      %v2214 = vld [vmem:[#allocation2 + $0x13d] sm:$0xff]
      %v2215 = vpack.c.bf16 %v2180, %v2179
      %v2216 = vpack.c.bf16 %v2182, %v2181
      %v2217 = vpack.c.bf16 %v2184, %v2183
      %v2218 = vpack.c.bf16 %v2186, %v2185
      %v2219 = vpack.c.bf16 %v2188, %v2187
      %v2220 = vpack.c.bf16 %v2190, %v2189
      %v2221 = vpack.c.bf16 %v2192, %v2191
      %v2222 = vpack.c.bf16 %v2194, %v2193
      %v2223 = vpack.c.bf16 %v2196, %v2195
      %v2224 = vpack.c.bf16 %v2198, %v2197
      %v2225 = vpack.c.bf16 %v2200, %v2199
      %v2226 = vpack.c.bf16 %v2202, %v2201
      %v2227 = vpack.c.bf16 %v2204, %v2203
      %v2228 = vpack.c.bf16 %v2206, %v2205
      %v2229 = vpack.c.bf16 %v2208, %v2207
      %v2230 = vpack.c.bf16 %v2210, %v2209
      %v2231 = vpack.c.bf16 %v2212, %v2211
      %v2232 = vpack.c.bf16 %v2214, %v2213
      %s2233 = scalar_lea.vmem %s2, 448
      %v2234 = vld [vmem:[%s2233] sm:$0xf]
      %v2235 = vld [vmem:[%s2233 + $0x4] sm:$0xf]
      %v2236 = vld [vmem:[%s2233 + $0x8] sm:$0xf]
      %v2237 = vld [vmem:[%s2233 + $0xc] sm:$0xf]
      %v2238 = vld [vmem:[%s2233 + $0x10] sm:$0xf]
      %v2239 = vld [vmem:[%s2233 + $0x14] sm:$0xf]
      %v2240 = vld [vmem:[%s2233 + $0x18] sm:$0xf]
      %v2241 = vld [vmem:[%s2233 + $0x1c] sm:$0xf]
      %v2242 = vld [vmem:[%s2233 + $0x20] sm:$0xf]
      %v2243 = vld [vmem:[%s2233 + $0x24] sm:$0xf]
      %v2244 = vld [vmem:[%s2233 + $0x28] sm:$0xf]
      %v2245 = vld [vmem:[%s2233 + $0x2c] sm:$0xf]
      %v2246 = vld [vmem:[%s2233 + $0x30] sm:$0xf]
      %v2247 = vld [vmem:[%s2233 + $0x34] sm:$0xf]
      %v2248 = vld [vmem:[%s2233 + $0x38] sm:$0xf]
      %v2249 = vld [vmem:[%s2233 + $0x3c] sm:$0xf]
      %v2266 = vunpack.c.l.b16 %v2234
      %v2267 = vunpack.c.l.b16 %v2235
      %v2268 = vunpack.c.l.b16 %v2236
      %v2269 = vunpack.c.l.b16 %v2237
      %v2270 = vunpack.c.l.b16 %v2238
      %v2271 = vunpack.c.l.b16 %v2239
      %v2272 = vunpack.c.l.b16 %v2240
      %v2273 = vunpack.c.l.b16 %v2241
      %v2274 = vunpack.c.l.b16 %v2242
      %v2275 = vunpack.c.l.b16 %v2243
      %v2276 = vunpack.c.l.b16 %v2244
      %v2277 = vunpack.c.l.b16 %v2245
      %v2278 = vunpack.c.l.b16 %v2246
      %v2279 = vunpack.c.l.b16 %v2247
      %v2280 = vunpack.c.l.b16 %v2248
      %v2281 = vunpack.c.l.b16 %v2249
      %v2282 = vpack.c.b16 %v2267, %v2266
      %v2283 = vpack.c.b16 %v2269, %v2268
      %v2284 = vpack.c.b16 %v2271, %v2270
      %v2285 = vpack.c.b16 %v2273, %v2272
      %v2286 = vpack.c.b16 %v2275, %v2274
      %v2287 = vpack.c.b16 %v2277, %v2276
      %v2288 = vpack.c.b16 %v2279, %v2278
      %v2289 = vpack.c.b16 %v2281, %v2280
      %2298 = vmatpush.bf16.msra.mxu0 %v2289
      %2299 = vmatpush.bf16.msra.mxu0 %v2288
      %2300 = vmatpush.bf16.msra.mxu0 %v2287
      %2301 = vmatpush.bf16.msra.mxu0 %v2286
      %2302 = vmatpush.bf16.msra.mxu0 %v2285
      %2303 = vmatpush.bf16.msra.mxu0 %v2284
      %2304 = vmatpush.bf16.msra.mxu0 %v2283
      %2305 = vmatpush.bf16.msra.mxu0 %v2282
      %2306 = vmatmul.bf16.gmra.mxu0 %v2215
      %v2307 = vpop.f32.mrf.mxu0
      %v2308 = vadd.f32 0.0, %v2307
      %v2309 = vpop.f32.mrf.mxu0
      %v2310 = vadd.f32 0.0, %v2309
      %2311 = vmatmul.bf16.gmra.mxu0 %v2216
      %v2312 = vpop.f32.mrf.mxu0
      %v2313 = vadd.f32 0.0, %v2312
      %v2314 = vpop.f32.mrf.mxu0
      %v2315 = vadd.f32 0.0, %v2314
      %2316 = vmatmul.bf16.gmra.mxu0 %v2217
      %v2317 = vpop.f32.mrf.mxu0
      %v2318 = vadd.f32 0.0, %v2317
      %v2319 = vpop.f32.mrf.mxu0
      %v2320 = vadd.f32 0.0, %v2319
      %2321 = vmatmul.bf16.gmra.mxu0 %v2218
      %v2322 = vpop.f32.mrf.mxu0
      %v2323 = vadd.f32 0.0, %v2322
      %v2324 = vpop.f32.mrf.mxu0
      %v2325 = vadd.f32 0.0, %v2324
      %2326 = vmatmul.bf16.gmra.mxu0 %v2219
      %v2327 = vpop.f32.mrf.mxu0
      %v2328 = vadd.f32 0.0, %v2327
      %v2329 = vpop.f32.mrf.mxu0
      %v2330 = vadd.f32 0.0, %v2329
      %2331 = vmatmul.bf16.gmra.mxu0 %v2220
      %v2332 = vpop.f32.mrf.mxu0
      %v2333 = vadd.f32 0.0, %v2332
      %v2334 = vpop.f32.mrf.mxu0
      %v2335 = vadd.f32 0.0, %v2334
      %2336 = vmatmul.bf16.gmra.mxu0 %v2221
      %v2337 = vpop.f32.mrf.mxu0
      %v2338 = vadd.f32 0.0, %v2337
      %v2339 = vpop.f32.mrf.mxu0
      %v2340 = vadd.f32 0.0, %v2339
      %2341 = vmatmul.bf16.gmra.mxu0 %v2222
      %v2342 = vpop.f32.mrf.mxu0
      %v2343 = vadd.f32 0.0, %v2342
      %v2344 = vpop.f32.mrf.mxu0
      %v2345 = vadd.f32 0.0, %v2344
      %2346 = vmatmul.bf16.gmra.mxu0 %v2223
      %v2347 = vpop.f32.mrf.mxu0
      %v2348 = vadd.f32 0.0, %v2347
      %v2349 = vpop.f32.mrf.mxu0
      %v2350 = vadd.f32 0.0, %v2349
      %2351 = vmatmul.bf16.gmra.mxu0 %v2224
      %v2352 = vpop.f32.mrf.mxu0
      %v2353 = vadd.f32 0.0, %v2352
      %v2354 = vpop.f32.mrf.mxu0
      %v2355 = vadd.f32 0.0, %v2354
      %2356 = vmatmul.bf16.gmra.mxu0 %v2225
      %v2357 = vpop.f32.mrf.mxu0
      %v2358 = vadd.f32 0.0, %v2357
      %v2359 = vpop.f32.mrf.mxu0
      %v2360 = vadd.f32 0.0, %v2359
      %2361 = vmatmul.bf16.gmra.mxu0 %v2226
      %v2362 = vpop.f32.mrf.mxu0
      %v2363 = vadd.f32 0.0, %v2362
      %v2364 = vpop.f32.mrf.mxu0
      %v2365 = vadd.f32 0.0, %v2364
      %2366 = vmatmul.bf16.gmra.mxu0 %v2227
      %v2367 = vpop.f32.mrf.mxu0
      %v2368 = vadd.f32 0.0, %v2367
      %v2369 = vpop.f32.mrf.mxu0
      %v2370 = vadd.f32 0.0, %v2369
      %2371 = vmatmul.bf16.gmra.mxu0 %v2228
      %v2372 = vpop.f32.mrf.mxu0
      %v2373 = vadd.f32 0.0, %v2372
      %v2374 = vpop.f32.mrf.mxu0
      %v2375 = vadd.f32 0.0, %v2374
      %2376 = vmatmul.bf16.gmra.mxu0 %v2229
      %v2377 = vpop.f32.mrf.mxu0
      %v2378 = vadd.f32 0.0, %v2377
      %v2379 = vpop.f32.mrf.mxu0
      %v2380 = vadd.f32 0.0, %v2379
      %2381 = vmatmul.bf16.gmra.mxu0 %v2230
      %v2382 = vpop.f32.mrf.mxu0
      %v2383 = vadd.f32 0.0, %v2382
      %v2384 = vpop.f32.mrf.mxu0
      %v2385 = vadd.f32 0.0, %v2384
      %2386 = vmatmul.bf16.gmra.mxu0 %v2231
      %v2387 = vpop.f32.mrf.mxu0
      %v2388 = vadd.f32 0.0, %v2387
      %v2389 = vpop.f32.mrf.mxu0
      %v2390 = vadd.f32 0.0, %v2389
      %2391 = vmatmul.bf16.gmra.mxu0 %v2232
      %v2392 = vpop.f32.mrf.mxu0
      %v2393 = vadd.f32 0.0, %v2392
      %v2394 = vpop.f32.mrf.mxu0
      %v2395 = vadd.f32 0.0, %v2394
      %2396 = vdwg.mxu0
      %v2397 = vadd.f32 %v2143, %v2308
      %v2398 = vadd.f32 %v2144, %v2310
      %v2399 = vadd.f32 %v2145, %v2313
      %v2400 = vadd.f32 %v2146, %v2315
      %v2401 = vadd.f32 %v2147, %v2318
      %v2402 = vadd.f32 %v2148, %v2320
      %v2403 = vadd.f32 %v2149, %v2323
      %v2404 = vadd.f32 %v2150, %v2325
      %v2405 = vadd.f32 %v2151, %v2328
      %v2406 = vadd.f32 %v2152, %v2330
      %v2407 = vadd.f32 %v2153, %v2333
      %v2408 = vadd.f32 %v2154, %v2335
      %v2409 = vadd.f32 %v2155, %v2338
      %v2410 = vadd.f32 %v2156, %v2340
      %v2411 = vadd.f32 %v2157, %v2343
      %v2412 = vadd.f32 %v2158, %v2345
      %v2413 = vadd.f32 %v2159, %v2348
      %v2414 = vadd.f32 %v2160, %v2350
      %v2415 = vadd.f32 %v2161, %v2353
      %v2416 = vadd.f32 %v2162, %v2355
      %v2417 = vadd.f32 %v2163, %v2358
      %v2418 = vadd.f32 %v2164, %v2360
      %v2419 = vadd.f32 %v2165, %v2363
      %v2420 = vadd.f32 %v2166, %v2365
      %v2421 = vadd.f32 %v2167, %v2368
      %v2422 = vadd.f32 %v2168, %v2370
      %v2423 = vadd.f32 %v2169, %v2373
      %v2424 = vadd.f32 %v2170, %v2375
      %v2425 = vadd.f32 %v2171, %v2378
      %v2426 = vadd.f32 %v2172, %v2380
      %v2427 = vadd.f32 %v2173, %v2383
      %v2428 = vadd.f32 %v2174, %v2385
      %v2429 = vadd.f32 %v2175, %v2388
      %v2430 = vadd.f32 %v2176, %v2390
      %v2431 = vadd.f32 %v2177, %v2393
      %v2432 = vadd.f32 %v2178, %v2395
      %v2433 = vld [vmem:[#allocation2 + $0x26] sm:$0xff]
      %v2434 = vld [vmem:[#allocation2 + $0x2e] sm:$0xff]
      %v2435 = vld [vmem:[#allocation2 + $0x36] sm:$0xff]
      %v2436 = vld [vmem:[#allocation2 + $0x3e] sm:$0xff]
      %v2437 = vld [vmem:[#allocation2 + $0x46] sm:$0xff]
      %v2438 = vld [vmem:[#allocation2 + $0x4e] sm:$0xff]
      %v2439 = vld [vmem:[#allocation2 + $0x56] sm:$0xff]
      %v2440 = vld [vmem:[#allocation2 + $0x5e] sm:$0xff]
      %v2441 = vld [vmem:[#allocation2 + $0x66] sm:$0xff]
      %v2442 = vld [vmem:[#allocation2 + $0x6e] sm:$0xff]
      %v2443 = vld [vmem:[#allocation2 + $0x76] sm:$0xff]
      %v2444 = vld [vmem:[#allocation2 + $0x7e] sm:$0xff]
      %v2445 = vld [vmem:[#allocation2 + $0x86] sm:$0xff]
      %v2446 = vld [vmem:[#allocation2 + $0x8e] sm:$0xff]
      %v2447 = vld [vmem:[#allocation2 + $0x96] sm:$0xff]
      %v2448 = vld [vmem:[#allocation2 + $0x9e] sm:$0xff]
      %v2449 = vld [vmem:[#allocation2 + $0xa6] sm:$0xff]
      %v2450 = vld [vmem:[#allocation2 + $0xae] sm:$0xff]
      %v2451 = vld [vmem:[#allocation2 + $0xb6] sm:$0xff]
      %v2452 = vld [vmem:[#allocation2 + $0xbe] sm:$0xff]
      %v2453 = vld [vmem:[#allocation2 + $0xc6] sm:$0xff]
      %v2454 = vld [vmem:[#allocation2 + $0xce] sm:$0xff]
      %v2455 = vld [vmem:[#allocation2 + $0xd6] sm:$0xff]
      %v2456 = vld [vmem:[#allocation2 + $0xde] sm:$0xff]
      %v2457 = vld [vmem:[#allocation2 + $0xe6] sm:$0xff]
      %v2458 = vld [vmem:[#allocation2 + $0xee] sm:$0xff]
      %v2459 = vld [vmem:[#allocation2 + $0xf6] sm:$0xff]
      %v2460 = vld [vmem:[#allocation2 + $0xfe] sm:$0xff]
      %v2461 = vld [vmem:[#allocation2 + $0x106] sm:$0xff]
      %v2462 = vld [vmem:[#allocation2 + $0x10e] sm:$0xff]
      %v2463 = vld [vmem:[#allocation2 + $0x116] sm:$0xff]
      %v2464 = vld [vmem:[#allocation2 + $0x11e] sm:$0xff]
      %v2465 = vld [vmem:[#allocation2 + $0x126] sm:$0xff]
      %v2466 = vld [vmem:[#allocation2 + $0x12e] sm:$0xff]
      %v2467 = vld [vmem:[#allocation2 + $0x136] sm:$0xff]
      %v2468 = vld [vmem:[#allocation2 + $0x13e] sm:$0xff]
      %v2469 = vpack.c.bf16 %v2434, %v2433
      %v2470 = vpack.c.bf16 %v2436, %v2435
      %v2471 = vpack.c.bf16 %v2438, %v2437
      %v2472 = vpack.c.bf16 %v2440, %v2439
      %v2473 = vpack.c.bf16 %v2442, %v2441
      %v2474 = vpack.c.bf16 %v2444, %v2443
      %v2475 = vpack.c.bf16 %v2446, %v2445
      %v2476 = vpack.c.bf16 %v2448, %v2447
      %v2477 = vpack.c.bf16 %v2450, %v2449
      %v2478 = vpack.c.bf16 %v2452, %v2451
      %v2479 = vpack.c.bf16 %v2454, %v2453
      %v2480 = vpack.c.bf16 %v2456, %v2455
      %v2481 = vpack.c.bf16 %v2458, %v2457
      %v2482 = vpack.c.bf16 %v2460, %v2459
      %v2483 = vpack.c.bf16 %v2462, %v2461
      %v2484 = vpack.c.bf16 %v2464, %v2463
      %v2485 = vpack.c.bf16 %v2466, %v2465
      %v2486 = vpack.c.bf16 %v2468, %v2467
      %s2487 = scalar_lea.vmem %s2, 512
      %v2488 = vld [vmem:[%s2487] sm:$0xf]
      %v2489 = vld [vmem:[%s2487 + $0x4] sm:$0xf]
      %v2490 = vld [vmem:[%s2487 + $0x8] sm:$0xf]
      %v2491 = vld [vmem:[%s2487 + $0xc] sm:$0xf]
      %v2492 = vld [vmem:[%s2487 + $0x10] sm:$0xf]
      %v2493 = vld [vmem:[%s2487 + $0x14] sm:$0xf]
      %v2494 = vld [vmem:[%s2487 + $0x18] sm:$0xf]
      %v2495 = vld [vmem:[%s2487 + $0x1c] sm:$0xf]
      %v2496 = vld [vmem:[%s2487 + $0x20] sm:$0xf]
      %v2497 = vld [vmem:[%s2487 + $0x24] sm:$0xf]
      %v2498 = vld [vmem:[%s2487 + $0x28] sm:$0xf]
      %v2499 = vld [vmem:[%s2487 + $0x2c] sm:$0xf]
      %v2500 = vld [vmem:[%s2487 + $0x30] sm:$0xf]
      %v2501 = vld [vmem:[%s2487 + $0x34] sm:$0xf]
      %v2502 = vld [vmem:[%s2487 + $0x38] sm:$0xf]
      %v2503 = vld [vmem:[%s2487 + $0x3c] sm:$0xf]
      %v2520 = vunpack.c.l.b16 %v2488
      %v2521 = vunpack.c.l.b16 %v2489
      %v2522 = vunpack.c.l.b16 %v2490
      %v2523 = vunpack.c.l.b16 %v2491
      %v2524 = vunpack.c.l.b16 %v2492
      %v2525 = vunpack.c.l.b16 %v2493
      %v2526 = vunpack.c.l.b16 %v2494
      %v2527 = vunpack.c.l.b16 %v2495
      %v2528 = vunpack.c.l.b16 %v2496
      %v2529 = vunpack.c.l.b16 %v2497
      %v2530 = vunpack.c.l.b16 %v2498
      %v2531 = vunpack.c.l.b16 %v2499
      %v2532 = vunpack.c.l.b16 %v2500
      %v2533 = vunpack.c.l.b16 %v2501
      %v2534 = vunpack.c.l.b16 %v2502
      %v2535 = vunpack.c.l.b16 %v2503
      %v2536 = vpack.c.b16 %v2521, %v2520
      %v2537 = vpack.c.b16 %v2523, %v2522
      %v2538 = vpack.c.b16 %v2525, %v2524
      %v2539 = vpack.c.b16 %v2527, %v2526
      %v2540 = vpack.c.b16 %v2529, %v2528
      %v2541 = vpack.c.b16 %v2531, %v2530
      %v2542 = vpack.c.b16 %v2533, %v2532
      %v2543 = vpack.c.b16 %v2535, %v2534
      %2552 = vmatpush.bf16.msra.mxu0 %v2543
      %2553 = vmatpush.bf16.msra.mxu0 %v2542
      %2554 = vmatpush.bf16.msra.mxu0 %v2541
      %2555 = vmatpush.bf16.msra.mxu0 %v2540
      %2556 = vmatpush.bf16.msra.mxu0 %v2539
      %2557 = vmatpush.bf16.msra.mxu0 %v2538
      %2558 = vmatpush.bf16.msra.mxu0 %v2537
      %2559 = vmatpush.bf16.msra.mxu0 %v2536
      %2560 = vmatmul.bf16.gmra.mxu0 %v2469
      %v2561 = vpop.f32.mrf.mxu0
      %v2562 = vadd.f32 0.0, %v2561
      %v2563 = vpop.f32.mrf.mxu0
      %v2564 = vadd.f32 0.0, %v2563
      %2565 = vmatmul.bf16.gmra.mxu0 %v2470
      %v2566 = vpop.f32.mrf.mxu0
      %v2567 = vadd.f32 0.0, %v2566
      %v2568 = vpop.f32.mrf.mxu0
      %v2569 = vadd.f32 0.0, %v2568
      %2570 = vmatmul.bf16.gmra.mxu0 %v2471
      %v2571 = vpop.f32.mrf.mxu0
      %v2572 = vadd.f32 0.0, %v2571
      %v2573 = vpop.f32.mrf.mxu0
      %v2574 = vadd.f32 0.0, %v2573
      %2575 = vmatmul.bf16.gmra.mxu0 %v2472
      %v2576 = vpop.f32.mrf.mxu0
      %v2577 = vadd.f32 0.0, %v2576
      %v2578 = vpop.f32.mrf.mxu0
      %v2579 = vadd.f32 0.0, %v2578
      %2580 = vmatmul.bf16.gmra.mxu0 %v2473
      %v2581 = vpop.f32.mrf.mxu0
      %v2582 = vadd.f32 0.0, %v2581
      %v2583 = vpop.f32.mrf.mxu0
      %v2584 = vadd.f32 0.0, %v2583
      %2585 = vmatmul.bf16.gmra.mxu0 %v2474
      %v2586 = vpop.f32.mrf.mxu0
      %v2587 = vadd.f32 0.0, %v2586
      %v2588 = vpop.f32.mrf.mxu0
      %v2589 = vadd.f32 0.0, %v2588
      %2590 = vmatmul.bf16.gmra.mxu0 %v2475
      %v2591 = vpop.f32.mrf.mxu0
      %v2592 = vadd.f32 0.0, %v2591
      %v2593 = vpop.f32.mrf.mxu0
      %v2594 = vadd.f32 0.0, %v2593
      %2595 = vmatmul.bf16.gmra.mxu0 %v2476
      %v2596 = vpop.f32.mrf.mxu0
      %v2597 = vadd.f32 0.0, %v2596
      %v2598 = vpop.f32.mrf.mxu0
      %v2599 = vadd.f32 0.0, %v2598
      %2600 = vmatmul.bf16.gmra.mxu0 %v2477
      %v2601 = vpop.f32.mrf.mxu0
      %v2602 = vadd.f32 0.0, %v2601
      %v2603 = vpop.f32.mrf.mxu0
      %v2604 = vadd.f32 0.0, %v2603
      %2605 = vmatmul.bf16.gmra.mxu0 %v2478
      %v2606 = vpop.f32.mrf.mxu0
      %v2607 = vadd.f32 0.0, %v2606
      %v2608 = vpop.f32.mrf.mxu0
      %v2609 = vadd.f32 0.0, %v2608
      %2610 = vmatmul.bf16.gmra.mxu0 %v2479
      %v2611 = vpop.f32.mrf.mxu0
      %v2612 = vadd.f32 0.0, %v2611
      %v2613 = vpop.f32.mrf.mxu0
      %v2614 = vadd.f32 0.0, %v2613
      %2615 = vmatmul.bf16.gmra.mxu0 %v2480
      %v2616 = vpop.f32.mrf.mxu0
      %v2617 = vadd.f32 0.0, %v2616
      %v2618 = vpop.f32.mrf.mxu0
      %v2619 = vadd.f32 0.0, %v2618
      %2620 = vmatmul.bf16.gmra.mxu0 %v2481
      %v2621 = vpop.f32.mrf.mxu0
      %v2622 = vadd.f32 0.0, %v2621
      %v2623 = vpop.f32.mrf.mxu0
      %v2624 = vadd.f32 0.0, %v2623
      %2625 = vmatmul.bf16.gmra.mxu0 %v2482
      %v2626 = vpop.f32.mrf.mxu0
      %v2627 = vadd.f32 0.0, %v2626
      %v2628 = vpop.f32.mrf.mxu0
      %v2629 = vadd.f32 0.0, %v2628
      %2630 = vmatmul.bf16.gmra.mxu0 %v2483
      %v2631 = vpop.f32.mrf.mxu0
      %v2632 = vadd.f32 0.0, %v2631
      %v2633 = vpop.f32.mrf.mxu0
      %v2634 = vadd.f32 0.0, %v2633
      %2635 = vmatmul.bf16.gmra.mxu0 %v2484
      %v2636 = vpop.f32.mrf.mxu0
      %v2637 = vadd.f32 0.0, %v2636
      %v2638 = vpop.f32.mrf.mxu0
      %v2639 = vadd.f32 0.0, %v2638
      %2640 = vmatmul.bf16.gmra.mxu0 %v2485
      %v2641 = vpop.f32.mrf.mxu0
      %v2642 = vadd.f32 0.0, %v2641
      %v2643 = vpop.f32.mrf.mxu0
      %v2644 = vadd.f32 0.0, %v2643
      %2645 = vmatmul.bf16.gmra.mxu0 %v2486
      %v2646 = vpop.f32.mrf.mxu0
      %v2647 = vadd.f32 0.0, %v2646
      %v2648 = vpop.f32.mrf.mxu0
      %v2649 = vadd.f32 0.0, %v2648
      %2650 = vdwg.mxu0
      %v2651 = vadd.f32 %v2397, %v2562
      %v2652 = vadd.f32 %v2398, %v2564
      %v2653 = vadd.f32 %v2399, %v2567
      %v2654 = vadd.f32 %v2400, %v2569
      %v2655 = vadd.f32 %v2401, %v2572
      %v2656 = vadd.f32 %v2402, %v2574
      %v2657 = vadd.f32 %v2403, %v2577
      %v2658 = vadd.f32 %v2404, %v2579
      %v2659 = vadd.f32 %v2405, %v2582
      %v2660 = vadd.f32 %v2406, %v2584
      %v2661 = vadd.f32 %v2407, %v2587
      %v2662 = vadd.f32 %v2408, %v2589
      %v2663 = vadd.f32 %v2409, %v2592
      %v2664 = vadd.f32 %v2410, %v2594
      %v2665 = vadd.f32 %v2411, %v2597
      %v2666 = vadd.f32 %v2412, %v2599
      %v2667 = vadd.f32 %v2413, %v2602
      %v2668 = vadd.f32 %v2414, %v2604
      %v2669 = vadd.f32 %v2415, %v2607
      %v2670 = vadd.f32 %v2416, %v2609
      %v2671 = vadd.f32 %v2417, %v2612
      %v2672 = vadd.f32 %v2418, %v2614
      %v2673 = vadd.f32 %v2419, %v2617
      %v2674 = vadd.f32 %v2420, %v2619
      %v2675 = vadd.f32 %v2421, %v2622
      %v2676 = vadd.f32 %v2422, %v2624
      %v2677 = vadd.f32 %v2423, %v2627
      %v2678 = vadd.f32 %v2424, %v2629
      %v2679 = vadd.f32 %v2425, %v2632
      %v2680 = vadd.f32 %v2426, %v2634
      %v2681 = vadd.f32 %v2427, %v2637
      %v2682 = vadd.f32 %v2428, %v2639
      %v2683 = vadd.f32 %v2429, %v2642
      %v2684 = vadd.f32 %v2430, %v2644
      %v2685 = vadd.f32 %v2431, %v2647
      %v2686 = vadd.f32 %v2432, %v2649
      %2687 = vst [vmem:[%s170] sm:$0xff] %v2651
      %2688 = vst [vmem:[%s170 + $0x8] sm:$0xff] %v2652
      %2689 = vst [vmem:[%s170 + $0x10] sm:$0xff] %v2653
      %2690 = vst [vmem:[%s170 + $0x18] sm:$0xff] %v2654
      %2691 = vst [vmem:[%s170 + $0x20] sm:$0xff] %v2655
      %2692 = vst [vmem:[%s170 + $0x28] sm:$0xff] %v2656
      %2693 = vst [vmem:[%s170 + $0x30] sm:$0xff] %v2657
      %2694 = vst [vmem:[%s170 + $0x38] sm:$0xff] %v2658
      %2695 = vst [vmem:[%s170 + $0x40] sm:$0xff] %v2659
      %2696 = vst [vmem:[%s170 + $0x48] sm:$0xff] %v2660
      %2697 = vst [vmem:[%s170 + $0x50] sm:$0xff] %v2661
      %2698 = vst [vmem:[%s170 + $0x58] sm:$0xff] %v2662
      %2699 = vst [vmem:[%s170 + $0x60] sm:$0xff] %v2663
      %2700 = vst [vmem:[%s170 + $0x68] sm:$0xff] %v2664
      %2701 = vst [vmem:[%s170 + $0x70] sm:$0xff] %v2665
      %2702 = vst [vmem:[%s170 + $0x78] sm:$0xff] %v2666
      %2703 = vst [vmem:[%s170 + $0x80] sm:$0xff] %v2667
      %2704 = vst [vmem:[%s170 + $0x88] sm:$0xff] %v2668
      %2705 = vst [vmem:[%s170 + $0x90] sm:$0xff] %v2669
      %2706 = vst [vmem:[%s170 + $0x98] sm:$0xff] %v2670
      %2707 = vst [vmem:[%s170 + $0xa0] sm:$0xff] %v2671
      %2708 = vst [vmem:[%s170 + $0xa8] sm:$0xff] %v2672
      %2709 = vst [vmem:[%s170 + $0xb0] sm:$0xff] %v2673
      %2710 = vst [vmem:[%s170 + $0xb8] sm:$0xff] %v2674
      %2711 = vst [vmem:[%s170 + $0xc0] sm:$0xff] %v2675
      %2712 = vst [vmem:[%s170 + $0xc8] sm:$0xff] %v2676
      %2713 = vst [vmem:[%s170 + $0xd0] sm:$0xff] %v2677
      %2714 = vst [vmem:[%s170 + $0xd8] sm:$0xff] %v2678
      %2715 = vst [vmem:[%s170 + $0xe0] sm:$0xff] %v2679
      %2716 = vst [vmem:[%s170 + $0xe8] sm:$0xff] %v2680
      %2717 = vst [vmem:[%s170 + $0xf0] sm:$0xff] %v2681
      %2718 = vst [vmem:[%s170 + $0xf8] sm:$0xff] %v2682
      %2719 = vst [vmem:[%s170 + $0x100] sm:$0xff] %v2683
      %2720 = vst [vmem:[%s170 + $0x108] sm:$0xff] %v2684
      %2721 = vst [vmem:[%s170 + $0x110] sm:$0xff] %v2685
      %2722 = vst [vmem:[%s170 + $0x118] sm:$0xff] %v2686
      %p2723 = scmp.lt.s32.totalorder %s14, 1
      %s2724 = scalar_select %p2723, %s14, 1
      %s2725 = smul.addr %s2724, 36
      %s2726 = smul.addr %s2725, 8
      %s2727 = scalar_lea.vmem %s3, %s2726
      // Predicated region
      $region33: #{basic_conv_block.3} parent=31 // pred_check
        %p2728 = pneg %p100
      $region34: #{basic_conv_block.3} parent=31 // pred_check_branch
        %2730 = sbr.rel (%p2728) target = $region36
      $region35: #{basic_conv_block.3} parent=31 // pred_region
        _
      $region36: #{basic_conv_block.3} parent=31 // pred_fallthru
        _
    $region32: #{basic_conv_block.3} parent=5 // pred_fallthru
      _
    %p2731 = scmp.le.s32.totalorder 2, %s9
    // Predicated region
    $region37: #{basic_conv_block.3} parent=5 // pred_check
      %p2732 = pneg %p2731
    $region38: #{basic_conv_block.3} parent=5 // pred_check_branch
      %2734 = sbr.rel (%p2732) target = $region40
    $region39: #{basic_conv_block.3} parent=5 // pred_region
      %s2735 = ssub.s32 %s9, 2
      // Predicated region
      $region41: #{basic_conv_block.3} parent=39 // pred_check
        %p2736 = pneg %p106
      $region42: #{basic_conv_block.3} parent=39 // pred_check_branch
        %2738 = sbr.rel (%p2736) target = $region44
      $region43: #{basic_conv_block.3} parent=39 // pred_region
        %p2739 = scmp.lt.s32.totalorder %s15, 1
        %s2740 = scalar_select %p2739, %s15, 1
        %s2741 = smul.addr %s2740, 36
        %s2742 = smul.addr %s2741, 8
        %s2743 = scalar_lea.vmem %s3, %s2742
      $region44: #{basic_conv_block.3} parent=39 // pred_fallthru
        _
    $region40: #{basic_conv_block.3} parent=5 // pred_fallthru
      _
  $region6: #{basic_conv_block.3} parent=0 // loop_footer
    %s13 = sadd.s32 1, %s9
  $region7: #{basic_conv_block.3} parent=0 // loop_footer_branch
    %8 = sbr.rel target = $region3
  $region8: #{basic_conv_block.3} parent=0 // loop_exit
    _

</llo_original>
